<compile_context>
chip_gen: v7x
topology: tpu7x:2x2x1
jax: 0.10.0
libtpu: 0.0.40
codegen_flags: <defaults>
</compile_context>

<pallas_src>
import functools

import jax
import jax.numpy as jnp
from jax.experimental import pallas as pl
from jax.experimental.pallas import tpu as pltpu


def fused_conv_kernel(x_ref, w1_ref, b1_ref, w2_ref, b2_ref, w3_ref, b3_ref, o_ref,
                      p2, p3, *, B, H, W, C1, C2, C3):
    """Fused 3-stage Conv3x3(pad=1)+bias+ReLU+MaxPool2x2 for a block of B images.

    x_ref : (B, H*W, 27)  bf16 stage-1 im2col input (tap-major: (kh*3+kw)*3 + c)
    wN_ref: (9*Cin, Cout) bf16 conv weights, tap-major
    bN_ref: (1, Cout)     f32 bias
    o_ref : (B, H//8, W//8, C3) f32 output
    p2,p3 : (B, h+2, w+2, cin) f32 zero-halo activation scratch for stages 2/3
    """
    H2, W2 = H // 2, W // 2
    H4, W4 = H // 4, W // 4
    H8, W8 = H // 8, W // 8

    def pool2x2(acc, h, w, cout):
        # acc: (B*h*w, cout) f32, rows ordered (b, y, x) -> (B*h/2, w/2, cout)
        r = acc.reshape(B * h // 2, 2, w, cout)
        y = jnp.maximum(r[:, 0], r[:, 1])                       # pool row pairs
        y = y.reshape(B * h // 2, w // 2, 2, cout)
        return jnp.max(y, axis=2)                               # pool col pairs

    def halo_zero(p, h, w, cin):
        # only the 1-pixel border needs zeroing; the interior is overwritten every step.
        p[:, 0:1, :, :] = jnp.zeros((B, 1, w + 2, cin), jnp.float32)
        p[:, h + 1:h + 2, :, :] = jnp.zeros((B, 1, w + 2, cin), jnp.float32)
        p[:, :, 0:1, :] = jnp.zeros((B, h + 2, 1, cin), jnp.float32)
        p[:, :, w + 1:w + 2, :] = jnp.zeros((B, h + 2, 1, cin), jnp.float32)

    def conv_stage(p, w_ref, b_ref, h, w, cin, cout):
        # register-built im2col: concat the 9 shifted taps along lanes, one deep-K MXU matmul.
        taps = [p[:, kh:kh + h, kw:kw + w, :].reshape(B * h * w, cin)
                for kh in range(3) for kw in range(3)]
        im = jnp.concatenate(taps, axis=1).astype(jnp.bfloat16)      # (B*h*w, 9*cin)
        acc = jnp.dot(im, w_ref[...], preferred_element_type=jnp.float32)
        acc = jnp.maximum(acc + b_ref[...], 0.0)
        return pool2x2(acc, h, w, cout)

    # ---- stage 1: cin=3, im2col already done in the wrapper ----
    acc1 = jnp.dot(x_ref[...].reshape(B * H * W, 9 * 3), w1_ref[...],
                   preferred_element_type=jnp.float32)
    acc1 = jnp.maximum(acc1 + b1_ref[...], 0.0)
    y1 = pool2x2(acc1, H, W, C1)                                     # (B*H2, W2, C1)

    # ---- stage 2 ----
    halo_zero(p2, H2, W2, C1)
    p2[:, 1:H2 + 1, 1:W2 + 1, :] = y1.reshape(B, H2, W2, C1)
    y2 = conv_stage(p2, w2_ref, b2_ref, H2, W2, C1, C2)              # (B*H4, W4, C2)

    # ---- stage 3 ----
    halo_zero(p3, H4, W4, C2)
    p3[:, 1:H4 + 1, 1:W4 + 1, :] = y2.reshape(B, H4, W4, C2)
    y3 = conv_stage(p3, w3_ref, b3_ref, H4, W4, C2, C3)              # (B*H8, W8, C3)

    o_ref[...] = y3.reshape(B, H8, W8, C3)                           # lane-dense C3=128 store


def _padded_bytes(shape, dtype):
    """Rough VMEM footprint of one buffer after (sublane, lane) tile padding."""
    s = list(shape)
    itemsize = jnp.dtype(dtype).itemsize
    s[-1] = -(-s[-1] // 128) * 128
    if len(s) >= 2:
        sub = 8 if itemsize >= 4 else 8 * (4 // itemsize)
        s[-2] = -(-s[-2] // sub) * sub
    n = itemsize
    for d in s:
        n *= d
    return n


def convolution1_pallas(x_nhwc, params, block_n=None):
    """x_nhwc: (N, H, W, 3) f32; params: [(w, b)] * 3 with w in HWIO -> (N, H/8, W/8, 128) f32."""
    N, H, W, C0 = x_nhwc.shape
    assert H % 8 == 0 and W % 8 == 0, "three 2x2 max-pools require H, W divisible by 8"
    (w1, b1), (w2, b2), (w3, b3) = params
    C1, C2, C3 = w1.shape[-1], w2.shape[-1], w3.shape[-1]
    Ho, Wo = H // 8, W // 8

    if block_n is None:
        # largest divisor of N up to 8 images per step (raises matmul M, amortizes per-step cost).
        # On v7x (2 TCs) prefer a block_n that leaves grid length >= 2 when N is large.
        block_n = max(d for d in range(1, min(N, 8) + 1) if N % d == 0)
    B = block_n
    assert N % B == 0

    # ---- stage-1 im2col on the XLA side: (N, H*W, 27) bf16, tap-major ((kh*3+kw)*C0 + c) ----
    xp = jnp.pad(x_nhwc, ((0, 0), (1, 1), (1, 1), (0, 0)))
    taps = [xp[:, kh:kh + H, kw:kw + W, :] for kh in range(3) for kw in range(3)]
    x_im = jnp.concatenate(taps, axis=-1).reshape(N, H * W, 9 * C0).astype(jnp.bfloat16)

    def flat_w(w):
        kh, kw, ci, co = w.shape
        return w.reshape(kh * kw * ci, co).astype(jnp.bfloat16)   # tap-major (kh*3+kw)*ci + c

    args = (x_im,
            flat_w(w1), b1.reshape(1, C1).astype(jnp.float32),
            flat_w(w2), b2.reshape(1, C2).astype(jnp.float32),
            flat_w(w3), b3.reshape(1, C3).astype(jnp.float32))

    scratch = [
        pltpu.VMEM((B, H // 2 + 2, W // 2 + 2, C1), jnp.float32),   # p2 halo
        pltpu.VMEM((B, H // 4 + 2, W // 4 + 2, C2), jnp.float32),   # p3 halo
    ]

    # Explicit VMEM budget (double-buffered blocks + scratch), mainly for v7x's 64 MiB VMEM.
    est = (2 * _padded_bytes((B, H * W, 9 * C0), jnp.bfloat16)
           + 2 * _padded_bytes((B, Ho, Wo, C3), jnp.float32)
           + 2 * (_padded_bytes((9 * C0, C1), jnp.bfloat16) + _padded_bytes((1, C1), jnp.float32)
                  + _padded_bytes((9 * C1, C2), jnp.bfloat16) + _padded_bytes((1, C2), jnp.float32)
                  + _padded_bytes((9 * C2, C3), jnp.bfloat16) + _padded_bytes((1, C3), jnp.float32))
           + _padded_bytes((B, H // 2 + 2, W // 2 + 2, C1), jnp.float32)
           + _padded_bytes((B, H // 4 + 2, W // 4 + 2, C2), jnp.float32))
    vmem_limit = min(100 * 1024 * 1024, max(32 * 1024 * 1024, 2 * est))

    kernel = functools.partial(fused_conv_kernel, B=B, H=H, W=W, C1=C1, C2=C2, C3=C3)

    return pl.pallas_call(
        kernel,
        out_shape=jax.ShapeDtypeStruct((N, Ho, Wo, C3), jnp.float32),
        grid_spec=pltpu.PrefetchScalarGridSpec(
            num_scalar_prefetch=0,
            grid=(N // B,),
            in_specs=[
                pl.BlockSpec((B, H * W, 9 * C0), lambda n: (n, 0, 0)),
                # weight/bias blocks are constant across the grid (Pallas won't re-DMA them).
                pl.BlockSpec((9 * C0, C1), lambda n: (0, 0)),
                pl.BlockSpec((1, C1), lambda n: (0, 0)),
                pl.BlockSpec((9 * C1, C2), lambda n: (0, 0)),
                pl.BlockSpec((1, C2), lambda n: (0, 0)),
                pl.BlockSpec((9 * C2, C3), lambda n: (0, 0)),
                pl.BlockSpec((1, C3), lambda n: (0, 0)),
            ],
            out_specs=pl.BlockSpec((B, Ho, Wo, C3), lambda n: (n, 0, 0, 0)),
            scratch_shapes=scratch,
        ),
        compiler_params=pltpu.CompilerParams(
            dimension_semantics=("parallel",),
            vmem_limit_bytes=int(vmem_limit)),
    )(*args)


def init_params(key):
    """Deterministic synthetic weights: 3 conv stages (3->32, 32->64, 64->128), HWIO layout."""
    params = []
    cin = 3
    for i, cout in enumerate((32, 64, 128)):
        kw_, kb_ = jax.random.split(jax.random.fold_in(key, i))
        fan_in = 9 * cin
        w = jax.random.normal(kw_, (3, 3, cin, cout), jnp.float32) * (2.0 / fan_in) ** 0.5
        b = jax.random.normal(kb_, (cout,), jnp.float32) * 0.01
        params.append((w, b))
        cin = cout
    return params


@jax.jit
def convolution1_forward(x_nchw, params):
    # layout: NCHW at the boundary (PyTorch convention), NHWC inside the fused kernel.
    y = jnp.transpose(x_nchw, (0, 2, 3, 1))
    y = convolution1_pallas(y, params)
    return jnp.transpose(y, (0, 3, 1, 2))


def reference_forward(x_nchw, params):
    """Pure-JAX reference (XLA conv + reduce_window) mirroring the PyTorch module.

    Conv operands are rounded through bf16 (exactly as the kernel does for its MXU matmuls)
    so the comparison isolates kernel bugs rather than deliberate bf16 quantization.
    """
    y = x_nchw
    for w, b in params:
        yq = y.astype(jnp.bfloat16).astype(jnp.float32)
        wq = w.astype(jnp.bfloat16).astype(jnp.float32)
        y = jax.lax.conv_general_dilated(
            yq, wq, window_strides=(1, 1), padding=((1, 1), (1, 1)),
            dimension_numbers=("NCHW", "HWIO", "NCHW"),
            precision=jax.lax.Precision.HIGHEST)
        y = jnp.maximum(y + b[None, :, None, None], 0.0)
        y = jax.lax.reduce_window(y, -jnp.inf, jax.lax.max,
                                  (1, 1, 2, 2), (1, 1, 2, 2), "VALID")
    return y


if __name__ == "__main__":
    root = jax.random.PRNGKey(0)
    k_params, k_x = jax.random.split(root)
    params = init_params(k_params)
    x = jax.random.normal(k_x, (2, 3, 16, 16), jnp.float32)   # NCHW

    out = jax.block_until_ready(convolution1_forward(x, params))
    assert out.shape == (2, 128, 2, 2), out.shape

    ref = reference_forward(x, params)
    assert jnp.allclose(out, ref, rtol=1e-2, atol=1e-2), float(jnp.max(jnp.abs(out - ref)))

    print("KERNEL_OK")
</pallas_src>

<mosaic_0001>
module attributes {stable_mosaic.version = 11 : i64} {
  func.func @fused_conv_kernel(%arg0: i32, %arg1: memref<2x256x27xbf16, #tpu.memory_space<vmem>>, %arg2: memref<27x32xbf16, #tpu.memory_space<vmem>>, %arg3: memref<1x32xf32, #tpu.memory_space<vmem>>, %arg4: memref<288x64xbf16, #tpu.memory_space<vmem>>, %arg5: memref<1x64xf32, #tpu.memory_space<vmem>>, %arg6: memref<576x128xbf16, #tpu.memory_space<vmem>>, %arg7: memref<1x128xf32, #tpu.memory_space<vmem>>, %arg8: memref<2x2x2x128xf32, #tpu.memory_space<vmem>>, %arg9: memref<2x10x10x32xf32, #tpu.memory_space<vmem>>, %arg10: memref<2x6x6x64xf32, #tpu.memory_space<vmem>>) attributes {dimension_semantics = [#tpu.dimension_semantics<parallel>], iteration_bounds = array<i64: 1>, scalar_prefetch = 0 : i64, scratch_operands = 2 : i64, tpu.core_type = #tpu.core_type<tc>, window_params = [{transform_indices = @transform_0, window_bounds = array<i64: 2, 256, 27>}, {pipeline_mode = #tpu.pipeline_mode<synchronous>, transform_indices = @transform_1, window_bounds = array<i64: 27, 32>}, {pipeline_mode = #tpu.pipeline_mode<synchronous>, transform_indices = @transform_2, window_bounds = array<i64: 1, 32>}, {pipeline_mode = #tpu.pipeline_mode<synchronous>, transform_indices = @transform_3, window_bounds = array<i64: 288, 64>}, {pipeline_mode = #tpu.pipeline_mode<synchronous>, transform_indices = @transform_4, window_bounds = array<i64: 1, 64>}, {pipeline_mode = #tpu.pipeline_mode<synchronous>, transform_indices = @transform_5, window_bounds = array<i64: 576, 128>}, {pipeline_mode = #tpu.pipeline_mode<synchronous>, transform_indices = @transform_6, window_bounds = array<i64: 1, 128>}, {transform_indices = @transform_7, window_bounds = array<i64: 2, 2, 2, 128>}]} {
    %c0 = arith.constant 0 : index
    %c0_0 = arith.constant 0 : index
    %c0_1 = arith.constant 0 : index
    %0 = vector.load %arg1[%c0, %c0_0, %c0_1] : memref<2x256x27xbf16, #tpu.memory_space<vmem>>, vector<2x256x27xbf16>
    %1 = vector.shape_cast %0 : vector<2x256x27xbf16> to vector<512x27xbf16>
    %c0_2 = arith.constant 0 : index
    %c0_3 = arith.constant 0 : index
    %2 = vector.load %arg2[%c0_2, %c0_3] : memref<27x32xbf16, #tpu.memory_space<vmem>>, vector<27x32xbf16>
    %cst = arith.constant dense<0.000000e+00> : vector<512x32xf32>
    %3 = tpu.matmul %1, %2, %cst {dimension_numbers = #tpu.dot_dimension_numbers<[1], [0], [0], [1], [0, 0, 1, 1], [], []>} : vector<512x27xbf16>, vector<27x32xbf16>, vector<512x32xf32> -> vector<512x32xf32>
    %c0_4 = arith.constant 0 : index
    %c0_5 = arith.constant 0 : index
    %4 = vector.load %arg3[%c0_4, %c0_5] : memref<1x32xf32, #tpu.memory_space<vmem>>, vector<1x32xf32>
    %5 = vector.broadcast %4 : vector<1x32xf32> to vector<512x32xf32>
    %6 = arith.addf %3, %5 : vector<512x32xf32>
    %cst_6 = arith.constant 0.000000e+00 : f32
    %7 = vector.broadcast %cst_6 : f32 to vector<512x32xf32>
    %8 = arith.maximumf %6, %7 : vector<512x32xf32>
    %9 = vector.shape_cast %8 : vector<512x32xf32> to vector<16x2x16x32xf32>
    %10 = vector.extract_strided_slice %9 {offsets = [0, 0, 0, 0], sizes = [16, 1, 16, 32], strides = [1, 1, 1, 1]} : vector<16x2x16x32xf32> to vector<16x1x16x32xf32>
    %11 = vector.shape_cast %10 : vector<16x1x16x32xf32> to vector<16x16x32xf32>
    %12 = vector.extract_strided_slice %9 {offsets = [0, 1, 0, 0], sizes = [16, 1, 16, 32], strides = [1, 1, 1, 1]} : vector<16x2x16x32xf32> to vector<16x1x16x32xf32>
    %13 = vector.shape_cast %12 : vector<16x1x16x32xf32> to vector<16x16x32xf32>
    %14 = arith.maximumf %11, %13 : vector<16x16x32xf32>
    %15 = vector.shape_cast %14 : vector<16x16x32xf32> to vector<16x8x2x32xf32>
    %cst_7 = arith.constant dense<0xFF800000> : vector<16x8x32xf32>
    %16 = vector.multi_reduction <maximumf>, %15, %cst_7 [2] : vector<16x8x2x32xf32> to vector<16x8x32xf32>
    %cst_8 = arith.constant 0.000000e+00 : f32
    %17 = vector.broadcast %cst_8 : f32 to vector<2x1x10x32xf32>
    %c0_9 = arith.constant 0 : index
    %c0_10 = arith.constant 0 : index
    %c0_11 = arith.constant 0 : index
    %c0_12 = arith.constant 0 : index
    %18 = vector.load %arg9[%c0_9, %c0_10, %c0_11, %c0_12] : memref<2x10x10x32xf32, #tpu.memory_space<vmem>>, vector<2x1x10x32xf32>
    tpu.vector_store %arg9[%c0_9, %c0_10, %c0_11, %c0_12], %17 {strides = array<i32>} : memref<2x10x10x32xf32, #tpu.memory_space<vmem>>, vector<2x1x10x32xf32>,
    %cst_13 = arith.constant 0.000000e+00 : f32
    %19 = vector.broadcast %cst_13 : f32 to vector<2x1x10x32xf32>
    %c0_14 = arith.constant 0 : index
    %c9 = arith.constant 9 : index
    %c0_15 = arith.constant 0 : index
    %c0_16 = arith.constant 0 : index
    %20 = vector.load %arg9[%c0_14, %c9, %c0_15, %c0_16] : memref<2x10x10x32xf32, #tpu.memory_space<vmem>>, vector<2x1x10x32xf32>
    tpu.vector_store %arg9[%c0_14, %c9, %c0_15, %c0_16], %19 {strides = array<i32>} : memref<2x10x10x32xf32, #tpu.memory_space<vmem>>, vector<2x1x10x32xf32>,
    %cst_17 = arith.constant 0.000000e+00 : f32
    %21 = vector.broadcast %cst_17 : f32 to vector<2x10x1x32xf32>
    %c0_18 = arith.constant 0 : index
    %c0_19 = arith.constant 0 : index
    %c0_20 = arith.constant 0 : index
    %c0_21 = arith.constant 0 : index
    %22 = vector.load %arg9[%c0_18, %c0_19, %c0_20, %c0_21] : memref<2x10x10x32xf32, #tpu.memory_space<vmem>>, vector<2x10x1x32xf32>
    tpu.vector_store %arg9[%c0_18, %c0_19, %c0_20, %c0_21], %21 {strides = array<i32>} : memref<2x10x10x32xf32, #tpu.memory_space<vmem>>, vector<2x10x1x32xf32>,
    %cst_22 = arith.constant 0.000000e+00 : f32
    %23 = vector.broadcast %cst_22 : f32 to vector<2x10x1x32xf32>
    %c0_23 = arith.constant 0 : index
    %c0_24 = arith.constant 0 : index
    %c9_25 = arith.constant 9 : index
    %c0_26 = arith.constant 0 : index
    %24 = vector.load %arg9[%c0_23, %c0_24, %c9_25, %c0_26] : memref<2x10x10x32xf32, #tpu.memory_space<vmem>>, vector<2x10x1x32xf32>
    tpu.vector_store %arg9[%c0_23, %c0_24, %c9_25, %c0_26], %23 {strides = array<i32>} : memref<2x10x10x32xf32, #tpu.memory_space<vmem>>, vector<2x10x1x32xf32>,
    %25 = vector.shape_cast %16 : vector<16x8x32xf32> to vector<2x8x8x32xf32>
    %c0_27 = arith.constant 0 : index
    %c1 = arith.constant 1 : index
    %c1_28 = arith.constant 1 : index
    %c0_29 = arith.constant 0 : index
    %26 = vector.load %arg9[%c0_27, %c1, %c1_28, %c0_29] : memref<2x10x10x32xf32, #tpu.memory_space<vmem>>, vector<2x8x8x32xf32>
    tpu.vector_store %arg9[%c0_27, %c1, %c1_28, %c0_29], %25 {strides = array<i32>} : memref<2x10x10x32xf32, #tpu.memory_space<vmem>>, vector<2x8x8x32xf32>,
    %c0_30 = arith.constant 0 : index
    %c0_31 = arith.constant 0 : index
    %c0_32 = arith.constant 0 : index
    %c0_33 = arith.constant 0 : index
    %27 = vector.load %arg9[%c0_30, %c0_31, %c0_32, %c0_33] : memref<2x10x10x32xf32, #tpu.memory_space<vmem>>, vector<2x8x8x32xf32>
    %28 = vector.shape_cast %27 : vector<2x8x8x32xf32> to vector<128x32xf32>
    %c0_34 = arith.constant 0 : index
    %c0_35 = arith.constant 0 : index
    %c1_36 = arith.constant 1 : index
    %c0_37 = arith.constant 0 : index
    %29 = vector.load %arg9[%c0_34, %c0_35, %c1_36, %c0_37] : memref<2x10x10x32xf32, #tpu.memory_space<vmem>>, vector<2x8x8x32xf32>
    %30 = vector.shape_cast %29 : vector<2x8x8x32xf32> to vector<128x32xf32>
    %c0_38 = arith.constant 0 : index
    %c0_39 = arith.constant 0 : index
    %c2 = arith.constant 2 : index
    %c0_40 = arith.constant 0 : index
    %31 = vector.load %arg9[%c0_38, %c0_39, %c2, %c0_40] : memref<2x10x10x32xf32, #tpu.memory_space<vmem>>, vector<2x8x8x32xf32>
    %32 = vector.shape_cast %31 : vector<2x8x8x32xf32> to vector<128x32xf32>
    %c0_41 = arith.constant 0 : index
    %c1_42 = arith.constant 1 : index
    %c0_43 = arith.constant 0 : index
    %c0_44 = arith.constant 0 : index
    %33 = vector.load %arg9[%c0_41, %c1_42, %c0_43, %c0_44] : memref<2x10x10x32xf32, #tpu.memory_space<vmem>>, vector<2x8x8x32xf32>
    %34 = vector.shape_cast %33 : vector<2x8x8x32xf32> to vector<128x32xf32>
    %c0_45 = arith.constant 0 : index
    %c1_46 = arith.constant 1 : index
    %c1_47 = arith.constant 1 : index
    %c0_48 = arith.constant 0 : index
    %35 = vector.load %arg9[%c0_45, %c1_46, %c1_47, %c0_48] : memref<2x10x10x32xf32, #tpu.memory_space<vmem>>, vector<2x8x8x32xf32>
    %36 = vector.shape_cast %35 : vector<2x8x8x32xf32> to vector<128x32xf32>
    %c0_49 = arith.constant 0 : index
    %c1_50 = arith.constant 1 : index
    %c2_51 = arith.constant 2 : index
    %c0_52 = arith.constant 0 : index
    %37 = vector.load %arg9[%c0_49, %c1_50, %c2_51, %c0_52] : memref<2x10x10x32xf32, #tpu.memory_space<vmem>>, vector<2x8x8x32xf32>
    %38 = vector.shape_cast %37 : vector<2x8x8x32xf32> to vector<128x32xf32>
    %c0_53 = arith.constant 0 : index
    %c2_54 = arith.constant 2 : index
    %c0_55 = arith.constant 0 : index
    %c0_56 = arith.constant 0 : index
    %39 = vector.load %arg9[%c0_53, %c2_54, %c0_55, %c0_56] : memref<2x10x10x32xf32, #tpu.memory_space<vmem>>, vector<2x8x8x32xf32>
    %40 = vector.shape_cast %39 : vector<2x8x8x32xf32> to vector<128x32xf32>
    %c0_57 = arith.constant 0 : index
    %c2_58 = arith.constant 2 : index
    %c1_59 = arith.constant 1 : index
    %c0_60 = arith.constant 0 : index
    %41 = vector.load %arg9[%c0_57, %c2_58, %c1_59, %c0_60] : memref<2x10x10x32xf32, #tpu.memory_space<vmem>>, vector<2x8x8x32xf32>
    %42 = vector.shape_cast %41 : vector<2x8x8x32xf32> to vector<128x32xf32>
    %c0_61 = arith.constant 0 : index
    %c2_62 = arith.constant 2 : index
    %c2_63 = arith.constant 2 : index
    %c0_64 = arith.constant 0 : index
    %43 = vector.load %arg9[%c0_61, %c2_62, %c2_63, %c0_64] : memref<2x10x10x32xf32, #tpu.memory_space<vmem>>, vector<2x8x8x32xf32>
    %44 = vector.shape_cast %43 : vector<2x8x8x32xf32> to vector<128x32xf32>
    %45 = tpu.concatenate %28, %30, %32, %34, %36, %38, %40, %42, %44 in 1 : vector<128x32xf32>, vector<128x32xf32>, vector<128x32xf32>, vector<128x32xf32>, vector<128x32xf32>, vector<128x32xf32>, vector<128x32xf32>, vector<128x32xf32>, vector<128x32xf32> -> vector<128x288xf32>
    %46 = arith.truncf %45 : vector<128x288xf32> to vector<128x288xbf16>
    %c0_65 = arith.constant 0 : index
    %c0_66 = arith.constant 0 : index
    %47 = vector.load %arg4[%c0_65, %c0_66] : memref<288x64xbf16, #tpu.memory_space<vmem>>, vector<288x64xbf16>
    %cst_67 = arith.constant dense<0.000000e+00> : vector<128x64xf32>
    %48 = tpu.matmul %46, %47, %cst_67 {dimension_numbers = #tpu.dot_dimension_numbers<[1], [0], [0], [1], [0, 0, 1, 1], [], []>} : vector<128x288xbf16>, vector<288x64xbf16>, vector<128x64xf32> -> vector<128x64xf32>
    %c0_68 = arith.constant 0 : index
    %c0_69 = arith.constant 0 : index
    %49 = vector.load %arg5[%c0_68, %c0_69] : memref<1x64xf32, #tpu.memory_space<vmem>>, vector<1x64xf32>
    %50 = vector.broadcast %49 : vector<1x64xf32> to vector<128x64xf32>
    %51 = arith.addf %48, %50 : vector<128x64xf32>
    %cst_70 = arith.constant 0.000000e+00 : f32
    %52 = vector.broadcast %cst_70 : f32 to vector<128x64xf32>
    %53 = arith.maximumf %51, %52 : vector<128x64xf32>
    %54 = vector.shape_cast %53 : vector<128x64xf32> to vector<8x2x8x64xf32>
    %55 = vector.extract_strided_slice %54 {offsets = [0, 0, 0, 0], sizes = [8, 1, 8, 64], strides = [1, 1, 1, 1]} : vector<8x2x8x64xf32> to vector<8x1x8x64xf32>
    %56 = vector.shape_cast %55 : vector<8x1x8x64xf32> to vector<8x8x64xf32>
    %57 = vector.extract_strided_slice %54 {offsets = [0, 1, 0, 0], sizes = [8, 1, 8, 64], strides = [1, 1, 1, 1]} : vector<8x2x8x64xf32> to vector<8x1x8x64xf32>
    %58 = vector.shape_cast %57 : vector<8x1x8x64xf32> to vector<8x8x64xf32>
    %59 = arith.maximumf %56, %58 : vector<8x8x64xf32>
    %60 = vector.shape_cast %59 : vector<8x8x64xf32> to vector<8x4x2x64xf32>
    %cst_71 = arith.constant dense<0xFF800000> : vector<8x4x64xf32>
    %61 = vector.multi_reduction <maximumf>, %60, %cst_71 [2] : vector<8x4x2x64xf32> to vector<8x4x64xf32>
    %cst_72 = arith.constant 0.000000e+00 : f32
    %62 = vector.broadcast %cst_72 : f32 to vector<2x1x6x64xf32>
    %c0_73 = arith.constant 0 : index
    %c0_74 = arith.constant 0 : index
    %c0_75 = arith.constant 0 : index
    %c0_76 = arith.constant 0 : index
    %63 = vector.load %arg10[%c0_73, %c0_74, %c0_75, %c0_76] : memref<2x6x6x64xf32, #tpu.memory_space<vmem>>, vector<2x1x6x64xf32>
    tpu.vector_store %arg10[%c0_73, %c0_74, %c0_75, %c0_76], %62 {strides = array<i32>} : memref<2x6x6x64xf32, #tpu.memory_space<vmem>>, vector<2x1x6x64xf32>,
    %cst_77 = arith.constant 0.000000e+00 : f32
    %64 = vector.broadcast %cst_77 : f32 to vector<2x1x6x64xf32>
    %c0_78 = arith.constant 0 : index
    %c5 = arith.constant 5 : index
    %c0_79 = arith.constant 0 : index
    %c0_80 = arith.constant 0 : index
    %65 = vector.load %arg10[%c0_78, %c5, %c0_79, %c0_80] : memref<2x6x6x64xf32, #tpu.memory_space<vmem>>, vector<2x1x6x64xf32>
    tpu.vector_store %arg10[%c0_78, %c5, %c0_79, %c0_80], %64 {strides = array<i32>} : memref<2x6x6x64xf32, #tpu.memory_space<vmem>>, vector<2x1x6x64xf32>,
    %cst_81 = arith.constant 0.000000e+00 : f32
    %66 = vector.broadcast %cst_81 : f32 to vector<2x6x1x64xf32>
    %c0_82 = arith.constant 0 : index
    %c0_83 = arith.constant 0 : index
    %c0_84 = arith.constant 0 : index
    %c0_85 = arith.constant 0 : index
    %67 = vector.load %arg10[%c0_82, %c0_83, %c0_84, %c0_85] : memref<2x6x6x64xf32, #tpu.memory_space<vmem>>, vector<2x6x1x64xf32>
    tpu.vector_store %arg10[%c0_82, %c0_83, %c0_84, %c0_85], %66 {strides = array<i32>} : memref<2x6x6x64xf32, #tpu.memory_space<vmem>>, vector<2x6x1x64xf32>,
    %cst_86 = arith.constant 0.000000e+00 : f32
    %68 = vector.broadcast %cst_86 : f32 to vector<2x6x1x64xf32>
    %c0_87 = arith.constant 0 : index
    %c0_88 = arith.constant 0 : index
    %c5_89 = arith.constant 5 : index
    %c0_90 = arith.constant 0 : index
    %69 = vector.load %arg10[%c0_87, %c0_88, %c5_89, %c0_90] : memref<2x6x6x64xf32, #tpu.memory_space<vmem>>, vector<2x6x1x64xf32>
    tpu.vector_store %arg10[%c0_87, %c0_88, %c5_89, %c0_90], %68 {strides = array<i32>} : memref<2x6x6x64xf32, #tpu.memory_space<vmem>>, vector<2x6x1x64xf32>,
    %70 = vector.shape_cast %61 : vector<8x4x64xf32> to vector<2x4x4x64xf32>
    %c0_91 = arith.constant 0 : index
    %c1_92 = arith.constant 1 : index
    %c1_93 = arith.constant 1 : index
    %c0_94 = arith.constant 0 : index
    %71 = vector.load %arg10[%c0_91, %c1_92, %c1_93, %c0_94] : memref<2x6x6x64xf32, #tpu.memory_space<vmem>>, vector<2x4x4x64xf32>
    tpu.vector_store %arg10[%c0_91, %c1_92, %c1_93, %c0_94], %70 {strides = array<i32>} : memref<2x6x6x64xf32, #tpu.memory_space<vmem>>, vector<2x4x4x64xf32>,
    %c0_95 = arith.constant 0 : index
    %c0_96 = arith.constant 0 : index
    %c0_97 = arith.constant 0 : index
    %c0_98 = arith.constant 0 : index
    %72 = vector.load %arg10[%c0_95, %c0_96, %c0_97, %c0_98] : memref<2x6x6x64xf32, #tpu.memory_space<vmem>>, vector<2x4x4x64xf32>
    %73 = vector.shape_cast %72 : vector<2x4x4x64xf32> to vector<32x64xf32>
    %c0_99 = arith.constant 0 : index
    %c0_100 = arith.constant 0 : index
    %c1_101 = arith.constant 1 : index
    %c0_102 = arith.constant 0 : index
    %74 = vector.load %arg10[%c0_99, %c0_100, %c1_101, %c0_102] : memref<2x6x6x64xf32, #tpu.memory_space<vmem>>, vector<2x4x4x64xf32>
    %75 = vector.shape_cast %74 : vector<2x4x4x64xf32> to vector<32x64xf32>
    %c0_103 = arith.constant 0 : index
    %c0_104 = arith.constant 0 : index
    %c2_105 = arith.constant 2 : index
    %c0_106 = arith.constant 0 : index
    %76 = vector.load %arg10[%c0_103, %c0_104, %c2_105, %c0_106] : memref<2x6x6x64xf32, #tpu.memory_space<vmem>>, vector<2x4x4x64xf32>
    %77 = vector.shape_cast %76 : vector<2x4x4x64xf32> to vector<32x64xf32>
    %c0_107 = arith.constant 0 : index
    %c1_108 = arith.constant 1 : index
    %c0_109 = arith.constant 0 : index
    %c0_110 = arith.constant 0 : index
    %78 = vector.load %arg10[%c0_107, %c1_108, %c0_109, %c0_110] : memref<2x6x6x64xf32, #tpu.memory_space<vmem>>, vector<2x4x4x64xf32>
    %79 = vector.shape_cast %78 : vector<2x4x4x64xf32> to vector<32x64xf32>
    %c0_111 = arith.constant 0 : index
    %c1_112 = arith.constant 1 : index
    %c1_113 = arith.constant 1 : index
    %c0_114 = arith.constant 0 : index
    %80 = vector.load %arg10[%c0_111, %c1_112, %c1_113, %c0_114] : memref<2x6x6x64xf32, #tpu.memory_space<vmem>>, vector<2x4x4x64xf32>
    %81 = vector.shape_cast %80 : vector<2x4x4x64xf32> to vector<32x64xf32>
    %c0_115 = arith.constant 0 : index
    %c1_116 = arith.constant 1 : index
    %c2_117 = arith.constant 2 : index
    %c0_118 = arith.constant 0 : index
    %82 = vector.load %arg10[%c0_115, %c1_116, %c2_117, %c0_118] : memref<2x6x6x64xf32, #tpu.memory_space<vmem>>, vector<2x4x4x64xf32>
    %83 = vector.shape_cast %82 : vector<2x4x4x64xf32> to vector<32x64xf32>
    %c0_119 = arith.constant 0 : index
    %c2_120 = arith.constant 2 : index
    %c0_121 = arith.constant 0 : index
    %c0_122 = arith.constant 0 : index
    %84 = vector.load %arg10[%c0_119, %c2_120, %c0_121, %c0_122] : memref<2x6x6x64xf32, #tpu.memory_space<vmem>>, vector<2x4x4x64xf32>
    %85 = vector.shape_cast %84 : vector<2x4x4x64xf32> to vector<32x64xf32>
    %c0_123 = arith.constant 0 : index
    %c2_124 = arith.constant 2 : index
    %c1_125 = arith.constant 1 : index
    %c0_126 = arith.constant 0 : index
    %86 = vector.load %arg10[%c0_123, %c2_124, %c1_125, %c0_126] : memref<2x6x6x64xf32, #tpu.memory_space<vmem>>, vector<2x4x4x64xf32>
    %87 = vector.shape_cast %86 : vector<2x4x4x64xf32> to vector<32x64xf32>
    %c0_127 = arith.constant 0 : index
    %c2_128 = arith.constant 2 : index
    %c2_129 = arith.constant 2 : index
    %c0_130 = arith.constant 0 : index
    %88 = vector.load %arg10[%c0_127, %c2_128, %c2_129, %c0_130] : memref<2x6x6x64xf32, #tpu.memory_space<vmem>>, vector<2x4x4x64xf32>
    %89 = vector.shape_cast %88 : vector<2x4x4x64xf32> to vector<32x64xf32>
    %90 = tpu.concatenate %73, %75, %77, %79, %81, %83, %85, %87, %89 in 1 : vector<32x64xf32>, vector<32x64xf32>, vector<32x64xf32>, vector<32x64xf32>, vector<32x64xf32>, vector<32x64xf32>, vector<32x64xf32>, vector<32x64xf32>, vector<32x64xf32> -> vector<32x576xf32>
    %91 = arith.truncf %90 : vector<32x576xf32> to vector<32x576xbf16>
    %c0_131 = arith.constant 0 : index
    %c0_132 = arith.constant 0 : index
    %92 = vector.load %arg6[%c0_131, %c0_132] : memref<576x128xbf16, #tpu.memory_space<vmem>>, vector<576x128xbf16>
    %cst_133 = arith.constant dense<0.000000e+00> : vector<32x128xf32>
    %93 = tpu.matmul %91, %92, %cst_133 {dimension_numbers = #tpu.dot_dimension_numbers<[1], [0], [0], [1], [0, 0, 1, 1], [], []>} : vector<32x576xbf16>, vector<576x128xbf16>, vector<32x128xf32> -> vector<32x128xf32>
    %c0_134 = arith.constant 0 : index
    %c0_135 = arith.constant 0 : index
    %94 = vector.load %arg7[%c0_134, %c0_135] : memref<1x128xf32, #tpu.memory_space<vmem>>, vector<1x128xf32>
    %95 = vector.broadcast %94 : vector<1x128xf32> to vector<32x128xf32>
    %96 = arith.addf %93, %95 : vector<32x128xf32>
    %cst_136 = arith.constant 0.000000e+00 : f32
    %97 = vector.broadcast %cst_136 : f32 to vector<32x128xf32>
    %98 = arith.maximumf %96, %97 : vector<32x128xf32>
    %99 = vector.shape_cast %98 : vector<32x128xf32> to vector<4x2x4x128xf32>
    %100 = vector.extract_strided_slice %99 {offsets = [0, 0, 0, 0], sizes = [4, 1, 4, 128], strides = [1, 1, 1, 1]} : vector<4x2x4x128xf32> to vector<4x1x4x128xf32>
    %101 = vector.shape_cast %100 : vector<4x1x4x128xf32> to vector<4x4x128xf32>
    %102 = vector.extract_strided_slice %99 {offsets = [0, 1, 0, 0], sizes = [4, 1, 4, 128], strides = [1, 1, 1, 1]} : vector<4x2x4x128xf32> to vector<4x1x4x128xf32>
    %103 = vector.shape_cast %102 : vector<4x1x4x128xf32> to vector<4x4x128xf32>
    %104 = arith.maximumf %101, %103 : vector<4x4x128xf32>
    %105 = vector.shape_cast %104 : vector<4x4x128xf32> to vector<4x2x2x128xf32>
    %cst_137 = arith.constant dense<0xFF800000> : vector<4x2x128xf32>
    %106 = vector.multi_reduction <maximumf>, %105, %cst_137 [2] : vector<4x2x2x128xf32> to vector<4x2x128xf32>
    %107 = vector.shape_cast %106 : vector<4x2x128xf32> to vector<2x2x2x128xf32>
    %c0_138 = arith.constant 0 : index
    %c0_139 = arith.constant 0 : index
    %c0_140 = arith.constant 0 : index
    %c0_141 = arith.constant 0 : index
    %108 = vector.load %arg8[%c0_138, %c0_139, %c0_140, %c0_141] : memref<2x2x2x128xf32, #tpu.memory_space<vmem>>, vector<2x2x2x128xf32>
    tpu.vector_store %arg8[%c0_138, %c0_139, %c0_140, %c0_141], %107 {strides = array<i32>} : memref<2x2x2x128xf32, #tpu.memory_space<vmem>>, vector<2x2x2x128xf32>,
    return
  }
  func.func @transform_0(%arg0: i32) -> (i32, i32, i32) {
    %c0_i32 = arith.constant 0 : i32
    %c0_i32_0 = arith.constant 0 : i32
    %c0_i32_1 = arith.constant 0 : i32
    return %arg0, %c0_i32, %c0_i32_0 : i32, i32, i32
  }
  func.func @transform_1(%arg0: i32) -> (i32, i32) {
    %c0_i32 = arith.constant 0 : i32
    %c0_i32_0 = arith.constant 0 : i32
    %c0_i32_1 = arith.constant 0 : i32
    return %c0_i32, %c0_i32_0 : i32, i32
  }
  func.func @transform_2(%arg0: i32) -> (i32, i32) {
    %c0_i32 = arith.constant 0 : i32
    %c0_i32_0 = arith.constant 0 : i32
    %c0_i32_1 = arith.constant 0 : i32
    return %c0_i32, %c0_i32_0 : i32, i32
  }
  func.func @transform_3(%arg0: i32) -> (i32, i32) {
    %c0_i32 = arith.constant 0 : i32
    %c0_i32_0 = arith.constant 0 : i32
    %c0_i32_1 = arith.constant 0 : i32
    return %c0_i32, %c0_i32_0 : i32, i32
  }
  func.func @transform_4(%arg0: i32) -> (i32, i32) {
    %c0_i32 = arith.constant 0 : i32
    %c0_i32_0 = arith.constant 0 : i32
    %c0_i32_1 = arith.constant 0 : i32
    return %c0_i32, %c0_i32_0 : i32, i32
  }
  func.func @transform_5(%arg0: i32) -> (i32, i32) {
    %c0_i32 = arith.constant 0 : i32
    %c0_i32_0 = arith.constant 0 : i32
    %c0_i32_1 = arith.constant 0 : i32
    return %c0_i32, %c0_i32_0 : i32, i32
  }
  func.func @transform_6(%arg0: i32) -> (i32, i32) {
    %c0_i32 = arith.constant 0 : i32
    %c0_i32_0 = arith.constant 0 : i32
    %c0_i32_1 = arith.constant 0 : i32
    return %c0_i32, %c0_i32_0 : i32, i32
  }
  func.func @transform_7(%arg0: i32) -> (i32, i32, i32, i32) {
    %c0_i32 = arith.constant 0 : i32
    %c0_i32_0 = arith.constant 0 : i32
    %c0_i32_1 = arith.constant 0 : i32
    %c0_i32_2 = arith.constant 0 : i32
    return %arg0, %c0_i32, %c0_i32_0, %c0_i32_1 : i32, i32, i32, i32
  }
}

</mosaic_0001>

<llo_original>
// kernel: convolution1_forward.1
$region0: #{convolution1_forward.1}
  #allocation0 [shape = 'u32[]', space=smem, size = 0x4, offset = 0x4, fixed_abs, tag = 'smem constant byte address 0x4 - core index']
  #allocation1 [shape = 'u32[144,128]{1,0:T(1,128)}', space=vmem, size = 0x12000, scoped, tag = 'internal scratch']
  #allocation2 [shape = 'f32[2,10,10,32]{3,2,1,0:T(8,128)}', space=vmem, size = 0x28000, scoped, tag = 'scratch operand']
  #allocation3 [shape = 'f32[2,6,6,64]{3,2,1,0:T(8,128)}', space=vmem, size = 0xc000, scoped, tag = 'scratch operand']
  %s0 = inlined_call_operand.vmem [shape: bf16[2,256,27], index: 0, kind: input, shape index: {}]
  %s1 = inlined_call_operand.vmem [shape: bf16[27,32], index: 1, kind: input, shape index: {}]
  %s2 = inlined_call_operand.vmem [shape: f32[1,32], index: 2, kind: input, shape index: {}]
  %s3 = inlined_call_operand.vmem [shape: bf16[288,64], index: 3, kind: input, shape index: {}]
  %s4 = inlined_call_operand.vmem [shape: f32[1,64], index: 4, kind: input, shape index: {}]
  %s5 = inlined_call_operand.vmem [shape: bf16[576,128], index: 5, kind: input, shape index: {}]
  %s6 = inlined_call_operand.vmem [shape: f32[1,128], index: 6, kind: input, shape index: {}]
  %s7 = inlined_call_operand.hbm [shape: f32[2,2,2,128], index: 7, kind: output, shape index: {}]
  %s8 = sld [smem:[#allocation0]]
  $region38: #{convolution1_forward.1} parent=0
    _
  %s10 = ssub.s32 1, %s8
  %s11 = scalar_select 0, %s10, %s8
  $region1: #{convolution1_forward.1} parent=0
    #allocation4 [shape = 'u8[4096]{0}', space=vmem, size = 0x1000, scoped, tag = 'output window, operand 0, single buffered']
    #allocation5 [shape = 's32[1]{0}', space=sflag, size = 0x4, scoped, tag = 'scoped memory for convolution1_forward.1']
    %12 = vsyncpa [#allocation5], 0
    // Predicated region
    $region2: #{convolution1_forward.1} parent=1 // pred_check
      _
    $region3: #{convolution1_forward.1} parent=1 // pred_check_branch
      %14 = sbr.rel (0) target = $region5
    $region4: #{convolution1_forward.1} parent=1 // pred_region
      _
    $region5: #{convolution1_forward.1} parent=1 // pred_fallthru
      _
    // Predicated region
    $region6: #{convolution1_forward.1} parent=1 // pred_check
      _
    $region7: #{convolution1_forward.1} parent=1 // pred_check_branch
      %16 = sbr.rel (0) target = $region9
    $region8: #{convolution1_forward.1} parent=1 // pred_region
      _
    $region9: #{convolution1_forward.1} parent=1 // pred_fallthru
      _
    // Predicated region
    $region10: #{convolution1_forward.1} parent=1 // pred_check
      _
    $region11: #{convolution1_forward.1} parent=1 // pred_check_branch
      %18 = sbr.rel (0) target = $region13
    $region12: #{convolution1_forward.1} parent=1 // pred_region
      _
    $region13: #{convolution1_forward.1} parent=1 // pred_fallthru
      _
    // Predicated region
    $region14: #{convolution1_forward.1} parent=1 // pred_check
      _
    $region15: #{convolution1_forward.1} parent=1 // pred_check_branch
      %20 = sbr.rel (0) target = $region17
    $region16: #{convolution1_forward.1} parent=1 // pred_region
      _
    $region17: #{convolution1_forward.1} parent=1 // pred_fallthru
      _
    // Predicated region
    $region18: #{convolution1_forward.1} parent=1 // pred_check
      _
    $region19: #{convolution1_forward.1} parent=1 // pred_check_branch
      %22 = sbr.rel (0) target = $region21
    $region20: #{convolution1_forward.1} parent=1 // pred_region
      _
    $region21: #{convolution1_forward.1} parent=1 // pred_fallthru
      _
    // Predicated region
    $region22: #{convolution1_forward.1} parent=1 // pred_check
      _
    $region23: #{convolution1_forward.1} parent=1 // pred_check_branch
      %24 = sbr.rel (0) target = $region25
    $region24: #{convolution1_forward.1} parent=1 // pred_region
      _
    $region25: #{convolution1_forward.1} parent=1 // pred_fallthru
      _
    // Predicated region
    $region26: #{convolution1_forward.1} parent=1 // pred_check
      _
    $region27: #{convolution1_forward.1} parent=1 // pred_check_branch
      %26 = sbr.rel (0) target = $region29
    $region28: #{convolution1_forward.1} parent=1 // pred_region
      _
    $region29: #{convolution1_forward.1} parent=1 // pred_fallthru
      _
    %v28 = vld [vmem:[%s0] sm:$0xf]
    %v29 = vld [vmem:[%s0 + $0x4] sm:$0xf]
    %v30 = vld [vmem:[%s0 + $0x8] sm:$0xf]
    %v31 = vld [vmem:[%s0 + $0xc] sm:$0xf]
    %v32 = vld [vmem:[%s0 + $0x10] sm:$0xf]
    %v33 = vld [vmem:[%s0 + $0x14] sm:$0xf]
    %v34 = vld [vmem:[%s0 + $0x18] sm:$0xf]
    %v35 = vld [vmem:[%s0 + $0x1c] sm:$0xf]
    %v36 = vld [vmem:[%s0 + $0x20] sm:$0xf]
    %v37 = vld [vmem:[%s0 + $0x24] sm:$0xf]
    %v38 = vld [vmem:[%s0 + $0x28] sm:$0xf]
    %v39 = vld [vmem:[%s0 + $0x2c] sm:$0xf]
    %v40 = vld [vmem:[%s0 + $0x30] sm:$0xf]
    %v41 = vld [vmem:[%s0 + $0x34] sm:$0xf]
    %v42 = vld [vmem:[%s0 + $0x38] sm:$0xf]
    %v43 = vld [vmem:[%s0 + $0x3c] sm:$0xf]
    %v44 = vld [vmem:[%s0 + $0x40] sm:$0xf]
    %v45 = vld [vmem:[%s0 + $0x44] sm:$0xf]
    %v46 = vld [vmem:[%s0 + $0x48] sm:$0xf]
    %v47 = vld [vmem:[%s0 + $0x4c] sm:$0xf]
    %v48 = vld [vmem:[%s0 + $0x50] sm:$0xf]
    %v49 = vld [vmem:[%s0 + $0x54] sm:$0xf]
    %v50 = vld [vmem:[%s0 + $0x58] sm:$0xf]
    %v51 = vld [vmem:[%s0 + $0x5c] sm:$0xf]
    %v52 = vld [vmem:[%s0 + $0x60] sm:$0xf]
    %v53 = vld [vmem:[%s0 + $0x64] sm:$0xf]
    %v54 = vld [vmem:[%s0 + $0x68] sm:$0xf]
    %v55 = vld [vmem:[%s0 + $0x6c] sm:$0xf]
    %v56 = vld [vmem:[%s0 + $0x70] sm:$0xf]
    %v57 = vld [vmem:[%s0 + $0x74] sm:$0xf]
    %v58 = vld [vmem:[%s0 + $0x78] sm:$0xf]
    %v59 = vld [vmem:[%s0 + $0x7c] sm:$0xf]
    %v60 = vld [vmem:[%s0 + $0x80] sm:$0xf]
    %v61 = vld [vmem:[%s0 + $0x84] sm:$0xf]
    %v62 = vld [vmem:[%s0 + $0x88] sm:$0xf]
    %v63 = vld [vmem:[%s0 + $0x8c] sm:$0xf]
    %v64 = vld [vmem:[%s0 + $0x90] sm:$0xf]
    %v65 = vld [vmem:[%s0 + $0x94] sm:$0xf]
    %v66 = vld [vmem:[%s0 + $0x98] sm:$0xf]
    %v67 = vld [vmem:[%s0 + $0x9c] sm:$0xf]
    %v68 = vld [vmem:[%s0 + $0xa0] sm:$0xf]
    %v69 = vld [vmem:[%s0 + $0xa4] sm:$0xf]
    %v70 = vld [vmem:[%s0 + $0xa8] sm:$0xf]
    %v71 = vld [vmem:[%s0 + $0xac] sm:$0xf]
    %v72 = vld [vmem:[%s0 + $0xb0] sm:$0xf]
    %v73 = vld [vmem:[%s0 + $0xb4] sm:$0xf]
    %v74 = vld [vmem:[%s0 + $0xb8] sm:$0xf]
    %v75 = vld [vmem:[%s0 + $0xbc] sm:$0xf]
    %v76 = vld [vmem:[%s0 + $0xc0] sm:$0xf]
    %v77 = vld [vmem:[%s0 + $0xc4] sm:$0xf]
    %v78 = vld [vmem:[%s0 + $0xc8] sm:$0xf]
    %v79 = vld [vmem:[%s0 + $0xcc] sm:$0xf]
    %v80 = vld [vmem:[%s0 + $0xd0] sm:$0xf]
    %v81 = vld [vmem:[%s0 + $0xd4] sm:$0xf]
    %v82 = vld [vmem:[%s0 + $0xd8] sm:$0xf]
    %v83 = vld [vmem:[%s0 + $0xdc] sm:$0xf]
    %v84 = vld [vmem:[%s0 + $0xe0] sm:$0xf]
    %v85 = vld [vmem:[%s0 + $0xe4] sm:$0xf]
    %v86 = vld [vmem:[%s0 + $0xe8] sm:$0xf]
    %v87 = vld [vmem:[%s0 + $0xec] sm:$0xf]
    %v88 = vld [vmem:[%s0 + $0xf0] sm:$0xf]
    %v89 = vld [vmem:[%s0 + $0xf4] sm:$0xf]
    %v90 = vld [vmem:[%s0 + $0xf8] sm:$0xf]
    %v91 = vld [vmem:[%s0 + $0xfc] sm:$0xf]
    %v92 = vld [vmem:[%s1] sm:$0xf]
    %v93 = vld [vmem:[%s1 + $0x4] sm:$0xf]
    %v94 = vld [vmem:[%s1 + $0x8] sm:$0xf]
    %v95 = vld [vmem:[%s1 + $0xc] sm:$0x3]
    %v96 = vld [vmem:[%s2] sm:$0x1]
    %v98 = vlaneseq
    %v99 = vshrl.u32 %v98, 7
    %v100 = vsub.s32 0, %v99
    %v101 = vrot.slane %v96, %v100
    %v167 = vunpack.c.l.b16 %v28
    %v168 = vunpack.c.l.b16 %v29
    %v169 = vunpack.c.l.b16 %v30
    %v170 = vunpack.c.l.b16 %v31
    %v171 = vunpack.c.l.b16 %v32
    %v172 = vunpack.c.l.b16 %v33
    %v173 = vunpack.c.l.b16 %v34
    %v174 = vunpack.c.l.b16 %v35
    %v175 = vunpack.c.l.b16 %v36
    %v176 = vunpack.c.l.b16 %v37
    %v177 = vunpack.c.l.b16 %v38
    %v178 = vunpack.c.l.b16 %v39
    %v179 = vunpack.c.l.b16 %v40
    %v180 = vunpack.c.l.b16 %v41
    %v181 = vunpack.c.l.b16 %v42
    %v182 = vunpack.c.l.b16 %v43
    %v183 = vunpack.c.l.b16 %v44
    %v184 = vunpack.c.l.b16 %v45
    %v185 = vunpack.c.l.b16 %v46
    %v186 = vunpack.c.l.b16 %v47
    %v187 = vunpack.c.l.b16 %v48
    %v188 = vunpack.c.l.b16 %v49
    %v189 = vunpack.c.l.b16 %v50
    %v190 = vunpack.c.l.b16 %v51
    %v191 = vunpack.c.l.b16 %v52
    %v192 = vunpack.c.l.b16 %v53
    %v193 = vunpack.c.l.b16 %v54
    %v194 = vunpack.c.l.b16 %v55
    %v195 = vunpack.c.l.b16 %v56
    %v196 = vunpack.c.l.b16 %v57
    %v197 = vunpack.c.l.b16 %v58
    %v198 = vunpack.c.l.b16 %v59
    %v199 = vunpack.c.l.b16 %v60
    %v200 = vunpack.c.l.b16 %v61
    %v201 = vunpack.c.l.b16 %v62
    %v202 = vunpack.c.l.b16 %v63
    %v203 = vunpack.c.l.b16 %v64
    %v204 = vunpack.c.l.b16 %v65
    %v205 = vunpack.c.l.b16 %v66
    %v206 = vunpack.c.l.b16 %v67
    %v207 = vunpack.c.l.b16 %v68
    %v208 = vunpack.c.l.b16 %v69
    %v209 = vunpack.c.l.b16 %v70
    %v210 = vunpack.c.l.b16 %v71
    %v211 = vunpack.c.l.b16 %v72
    %v212 = vunpack.c.l.b16 %v73
    %v213 = vunpack.c.l.b16 %v74
    %v214 = vunpack.c.l.b16 %v75
    %v215 = vunpack.c.l.b16 %v76
    %v216 = vunpack.c.l.b16 %v77
    %v217 = vunpack.c.l.b16 %v78
    %v218 = vunpack.c.l.b16 %v79
    %v219 = vunpack.c.l.b16 %v80
    %v220 = vunpack.c.l.b16 %v81
    %v221 = vunpack.c.l.b16 %v82
    %v222 = vunpack.c.l.b16 %v83
    %v223 = vunpack.c.l.b16 %v84
    %v224 = vunpack.c.l.b16 %v85
    %v225 = vunpack.c.l.b16 %v86
    %v226 = vunpack.c.l.b16 %v87
    %v227 = vunpack.c.l.b16 %v88
    %v228 = vunpack.c.l.b16 %v89
    %v229 = vunpack.c.l.b16 %v90
    %v230 = vunpack.c.l.b16 %v91
    %v231 = vpack.c.b16 %v168, %v167
    %v232 = vpack.c.b16 %v170, %v169
    %v233 = vpack.c.b16 %v172, %v171
    %v234 = vpack.c.b16 %v174, %v173
    %v235 = vpack.c.b16 %v176, %v175
    %v236 = vpack.c.b16 %v178, %v177
    %v237 = vpack.c.b16 %v180, %v179
    %v238 = vpack.c.b16 %v182, %v181
    %v239 = vpack.c.b16 %v184, %v183
    %v240 = vpack.c.b16 %v186, %v185
    %v241 = vpack.c.b16 %v188, %v187
    %v242 = vpack.c.b16 %v190, %v189
    %v243 = vpack.c.b16 %v192, %v191
    %v244 = vpack.c.b16 %v194, %v193
    %v245 = vpack.c.b16 %v196, %v195
    %v246 = vpack.c.b16 %v198, %v197
    %v247 = vpack.c.b16 %v200, %v199
    %v248 = vpack.c.b16 %v202, %v201
    %v249 = vpack.c.b16 %v204, %v203
    %v250 = vpack.c.b16 %v206, %v205
    %v251 = vpack.c.b16 %v208, %v207
    %v252 = vpack.c.b16 %v210, %v209
    %v253 = vpack.c.b16 %v212, %v211
    %v254 = vpack.c.b16 %v214, %v213
    %v255 = vpack.c.b16 %v216, %v215
    %v256 = vpack.c.b16 %v218, %v217
    %v257 = vpack.c.b16 %v220, %v219
    %v258 = vpack.c.b16 %v222, %v221
    %v259 = vpack.c.b16 %v224, %v223
    %v260 = vpack.c.b16 %v226, %v225
    %v261 = vpack.c.b16 %v228, %v227
    %v262 = vpack.c.b16 %v230, %v229
    %v267 = vunpack.c.l.b16 %v92
    %v268 = vunpack.c.l.b16 %v93
    %v269 = vunpack.c.l.b16 %v94
    %v270 = vunpack.c.l.b16 %v95
    %v271 = vpack.c.b16 %v268, %v267
    %v272 = vpack.c.b16 %v270, %v269
    %vm274 = vcmask 220160
    %v276 = vsel %vm274, %v231, 0
    %v279 = vsel %vm274, %v232, 0
    %v282 = vsel %vm274, %v233, 0
    %v285 = vsel %vm274, %v234, 0
    %v288 = vsel %vm274, %v235, 0
    %v291 = vsel %vm274, %v236, 0
    %v294 = vsel %vm274, %v237, 0
    %v297 = vsel %vm274, %v238, 0
    %v300 = vsel %vm274, %v239, 0
    %v303 = vsel %vm274, %v240, 0
    %v306 = vsel %vm274, %v241, 0
    %v309 = vsel %vm274, %v242, 0
    %v312 = vsel %vm274, %v243, 0
    %v315 = vsel %vm274, %v244, 0
    %v318 = vsel %vm274, %v245, 0
    %v321 = vsel %vm274, %v246, 0
    %v324 = vsel %vm274, %v247, 0
    %v327 = vsel %vm274, %v248, 0
    %v330 = vsel %vm274, %v249, 0
    %v333 = vsel %vm274, %v250, 0
    %v336 = vsel %vm274, %v251, 0
    %v339 = vsel %vm274, %v252, 0
    %v342 = vsel %vm274, %v253, 0
    %v345 = vsel %vm274, %v254, 0
    %v348 = vsel %vm274, %v255, 0
    %v351 = vsel %vm274, %v256, 0
    %v354 = vsel %vm274, %v257, 0
    %v357 = vsel %vm274, %v258, 0
    %v360 = vsel %vm274, %v259, 0
    %v363 = vsel %vm274, %v260, 0
    %v366 = vsel %vm274, %v261, 0
    %v369 = vsel %vm274, %v262, 0
    %vm371 = vcmask 1044480
    %vm372 = vcmask 1045504
    %v373 = vsel %vm371, 4294967295, 65535
    %v374 = vsel %vm372, %v373, 0
    %v376 = vand.u32 %v272, %v374
    %378 = vmatprep.subr.bf16.mxu0 0
    %379 = vmatpush1.bf16.msra.mxu0 %v271
    %380 = vmatprep.subr.bf16.mxu0 0
    %381 = vmatpush1.bf16.msra.mxu0 %v376
    %382 = vmatprep.subr.bf16.mxu0 0
    %383 = vmatpush1.bf16.msra.mxu0 0
    %384 = vmatprep.subr.bf16.mxu0 0
    %385 = vmatpush1.bf16.msra.mxu0 0
    %386 = vmatprep.subr.bf16.mxu0 0
    %387 = vmatpush1.bf16.msra.mxu0 0
    %388 = vmatprep.subr.bf16.mxu0 0
    %389 = vmatpush1.bf16.msra.mxu0 0
    %390 = vmatprep.subr.bf16.mxu0 0
    %391 = vmatpush1.bf16.msra.mxu0 0
    %392 = vmatprep.subr.bf16.mxu0 0
    %393 = vmatpush1.bf16.msra.mxu0 0
    %394 = vmatprep.subr.bf16.mxu0 0
    %395 = vmatpush1.bf16.msra.mxu0 0
    %396 = vmatprep.subr.bf16.mxu0 0
    %397 = vmatpush1.bf16.msra.mxu0 0
    %398 = vmatprep.subr.bf16.mxu0 0
    %399 = vmatpush1.bf16.msra.mxu0 0
    %400 = vmatprep.subr.bf16.mxu0 0
    %401 = vmatpush1.bf16.msra.mxu0 0
    %402 = vmatprep.subr.bf16.mxu0 0
    %403 = vmatpush1.bf16.msra.mxu0 0
    %404 = vmatprep.subr.bf16.mxu0 0
    %405 = vmatpush1.bf16.msra.mxu0 0
    %406 = vmatprep.subr.bf16.mxu0 0
    %407 = vmatpush1.bf16.msra.mxu0 0
    %408 = vmatprep.subr.bf16.mxu0 0
    %409 = vmatpush1.bf16.msra.mxu0 0
    %410 = vmatprep.mubr.bf16.mxu0 0
    %411 = vmatmul.mubr.bf16.gmra.mrb[0].mxu0 %v276
    %v412 = vpop.f32.mrb[0].mxu0
    %v413 = vadd.f32 %v101, %v412
    %v414 = vpop.f32.mrb[0].mxu0
    %v415 = vpop.f32.mrb[0].mxu0
    %v416 = vadd.f32 %v101, %v415
    %v417 = vpop.f32.mrb[0].mxu0
    %418 = vmatprep.mubr.bf16.mxu0 0
    %419 = vmatmul.mubr.bf16.gmra.mrb[0].mxu0 %v279
    %v420 = vpop.f32.mrb[0].mxu0
    %v421 = vadd.f32 %v101, %v420
    %v422 = vpop.f32.mrb[0].mxu0
    %v423 = vpop.f32.mrb[0].mxu0
    %v424 = vadd.f32 %v101, %v423
    %v425 = vpop.f32.mrb[0].mxu0
    %426 = vmatprep.mubr.bf16.mxu0 0
    %427 = vmatmul.mubr.bf16.gmra.mrb[0].mxu0 %v282
    %v428 = vpop.f32.mrb[0].mxu0
    %v429 = vadd.f32 %v101, %v428
    %v430 = vpop.f32.mrb[0].mxu0
    %v431 = vpop.f32.mrb[0].mxu0
    %v432 = vadd.f32 %v101, %v431
    %v433 = vpop.f32.mrb[0].mxu0
    %434 = vmatprep.mubr.bf16.mxu0 0
    %435 = vmatmul.mubr.bf16.gmra.mrb[0].mxu0 %v285
    %v436 = vpop.f32.mrb[0].mxu0
    %v437 = vadd.f32 %v101, %v436
    %v438 = vpop.f32.mrb[0].mxu0
    %v439 = vpop.f32.mrb[0].mxu0
    %v440 = vadd.f32 %v101, %v439
    %v441 = vpop.f32.mrb[0].mxu0
    %442 = vmatprep.mubr.bf16.mxu0 0
    %443 = vmatmul.mubr.bf16.gmra.mrb[0].mxu0 %v288
    %v444 = vpop.f32.mrb[0].mxu0
    %v445 = vadd.f32 %v101, %v444
    %v446 = vpop.f32.mrb[0].mxu0
    %v447 = vpop.f32.mrb[0].mxu0
    %v448 = vadd.f32 %v101, %v447
    %v449 = vpop.f32.mrb[0].mxu0
    %450 = vmatprep.mubr.bf16.mxu0 0
    %451 = vmatmul.mubr.bf16.gmra.mrb[0].mxu0 %v291
    %v452 = vpop.f32.mrb[0].mxu0
    %v453 = vadd.f32 %v101, %v452
    %v454 = vpop.f32.mrb[0].mxu0
    %v455 = vpop.f32.mrb[0].mxu0
    %v456 = vadd.f32 %v101, %v455
    %v457 = vpop.f32.mrb[0].mxu0
    %458 = vmatprep.mubr.bf16.mxu0 0
    %459 = vmatmul.mubr.bf16.gmra.mrb[0].mxu0 %v294
    %v460 = vpop.f32.mrb[0].mxu0
    %v461 = vadd.f32 %v101, %v460
    %v462 = vpop.f32.mrb[0].mxu0
    %v463 = vpop.f32.mrb[0].mxu0
    %v464 = vadd.f32 %v101, %v463
    %v465 = vpop.f32.mrb[0].mxu0
    %466 = vmatprep.mubr.bf16.mxu0 0
    %467 = vmatmul.mubr.bf16.gmra.mrb[0].mxu0 %v297
    %v468 = vpop.f32.mrb[0].mxu0
    %v469 = vadd.f32 %v101, %v468
    %v470 = vpop.f32.mrb[0].mxu0
    %v471 = vpop.f32.mrb[0].mxu0
    %v472 = vadd.f32 %v101, %v471
    %v473 = vpop.f32.mrb[0].mxu0
    %474 = vmatprep.mubr.bf16.mxu0 0
    %475 = vmatmul.mubr.bf16.gmra.mrb[0].mxu0 %v300
    %v476 = vpop.f32.mrb[0].mxu0
    %v477 = vadd.f32 %v101, %v476
    %v478 = vpop.f32.mrb[0].mxu0
    %v479 = vpop.f32.mrb[0].mxu0
    %v480 = vadd.f32 %v101, %v479
    %v481 = vpop.f32.mrb[0].mxu0
    %482 = vmatprep.mubr.bf16.mxu0 0
    %483 = vmatmul.mubr.bf16.gmra.mrb[0].mxu0 %v303
    %v484 = vpop.f32.mrb[0].mxu0
    %v485 = vadd.f32 %v101, %v484
    %v486 = vpop.f32.mrb[0].mxu0
    %v487 = vpop.f32.mrb[0].mxu0
    %v488 = vadd.f32 %v101, %v487
    %v489 = vpop.f32.mrb[0].mxu0
    %490 = vmatprep.mubr.bf16.mxu0 0
    %491 = vmatmul.mubr.bf16.gmra.mrb[0].mxu0 %v306
    %v492 = vpop.f32.mrb[0].mxu0
    %v493 = vadd.f32 %v101, %v492
    %v494 = vpop.f32.mrb[0].mxu0
    %v495 = vpop.f32.mrb[0].mxu0
    %v496 = vadd.f32 %v101, %v495
    %v497 = vpop.f32.mrb[0].mxu0
    %498 = vmatprep.mubr.bf16.mxu0 0
    %499 = vmatmul.mubr.bf16.gmra.mrb[0].mxu0 %v309
    %v500 = vpop.f32.mrb[0].mxu0
    %v501 = vadd.f32 %v101, %v500
    %v502 = vpop.f32.mrb[0].mxu0
    %v503 = vpop.f32.mrb[0].mxu0
    %v504 = vadd.f32 %v101, %v503
    %v505 = vpop.f32.mrb[0].mxu0
    %506 = vmatprep.mubr.bf16.mxu0 0
    %507 = vmatmul.mubr.bf16.gmra.mrb[0].mxu0 %v312
    %v508 = vpop.f32.mrb[0].mxu0
    %v509 = vadd.f32 %v101, %v508
    %v510 = vpop.f32.mrb[0].mxu0
    %v511 = vpop.f32.mrb[0].mxu0
    %v512 = vadd.f32 %v101, %v511
    %v513 = vpop.f32.mrb[0].mxu0
    %514 = vmatprep.mubr.bf16.mxu0 0
    %515 = vmatmul.mubr.bf16.gmra.mrb[0].mxu0 %v315
    %v516 = vpop.f32.mrb[0].mxu0
    %v517 = vadd.f32 %v101, %v516
    %v518 = vpop.f32.mrb[0].mxu0
    %v519 = vpop.f32.mrb[0].mxu0
    %v520 = vadd.f32 %v101, %v519
    %v521 = vpop.f32.mrb[0].mxu0
    %522 = vmatprep.mubr.bf16.mxu0 0
    %523 = vmatmul.mubr.bf16.gmra.mrb[0].mxu0 %v318
    %v524 = vpop.f32.mrb[0].mxu0
    %v525 = vadd.f32 %v101, %v524
    %v526 = vpop.f32.mrb[0].mxu0
    %v527 = vpop.f32.mrb[0].mxu0
    %v528 = vadd.f32 %v101, %v527
    %v529 = vpop.f32.mrb[0].mxu0
    %530 = vmatprep.mubr.bf16.mxu0 0
    %531 = vmatmul.mubr.bf16.gmra.mrb[0].mxu0 %v321
    %v532 = vpop.f32.mrb[0].mxu0
    %v533 = vadd.f32 %v101, %v532
    %v534 = vpop.f32.mrb[0].mxu0
    %v535 = vpop.f32.mrb[0].mxu0
    %v536 = vadd.f32 %v101, %v535
    %v537 = vpop.f32.mrb[0].mxu0
    %538 = vmatprep.mubr.bf16.mxu0 0
    %539 = vmatmul.mubr.bf16.gmra.mrb[0].mxu0 %v324
    %v540 = vpop.f32.mrb[0].mxu0
    %v541 = vadd.f32 %v101, %v540
    %v542 = vpop.f32.mrb[0].mxu0
    %v543 = vpop.f32.mrb[0].mxu0
    %v544 = vadd.f32 %v101, %v543
    %v545 = vpop.f32.mrb[0].mxu0
    %546 = vmatprep.mubr.bf16.mxu0 0
    %547 = vmatmul.mubr.bf16.gmra.mrb[0].mxu0 %v327
    %v548 = vpop.f32.mrb[0].mxu0
    %v549 = vadd.f32 %v101, %v548
    %v550 = vpop.f32.mrb[0].mxu0
    %v551 = vpop.f32.mrb[0].mxu0
    %v552 = vadd.f32 %v101, %v551
    %v553 = vpop.f32.mrb[0].mxu0
    %554 = vmatprep.mubr.bf16.mxu0 0
    %555 = vmatmul.mubr.bf16.gmra.mrb[0].mxu0 %v330
    %v556 = vpop.f32.mrb[0].mxu0
    %v557 = vadd.f32 %v101, %v556
    %v558 = vpop.f32.mrb[0].mxu0
    %v559 = vpop.f32.mrb[0].mxu0
    %v560 = vadd.f32 %v101, %v559
    %v561 = vpop.f32.mrb[0].mxu0
    %562 = vmatprep.mubr.bf16.mxu0 0
    %563 = vmatmul.mubr.bf16.gmra.mrb[0].mxu0 %v333
    %v564 = vpop.f32.mrb[0].mxu0
    %v565 = vadd.f32 %v101, %v564
    %v566 = vpop.f32.mrb[0].mxu0
    %v567 = vpop.f32.mrb[0].mxu0
    %v568 = vadd.f32 %v101, %v567
    %v569 = vpop.f32.mrb[0].mxu0
    %570 = vmatprep.mubr.bf16.mxu0 0
    %571 = vmatmul.mubr.bf16.gmra.mrb[0].mxu0 %v336
    %v572 = vpop.f32.mrb[0].mxu0
    %v573 = vadd.f32 %v101, %v572
    %v574 = vpop.f32.mrb[0].mxu0
    %v575 = vpop.f32.mrb[0].mxu0
    %v576 = vadd.f32 %v101, %v575
    %v577 = vpop.f32.mrb[0].mxu0
    %578 = vmatprep.mubr.bf16.mxu0 0
    %579 = vmatmul.mubr.bf16.gmra.mrb[0].mxu0 %v339
    %v580 = vpop.f32.mrb[0].mxu0
    %v581 = vadd.f32 %v101, %v580
    %v582 = vpop.f32.mrb[0].mxu0
    %v583 = vpop.f32.mrb[0].mxu0
    %v584 = vadd.f32 %v101, %v583
    %v585 = vpop.f32.mrb[0].mxu0
    %586 = vmatprep.mubr.bf16.mxu0 0
    %587 = vmatmul.mubr.bf16.gmra.mrb[0].mxu0 %v342
    %v588 = vpop.f32.mrb[0].mxu0
    %v589 = vadd.f32 %v101, %v588
    %v590 = vpop.f32.mrb[0].mxu0
    %v591 = vpop.f32.mrb[0].mxu0
    %v592 = vadd.f32 %v101, %v591
    %v593 = vpop.f32.mrb[0].mxu0
    %594 = vmatprep.mubr.bf16.mxu0 0
    %595 = vmatmul.mubr.bf16.gmra.mrb[0].mxu0 %v345
    %v596 = vpop.f32.mrb[0].mxu0
    %v597 = vadd.f32 %v101, %v596
    %v598 = vpop.f32.mrb[0].mxu0
    %v599 = vpop.f32.mrb[0].mxu0
    %v600 = vadd.f32 %v101, %v599
    %v601 = vpop.f32.mrb[0].mxu0
    %602 = vmatprep.mubr.bf16.mxu0 0
    %603 = vmatmul.mubr.bf16.gmra.mrb[0].mxu0 %v348
    %v604 = vpop.f32.mrb[0].mxu0
    %v605 = vadd.f32 %v101, %v604
    %v606 = vpop.f32.mrb[0].mxu0
    %v607 = vpop.f32.mrb[0].mxu0
    %v608 = vadd.f32 %v101, %v607
    %v609 = vpop.f32.mrb[0].mxu0
    %610 = vmatprep.mubr.bf16.mxu0 0
    %611 = vmatmul.mubr.bf16.gmra.mrb[0].mxu0 %v351
    %v612 = vpop.f32.mrb[0].mxu0
    %v613 = vadd.f32 %v101, %v612
    %v614 = vpop.f32.mrb[0].mxu0
    %v615 = vpop.f32.mrb[0].mxu0
    %v616 = vadd.f32 %v101, %v615
    %v617 = vpop.f32.mrb[0].mxu0
    %618 = vmatprep.mubr.bf16.mxu0 0
    %619 = vmatmul.mubr.bf16.gmra.mrb[0].mxu0 %v354
    %v620 = vpop.f32.mrb[0].mxu0
    %v621 = vadd.f32 %v101, %v620
    %v622 = vpop.f32.mrb[0].mxu0
    %v623 = vpop.f32.mrb[0].mxu0
    %v624 = vadd.f32 %v101, %v623
    %v625 = vpop.f32.mrb[0].mxu0
    %626 = vmatprep.mubr.bf16.mxu0 0
    %627 = vmatmul.mubr.bf16.gmra.mrb[0].mxu0 %v357
    %v628 = vpop.f32.mrb[0].mxu0
    %v629 = vadd.f32 %v101, %v628
    %v630 = vpop.f32.mrb[0].mxu0
    %v631 = vpop.f32.mrb[0].mxu0
    %v632 = vadd.f32 %v101, %v631
    %v633 = vpop.f32.mrb[0].mxu0
    %634 = vmatprep.mubr.bf16.mxu0 0
    %635 = vmatmul.mubr.bf16.gmra.mrb[0].mxu0 %v360
    %v636 = vpop.f32.mrb[0].mxu0
    %v637 = vadd.f32 %v101, %v636
    %v638 = vpop.f32.mrb[0].mxu0
    %v639 = vpop.f32.mrb[0].mxu0
    %v640 = vadd.f32 %v101, %v639
    %v641 = vpop.f32.mrb[0].mxu0
    %642 = vmatprep.mubr.bf16.mxu0 0
    %643 = vmatmul.mubr.bf16.gmra.mrb[0].mxu0 %v363
    %v644 = vpop.f32.mrb[0].mxu0
    %v645 = vadd.f32 %v101, %v644
    %v646 = vpop.f32.mrb[0].mxu0
    %v647 = vpop.f32.mrb[0].mxu0
    %v648 = vadd.f32 %v101, %v647
    %v649 = vpop.f32.mrb[0].mxu0
    %650 = vmatprep.mubr.bf16.mxu0 0
    %651 = vmatmul.mubr.bf16.gmra.mrb[0].mxu0 %v366
    %v652 = vpop.f32.mrb[0].mxu0
    %v653 = vadd.f32 %v101, %v652
    %v654 = vpop.f32.mrb[0].mxu0
    %v655 = vpop.f32.mrb[0].mxu0
    %v656 = vadd.f32 %v101, %v655
    %v657 = vpop.f32.mrb[0].mxu0
    %658 = vmatprep.mubr.bf16.mxu0 0
    %659 = vmatmul.mubr.bf16.gmra.mrb[0].mxu0 %v369
    %v660 = vpop.f32.mrb[0].mxu0
    %v661 = vadd.f32 %v101, %v660
    %v662 = vpop.f32.mrb[0].mxu0
    %v663 = vpop.f32.mrb[0].mxu0
    %v664 = vadd.f32 %v101, %v663
    %v665 = vpop.f32.mrb[0].mxu0
    %666 = vdwg.mxu0
    %v667 = vmax.f32 %v413, 0.0
    %v668 = vmax.f32 %v416, 0.0
    %v669 = vmax.f32 %v421, 0.0
    %v670 = vmax.f32 %v424, 0.0
    %v671 = vmax.f32 %v429, 0.0
    %v672 = vmax.f32 %v432, 0.0
    %v673 = vmax.f32 %v437, 0.0
    %v674 = vmax.f32 %v440, 0.0
    %v675 = vmax.f32 %v445, 0.0
    %v676 = vmax.f32 %v448, 0.0
    %v677 = vmax.f32 %v453, 0.0
    %v678 = vmax.f32 %v456, 0.0
    %v679 = vmax.f32 %v461, 0.0
    %v680 = vmax.f32 %v464, 0.0
    %v681 = vmax.f32 %v469, 0.0
    %v682 = vmax.f32 %v472, 0.0
    %v683 = vmax.f32 %v477, 0.0
    %v684 = vmax.f32 %v480, 0.0
    %v685 = vmax.f32 %v485, 0.0
    %v686 = vmax.f32 %v488, 0.0
    %v687 = vmax.f32 %v493, 0.0
    %v688 = vmax.f32 %v496, 0.0
    %v689 = vmax.f32 %v501, 0.0
    %v690 = vmax.f32 %v504, 0.0
    %v691 = vmax.f32 %v509, 0.0
    %v692 = vmax.f32 %v512, 0.0
    %v693 = vmax.f32 %v517, 0.0
    %v694 = vmax.f32 %v520, 0.0
    %v695 = vmax.f32 %v525, 0.0
    %v696 = vmax.f32 %v528, 0.0
    %v697 = vmax.f32 %v533, 0.0
    %v698 = vmax.f32 %v536, 0.0
    %v699 = vmax.f32 %v541, 0.0
    %v700 = vmax.f32 %v544, 0.0
    %v701 = vmax.f32 %v549, 0.0
    %v702 = vmax.f32 %v552, 0.0
    %v703 = vmax.f32 %v557, 0.0
    %v704 = vmax.f32 %v560, 0.0
    %v705 = vmax.f32 %v565, 0.0
    %v706 = vmax.f32 %v568, 0.0
    %v707 = vmax.f32 %v573, 0.0
    %v708 = vmax.f32 %v576, 0.0
    %v709 = vmax.f32 %v581, 0.0
    %v710 = vmax.f32 %v584, 0.0
    %v711 = vmax.f32 %v589, 0.0
    %v712 = vmax.f32 %v592, 0.0
    %v713 = vmax.f32 %v597, 0.0
    %v714 = vmax.f32 %v600, 0.0
    %v715 = vmax.f32 %v605, 0.0
    %v716 = vmax.f32 %v608, 0.0
    %v717 = vmax.f32 %v613, 0.0
    %v718 = vmax.f32 %v616, 0.0
    %v719 = vmax.f32 %v621, 0.0
    %v720 = vmax.f32 %v624, 0.0
    %v721 = vmax.f32 %v629, 0.0
    %v722 = vmax.f32 %v632, 0.0
    %v723 = vmax.f32 %v637, 0.0
    %v724 = vmax.f32 %v640, 0.0
    %v725 = vmax.f32 %v645, 0.0
    %v726 = vmax.f32 %v648, 0.0
    %v727 = vmax.f32 %v653, 0.0
    %v728 = vmax.f32 %v656, 0.0
    %v729 = vmax.f32 %v661, 0.0
    %v730 = vmax.f32 %v664, 0.0
    %v731 = vmax.f32 %v667, %v669
    %v732 = vmax.f32 %v668, %v670
    %v733 = vmax.f32 %v671, %v673
    %v734 = vmax.f32 %v672, %v674
    %v735 = vmax.f32 %v675, %v677
    %v736 = vmax.f32 %v676, %v678
    %v737 = vmax.f32 %v679, %v681
    %v738 = vmax.f32 %v680, %v682
    %v739 = vmax.f32 %v683, %v685
    %v740 = vmax.f32 %v684, %v686
    %v741 = vmax.f32 %v687, %v689
    %v742 = vmax.f32 %v688, %v690
    %v743 = vmax.f32 %v691, %v693
    %v744 = vmax.f32 %v692, %v694
    %v745 = vmax.f32 %v695, %v697
    %v746 = vmax.f32 %v696, %v698
    %v747 = vmax.f32 %v699, %v701
    %v748 = vmax.f32 %v700, %v702
    %v749 = vmax.f32 %v703, %v705
    %v750 = vmax.f32 %v704, %v706
    %v751 = vmax.f32 %v707, %v709
    %v752 = vmax.f32 %v708, %v710
    %v753 = vmax.f32 %v711, %v713
    %v754 = vmax.f32 %v712, %v714
    %v755 = vmax.f32 %v715, %v717
    %v756 = vmax.f32 %v716, %v718
    %v757 = vmax.f32 %v719, %v721
    %v758 = vmax.f32 %v720, %v722
    %v759 = vmax.f32 %v723, %v725
    %v760 = vmax.f32 %v724, %v726
    %v761 = vmax.f32 %v727, %v729
    %v762 = vmax.f32 %v728, %v730
    %v795 = vcombine.high %v731, %v731
    %v797 = vunpack.c.l.s4 1983009808
    %v798 = vunpack.c.0.s8 %v797
    %v799 = vlaneseq
    %v800 = vshrl.u32 %v799, 7
    %v801 = vsub.s32 %v798, %v800
    %v802 = vrot.slane %v731, %v801
    %v804 = vunpack.c.l.s4 1983009808
    %v805 = vunpack.c.0.s8 %v804
    %v806 = vlaneseq
    %v807 = vshrl.u32 %v806, 7
    %v808 = vsub.s32 %v805, %v807
    %v809 = vrot.slane %v795, %v808
    %v810 = vcombine.high %v802, %v802
    %v811 = vcombine.high %v809, %v809
    %v812 = vcombine.high %v732, %v732
    %v814 = vunpack.c.l.s4 1983009808
    %v815 = vunpack.c.0.s8 %v814
    %v816 = vlaneseq
    %v817 = vshrl.u32 %v816, 7
    %v818 = vsub.s32 %v815, %v817
    %v819 = vrot.slane %v732, %v818
    %v821 = vunpack.c.l.s4 1983009808
    %v822 = vunpack.c.0.s8 %v821
    %v823 = vlaneseq
    %v824 = vshrl.u32 %v823, 7
    %v825 = vsub.s32 %v822, %v824
    %v826 = vrot.slane %v812, %v825
    %v827 = vcombine.high %v819, %v819
    %v828 = vcombine.high %v826, %v826
    %v829 = vcombine.high %v733, %v733
    %v831 = vunpack.c.l.s4 1983009808
    %v832 = vunpack.c.0.s8 %v831
    %v833 = vlaneseq
    %v834 = vshrl.u32 %v833, 7
    %v835 = vsub.s32 %v832, %v834
    %v836 = vrot.slane %v733, %v835
    %v838 = vunpack.c.l.s4 1983009808
    %v839 = vunpack.c.0.s8 %v838
    %v840 = vlaneseq
    %v841 = vshrl.u32 %v840, 7
    %v842 = vsub.s32 %v839, %v841
    %v843 = vrot.slane %v829, %v842
    %v844 = vcombine.high %v836, %v836
    %v845 = vcombine.high %v843, %v843
    %v846 = vcombine.high %v734, %v734
    %v848 = vunpack.c.l.s4 1983009808
    %v849 = vunpack.c.0.s8 %v848
    %v850 = vlaneseq
    %v851 = vshrl.u32 %v850, 7
    %v852 = vsub.s32 %v849, %v851
    %v853 = vrot.slane %v734, %v852
    %v855 = vunpack.c.l.s4 1983009808
    %v856 = vunpack.c.0.s8 %v855
    %v857 = vlaneseq
    %v858 = vshrl.u32 %v857, 7
    %v859 = vsub.s32 %v856, %v858
    %v860 = vrot.slane %v846, %v859
    %v861 = vcombine.high %v853, %v853
    %v862 = vcombine.high %v860, %v860
    %v863 = vcombine.high %v735, %v735
    %v865 = vunpack.c.l.s4 1983009808
    %v866 = vunpack.c.0.s8 %v865
    %v867 = vlaneseq
    %v868 = vshrl.u32 %v867, 7
    %v869 = vsub.s32 %v866, %v868
    %v870 = vrot.slane %v735, %v869
    %v872 = vunpack.c.l.s4 1983009808
    %v873 = vunpack.c.0.s8 %v872
    %v874 = vlaneseq
    %v875 = vshrl.u32 %v874, 7
    %v876 = vsub.s32 %v873, %v875
    %v877 = vrot.slane %v863, %v876
    %v878 = vcombine.high %v870, %v870
    %v879 = vcombine.high %v877, %v877
    %v880 = vcombine.high %v736, %v736
    %v882 = vunpack.c.l.s4 1983009808
    %v883 = vunpack.c.0.s8 %v882
    %v884 = vlaneseq
    %v885 = vshrl.u32 %v884, 7
    %v886 = vsub.s32 %v883, %v885
    %v887 = vrot.slane %v736, %v886
    %v889 = vunpack.c.l.s4 1983009808
    %v890 = vunpack.c.0.s8 %v889
    %v891 = vlaneseq
    %v892 = vshrl.u32 %v891, 7
    %v893 = vsub.s32 %v890, %v892
    %v894 = vrot.slane %v880, %v893
    %v895 = vcombine.high %v887, %v887
    %v896 = vcombine.high %v894, %v894
    %v897 = vcombine.high %v737, %v737
    %v899 = vunpack.c.l.s4 1983009808
    %v900 = vunpack.c.0.s8 %v899
    %v901 = vlaneseq
    %v902 = vshrl.u32 %v901, 7
    %v903 = vsub.s32 %v900, %v902
    %v904 = vrot.slane %v737, %v903
    %v906 = vunpack.c.l.s4 1983009808
    %v907 = vunpack.c.0.s8 %v906
    %v908 = vlaneseq
    %v909 = vshrl.u32 %v908, 7
    %v910 = vsub.s32 %v907, %v909
    %v911 = vrot.slane %v897, %v910
    %v912 = vcombine.high %v904, %v904
    %v913 = vcombine.high %v911, %v911
    %v914 = vcombine.high %v738, %v738
    %v916 = vunpack.c.l.s4 1983009808
    %v917 = vunpack.c.0.s8 %v916
    %v918 = vlaneseq
    %v919 = vshrl.u32 %v918, 7
    %v920 = vsub.s32 %v917, %v919
    %v921 = vrot.slane %v738, %v920
    %v923 = vunpack.c.l.s4 1983009808
    %v924 = vunpack.c.0.s8 %v923
    %v925 = vlaneseq
    %v926 = vshrl.u32 %v925, 7
    %v927 = vsub.s32 %v924, %v926
    %v928 = vrot.slane %v914, %v927
    %v929 = vcombine.high %v921, %v921
    %v930 = vcombine.high %v928, %v928
    %v931 = vcombine.high %v739, %v739
    %v933 = vunpack.c.l.s4 1983009808
    %v934 = vunpack.c.0.s8 %v933
    %v935 = vlaneseq
    %v936 = vshrl.u32 %v935, 7
    %v937 = vsub.s32 %v934, %v936
    %v938 = vrot.slane %v739, %v937
    %v940 = vunpack.c.l.s4 1983009808
    %v941 = vunpack.c.0.s8 %v940
    %v942 = vlaneseq
    %v943 = vshrl.u32 %v942, 7
    %v944 = vsub.s32 %v941, %v943
    %v945 = vrot.slane %v931, %v944
    %v946 = vcombine.high %v938, %v938
    %v947 = vcombine.high %v945, %v945
    %v948 = vcombine.high %v740, %v740
    %v950 = vunpack.c.l.s4 1983009808
    %v951 = vunpack.c.0.s8 %v950
    %v952 = vlaneseq
    %v953 = vshrl.u32 %v952, 7
    %v954 = vsub.s32 %v951, %v953
    %v955 = vrot.slane %v740, %v954
    %v957 = vunpack.c.l.s4 1983009808
    %v958 = vunpack.c.0.s8 %v957
    %v959 = vlaneseq
    %v960 = vshrl.u32 %v959, 7
    %v961 = vsub.s32 %v958, %v960
    %v962 = vrot.slane %v948, %v961
    %v963 = vcombine.high %v955, %v955
    %v964 = vcombine.high %v962, %v962
    %v965 = vcombine.high %v741, %v741
    %v967 = vunpack.c.l.s4 1983009808
    %v968 = vunpack.c.0.s8 %v967
    %v969 = vlaneseq
    %v970 = vshrl.u32 %v969, 7
    %v971 = vsub.s32 %v968, %v970
    %v972 = vrot.slane %v741, %v971
    %v974 = vunpack.c.l.s4 1983009808
    %v975 = vunpack.c.0.s8 %v974
    %v976 = vlaneseq
    %v977 = vshrl.u32 %v976, 7
    %v978 = vsub.s32 %v975, %v977
    %v979 = vrot.slane %v965, %v978
    %v980 = vcombine.high %v972, %v972
    %v981 = vcombine.high %v979, %v979
    %v982 = vcombine.high %v742, %v742
    %v984 = vunpack.c.l.s4 1983009808
    %v985 = vunpack.c.0.s8 %v984
    %v986 = vlaneseq
    %v987 = vshrl.u32 %v986, 7
    %v988 = vsub.s32 %v985, %v987
    %v989 = vrot.slane %v742, %v988
    %v991 = vunpack.c.l.s4 1983009808
    %v992 = vunpack.c.0.s8 %v991
    %v993 = vlaneseq
    %v994 = vshrl.u32 %v993, 7
    %v995 = vsub.s32 %v992, %v994
    %v996 = vrot.slane %v982, %v995
    %v997 = vcombine.high %v989, %v989
    %v998 = vcombine.high %v996, %v996
    %v999 = vcombine.high %v743, %v743
    %v1001 = vunpack.c.l.s4 1983009808
    %v1002 = vunpack.c.0.s8 %v1001
    %v1003 = vlaneseq
    %v1004 = vshrl.u32 %v1003, 7
    %v1005 = vsub.s32 %v1002, %v1004
    %v1006 = vrot.slane %v743, %v1005
    %v1008 = vunpack.c.l.s4 1983009808
    %v1009 = vunpack.c.0.s8 %v1008
    %v1010 = vlaneseq
    %v1011 = vshrl.u32 %v1010, 7
    %v1012 = vsub.s32 %v1009, %v1011
    %v1013 = vrot.slane %v999, %v1012
    %v1014 = vcombine.high %v1006, %v1006
    %v1015 = vcombine.high %v1013, %v1013
    %v1016 = vcombine.high %v744, %v744
    %v1018 = vunpack.c.l.s4 1983009808
    %v1019 = vunpack.c.0.s8 %v1018
    %v1020 = vlaneseq
    %v1021 = vshrl.u32 %v1020, 7
    %v1022 = vsub.s32 %v1019, %v1021
    %v1023 = vrot.slane %v744, %v1022
    %v1025 = vunpack.c.l.s4 1983009808
    %v1026 = vunpack.c.0.s8 %v1025
    %v1027 = vlaneseq
    %v1028 = vshrl.u32 %v1027, 7
    %v1029 = vsub.s32 %v1026, %v1028
    %v1030 = vrot.slane %v1016, %v1029
    %v1031 = vcombine.high %v1023, %v1023
    %v1032 = vcombine.high %v1030, %v1030
    %v1033 = vcombine.high %v745, %v745
    %v1035 = vunpack.c.l.s4 1983009808
    %v1036 = vunpack.c.0.s8 %v1035
    %v1037 = vlaneseq
    %v1038 = vshrl.u32 %v1037, 7
    %v1039 = vsub.s32 %v1036, %v1038
    %v1040 = vrot.slane %v745, %v1039
    %v1042 = vunpack.c.l.s4 1983009808
    %v1043 = vunpack.c.0.s8 %v1042
    %v1044 = vlaneseq
    %v1045 = vshrl.u32 %v1044, 7
    %v1046 = vsub.s32 %v1043, %v1045
    %v1047 = vrot.slane %v1033, %v1046
    %v1048 = vcombine.high %v1040, %v1040
    %v1049 = vcombine.high %v1047, %v1047
    %v1050 = vcombine.high %v746, %v746
    %v1052 = vunpack.c.l.s4 1983009808
    %v1053 = vunpack.c.0.s8 %v1052
    %v1054 = vlaneseq
    %v1055 = vshrl.u32 %v1054, 7
    %v1056 = vsub.s32 %v1053, %v1055
    %v1057 = vrot.slane %v746, %v1056
    %v1059 = vunpack.c.l.s4 1983009808
    %v1060 = vunpack.c.0.s8 %v1059
    %v1061 = vlaneseq
    %v1062 = vshrl.u32 %v1061, 7
    %v1063 = vsub.s32 %v1060, %v1062
    %v1064 = vrot.slane %v1050, %v1063
    %v1065 = vcombine.high %v1057, %v1057
    %v1066 = vcombine.high %v1064, %v1064
    %v1067 = vcombine.high %v747, %v747
    %v1069 = vunpack.c.l.s4 1983009808
    %v1070 = vunpack.c.0.s8 %v1069
    %v1071 = vlaneseq
    %v1072 = vshrl.u32 %v1071, 7
    %v1073 = vsub.s32 %v1070, %v1072
    %v1074 = vrot.slane %v747, %v1073
    %v1076 = vunpack.c.l.s4 1983009808
    %v1077 = vunpack.c.0.s8 %v1076
    %v1078 = vlaneseq
    %v1079 = vshrl.u32 %v1078, 7
    %v1080 = vsub.s32 %v1077, %v1079
    %v1081 = vrot.slane %v1067, %v1080
    %v1082 = vcombine.high %v1074, %v1074
    %v1083 = vcombine.high %v1081, %v1081
    %v1084 = vcombine.high %v748, %v748
    %v1086 = vunpack.c.l.s4 1983009808
    %v1087 = vunpack.c.0.s8 %v1086
    %v1088 = vlaneseq
    %v1089 = vshrl.u32 %v1088, 7
    %v1090 = vsub.s32 %v1087, %v1089
    %v1091 = vrot.slane %v748, %v1090
    %v1093 = vunpack.c.l.s4 1983009808
    %v1094 = vunpack.c.0.s8 %v1093
    %v1095 = vlaneseq
    %v1096 = vshrl.u32 %v1095, 7
    %v1097 = vsub.s32 %v1094, %v1096
    %v1098 = vrot.slane %v1084, %v1097
    %v1099 = vcombine.high %v1091, %v1091
    %v1100 = vcombine.high %v1098, %v1098
    %v1101 = vcombine.high %v749, %v749
    %v1103 = vunpack.c.l.s4 1983009808
    %v1104 = vunpack.c.0.s8 %v1103
    %v1105 = vlaneseq
    %v1106 = vshrl.u32 %v1105, 7
    %v1107 = vsub.s32 %v1104, %v1106
    %v1108 = vrot.slane %v749, %v1107
    %v1110 = vunpack.c.l.s4 1983009808
    %v1111 = vunpack.c.0.s8 %v1110
    %v1112 = vlaneseq
    %v1113 = vshrl.u32 %v1112, 7
    %v1114 = vsub.s32 %v1111, %v1113
    %v1115 = vrot.slane %v1101, %v1114
    %v1116 = vcombine.high %v1108, %v1108
    %v1117 = vcombine.high %v1115, %v1115
    %v1118 = vcombine.high %v750, %v750
    %v1120 = vunpack.c.l.s4 1983009808
    %v1121 = vunpack.c.0.s8 %v1120
    %v1122 = vlaneseq
    %v1123 = vshrl.u32 %v1122, 7
    %v1124 = vsub.s32 %v1121, %v1123
    %v1125 = vrot.slane %v750, %v1124
    %v1127 = vunpack.c.l.s4 1983009808
    %v1128 = vunpack.c.0.s8 %v1127
    %v1129 = vlaneseq
    %v1130 = vshrl.u32 %v1129, 7
    %v1131 = vsub.s32 %v1128, %v1130
    %v1132 = vrot.slane %v1118, %v1131
    %v1133 = vcombine.high %v1125, %v1125
    %v1134 = vcombine.high %v1132, %v1132
    %v1135 = vcombine.high %v751, %v751
    %v1137 = vunpack.c.l.s4 1983009808
    %v1138 = vunpack.c.0.s8 %v1137
    %v1139 = vlaneseq
    %v1140 = vshrl.u32 %v1139, 7
    %v1141 = vsub.s32 %v1138, %v1140
    %v1142 = vrot.slane %v751, %v1141
    %v1144 = vunpack.c.l.s4 1983009808
    %v1145 = vunpack.c.0.s8 %v1144
    %v1146 = vlaneseq
    %v1147 = vshrl.u32 %v1146, 7
    %v1148 = vsub.s32 %v1145, %v1147
    %v1149 = vrot.slane %v1135, %v1148
    %v1150 = vcombine.high %v1142, %v1142
    %v1151 = vcombine.high %v1149, %v1149
    %v1152 = vcombine.high %v752, %v752
    %v1154 = vunpack.c.l.s4 1983009808
    %v1155 = vunpack.c.0.s8 %v1154
    %v1156 = vlaneseq
    %v1157 = vshrl.u32 %v1156, 7
    %v1158 = vsub.s32 %v1155, %v1157
    %v1159 = vrot.slane %v752, %v1158
    %v1161 = vunpack.c.l.s4 1983009808
    %v1162 = vunpack.c.0.s8 %v1161
    %v1163 = vlaneseq
    %v1164 = vshrl.u32 %v1163, 7
    %v1165 = vsub.s32 %v1162, %v1164
    %v1166 = vrot.slane %v1152, %v1165
    %v1167 = vcombine.high %v1159, %v1159
    %v1168 = vcombine.high %v1166, %v1166
    %v1169 = vcombine.high %v753, %v753
    %v1171 = vunpack.c.l.s4 1983009808
    %v1172 = vunpack.c.0.s8 %v1171
    %v1173 = vlaneseq
    %v1174 = vshrl.u32 %v1173, 7
    %v1175 = vsub.s32 %v1172, %v1174
    %v1176 = vrot.slane %v753, %v1175
    %v1178 = vunpack.c.l.s4 1983009808
    %v1179 = vunpack.c.0.s8 %v1178
    %v1180 = vlaneseq
    %v1181 = vshrl.u32 %v1180, 7
    %v1182 = vsub.s32 %v1179, %v1181
    %v1183 = vrot.slane %v1169, %v1182
    %v1184 = vcombine.high %v1176, %v1176
    %v1185 = vcombine.high %v1183, %v1183
    %v1186 = vcombine.high %v754, %v754
    %v1188 = vunpack.c.l.s4 1983009808
    %v1189 = vunpack.c.0.s8 %v1188
    %v1190 = vlaneseq
    %v1191 = vshrl.u32 %v1190, 7
    %v1192 = vsub.s32 %v1189, %v1191
    %v1193 = vrot.slane %v754, %v1192
    %v1195 = vunpack.c.l.s4 1983009808
    %v1196 = vunpack.c.0.s8 %v1195
    %v1197 = vlaneseq
    %v1198 = vshrl.u32 %v1197, 7
    %v1199 = vsub.s32 %v1196, %v1198
    %v1200 = vrot.slane %v1186, %v1199
    %v1201 = vcombine.high %v1193, %v1193
    %v1202 = vcombine.high %v1200, %v1200
    %v1203 = vcombine.high %v755, %v755
    %v1205 = vunpack.c.l.s4 1983009808
    %v1206 = vunpack.c.0.s8 %v1205
    %v1207 = vlaneseq
    %v1208 = vshrl.u32 %v1207, 7
    %v1209 = vsub.s32 %v1206, %v1208
    %v1210 = vrot.slane %v755, %v1209
    %v1212 = vunpack.c.l.s4 1983009808
    %v1213 = vunpack.c.0.s8 %v1212
    %v1214 = vlaneseq
    %v1215 = vshrl.u32 %v1214, 7
    %v1216 = vsub.s32 %v1213, %v1215
    %v1217 = vrot.slane %v1203, %v1216
    %v1218 = vcombine.high %v1210, %v1210
    %v1219 = vcombine.high %v1217, %v1217
    %v1220 = vcombine.high %v756, %v756
    %v1222 = vunpack.c.l.s4 1983009808
    %v1223 = vunpack.c.0.s8 %v1222
    %v1224 = vlaneseq
    %v1225 = vshrl.u32 %v1224, 7
    %v1226 = vsub.s32 %v1223, %v1225
    %v1227 = vrot.slane %v756, %v1226
    %v1229 = vunpack.c.l.s4 1983009808
    %v1230 = vunpack.c.0.s8 %v1229
    %v1231 = vlaneseq
    %v1232 = vshrl.u32 %v1231, 7
    %v1233 = vsub.s32 %v1230, %v1232
    %v1234 = vrot.slane %v1220, %v1233
    %v1235 = vcombine.high %v1227, %v1227
    %v1236 = vcombine.high %v1234, %v1234
    %v1237 = vcombine.high %v757, %v757
    %v1239 = vunpack.c.l.s4 1983009808
    %v1240 = vunpack.c.0.s8 %v1239
    %v1241 = vlaneseq
    %v1242 = vshrl.u32 %v1241, 7
    %v1243 = vsub.s32 %v1240, %v1242
    %v1244 = vrot.slane %v757, %v1243
    %v1246 = vunpack.c.l.s4 1983009808
    %v1247 = vunpack.c.0.s8 %v1246
    %v1248 = vlaneseq
    %v1249 = vshrl.u32 %v1248, 7
    %v1250 = vsub.s32 %v1247, %v1249
    %v1251 = vrot.slane %v1237, %v1250
    %v1252 = vcombine.high %v1244, %v1244
    %v1253 = vcombine.high %v1251, %v1251
    %v1254 = vcombine.high %v758, %v758
    %v1256 = vunpack.c.l.s4 1983009808
    %v1257 = vunpack.c.0.s8 %v1256
    %v1258 = vlaneseq
    %v1259 = vshrl.u32 %v1258, 7
    %v1260 = vsub.s32 %v1257, %v1259
    %v1261 = vrot.slane %v758, %v1260
    %v1263 = vunpack.c.l.s4 1983009808
    %v1264 = vunpack.c.0.s8 %v1263
    %v1265 = vlaneseq
    %v1266 = vshrl.u32 %v1265, 7
    %v1267 = vsub.s32 %v1264, %v1266
    %v1268 = vrot.slane %v1254, %v1267
    %v1269 = vcombine.high %v1261, %v1261
    %v1270 = vcombine.high %v1268, %v1268
    %v1271 = vcombine.high %v759, %v759
    %v1273 = vunpack.c.l.s4 1983009808
    %v1274 = vunpack.c.0.s8 %v1273
    %v1275 = vlaneseq
    %v1276 = vshrl.u32 %v1275, 7
    %v1277 = vsub.s32 %v1274, %v1276
    %v1278 = vrot.slane %v759, %v1277
    %v1280 = vunpack.c.l.s4 1983009808
    %v1281 = vunpack.c.0.s8 %v1280
    %v1282 = vlaneseq
    %v1283 = vshrl.u32 %v1282, 7
    %v1284 = vsub.s32 %v1281, %v1283
    %v1285 = vrot.slane %v1271, %v1284
    %v1286 = vcombine.high %v1278, %v1278
    %v1287 = vcombine.high %v1285, %v1285
    %v1288 = vcombine.high %v760, %v760
    %v1290 = vunpack.c.l.s4 1983009808
    %v1291 = vunpack.c.0.s8 %v1290
    %v1292 = vlaneseq
    %v1293 = vshrl.u32 %v1292, 7
    %v1294 = vsub.s32 %v1291, %v1293
    %v1295 = vrot.slane %v760, %v1294
    %v1297 = vunpack.c.l.s4 1983009808
    %v1298 = vunpack.c.0.s8 %v1297
    %v1299 = vlaneseq
    %v1300 = vshrl.u32 %v1299, 7
    %v1301 = vsub.s32 %v1298, %v1300
    %v1302 = vrot.slane %v1288, %v1301
    %v1303 = vcombine.high %v1295, %v1295
    %v1304 = vcombine.high %v1302, %v1302
    %v1305 = vcombine.high %v761, %v761
    %v1307 = vunpack.c.l.s4 1983009808
    %v1308 = vunpack.c.0.s8 %v1307
    %v1309 = vlaneseq
    %v1310 = vshrl.u32 %v1309, 7
    %v1311 = vsub.s32 %v1308, %v1310
    %v1312 = vrot.slane %v761, %v1311
    %v1314 = vunpack.c.l.s4 1983009808
    %v1315 = vunpack.c.0.s8 %v1314
    %v1316 = vlaneseq
    %v1317 = vshrl.u32 %v1316, 7
    %v1318 = vsub.s32 %v1315, %v1317
    %v1319 = vrot.slane %v1305, %v1318
    %v1320 = vcombine.high %v1312, %v1312
    %v1321 = vcombine.high %v1319, %v1319
    %v1322 = vcombine.high %v762, %v762
    %v1324 = vunpack.c.l.s4 1983009808
    %v1325 = vunpack.c.0.s8 %v1324
    %v1326 = vlaneseq
    %v1327 = vshrl.u32 %v1326, 7
    %v1328 = vsub.s32 %v1325, %v1327
    %v1329 = vrot.slane %v762, %v1328
    %v1331 = vunpack.c.l.s4 1983009808
    %v1332 = vunpack.c.0.s8 %v1331
    %v1333 = vlaneseq
    %v1334 = vshrl.u32 %v1333, 7
    %v1335 = vsub.s32 %v1332, %v1334
    %v1336 = vrot.slane %v1322, %v1335
    %v1337 = vcombine.high %v1329, %v1329
    %v1338 = vcombine.high %v1336, %v1336
    %vm1467 = vcmask 254976
    %v1468 = vsel %vm1467, %v802, -inf
    %v1469 = vrot.slane %v1468, 4
    %v1470 = vmax.f32 %v1468, %v1469
    %v1471 = vrot.slane %v1470, 2
    %v1472 = vmax.f32 %v1470, %v1471
    %v1473 = vrot.slane %v1472, 1
    %v1474 = vmax.f32 %v1472, %v1473
    %v1475 = vsel %vm1467, %v810, -inf
    %v1476 = vrot.slane %v1475, 4
    %v1477 = vmax.f32 %v1475, %v1476
    %v1478 = vrot.slane %v1477, 2
    %v1479 = vmax.f32 %v1477, %v1478
    %v1480 = vrot.slane %v1479, 1
    %v1481 = vmax.f32 %v1479, %v1480
    %v1482 = vsel %vm1467, %v809, -inf
    %v1483 = vrot.slane %v1482, 4
    %v1484 = vmax.f32 %v1482, %v1483
    %v1485 = vrot.slane %v1484, 2
    %v1486 = vmax.f32 %v1484, %v1485
    %v1487 = vrot.slane %v1486, 1
    %v1488 = vmax.f32 %v1486, %v1487
    %v1489 = vsel %vm1467, %v811, -inf
    %v1490 = vrot.slane %v1489, 4
    %v1491 = vmax.f32 %v1489, %v1490
    %v1492 = vrot.slane %v1491, 2
    %v1493 = vmax.f32 %v1491, %v1492
    %v1494 = vrot.slane %v1493, 1
    %v1495 = vmax.f32 %v1493, %v1494
    %v1496 = vsel %vm1467, %v819, -inf
    %v1497 = vrot.slane %v1496, 4
    %v1498 = vmax.f32 %v1496, %v1497
    %v1499 = vrot.slane %v1498, 2
    %v1500 = vmax.f32 %v1498, %v1499
    %v1501 = vrot.slane %v1500, 1
    %v1502 = vmax.f32 %v1500, %v1501
    %v1503 = vsel %vm1467, %v827, -inf
    %v1504 = vrot.slane %v1503, 4
    %v1505 = vmax.f32 %v1503, %v1504
    %v1506 = vrot.slane %v1505, 2
    %v1507 = vmax.f32 %v1505, %v1506
    %v1508 = vrot.slane %v1507, 1
    %v1509 = vmax.f32 %v1507, %v1508
    %v1510 = vsel %vm1467, %v826, -inf
    %v1511 = vrot.slane %v1510, 4
    %v1512 = vmax.f32 %v1510, %v1511
    %v1513 = vrot.slane %v1512, 2
    %v1514 = vmax.f32 %v1512, %v1513
    %v1515 = vrot.slane %v1514, 1
    %v1516 = vmax.f32 %v1514, %v1515
    %v1517 = vsel %vm1467, %v828, -inf
    %v1518 = vrot.slane %v1517, 4
    %v1519 = vmax.f32 %v1517, %v1518
    %v1520 = vrot.slane %v1519, 2
    %v1521 = vmax.f32 %v1519, %v1520
    %v1522 = vrot.slane %v1521, 1
    %v1523 = vmax.f32 %v1521, %v1522
    %v1524 = vsel %vm1467, %v836, -inf
    %v1525 = vrot.slane %v1524, 4
    %v1526 = vmax.f32 %v1524, %v1525
    %v1527 = vrot.slane %v1526, 2
    %v1528 = vmax.f32 %v1526, %v1527
    %v1529 = vrot.slane %v1528, 1
    %v1530 = vmax.f32 %v1528, %v1529
    %v1531 = vsel %vm1467, %v844, -inf
    %v1532 = vrot.slane %v1531, 4
    %v1533 = vmax.f32 %v1531, %v1532
    %v1534 = vrot.slane %v1533, 2
    %v1535 = vmax.f32 %v1533, %v1534
    %v1536 = vrot.slane %v1535, 1
    %v1537 = vmax.f32 %v1535, %v1536
    %v1538 = vsel %vm1467, %v843, -inf
    %v1539 = vrot.slane %v1538, 4
    %v1540 = vmax.f32 %v1538, %v1539
    %v1541 = vrot.slane %v1540, 2
    %v1542 = vmax.f32 %v1540, %v1541
    %v1543 = vrot.slane %v1542, 1
    %v1544 = vmax.f32 %v1542, %v1543
    %v1545 = vsel %vm1467, %v845, -inf
    %v1546 = vrot.slane %v1545, 4
    %v1547 = vmax.f32 %v1545, %v1546
    %v1548 = vrot.slane %v1547, 2
    %v1549 = vmax.f32 %v1547, %v1548
    %v1550 = vrot.slane %v1549, 1
    %v1551 = vmax.f32 %v1549, %v1550
    %v1552 = vsel %vm1467, %v853, -inf
    %v1553 = vrot.slane %v1552, 4
    %v1554 = vmax.f32 %v1552, %v1553
    %v1555 = vrot.slane %v1554, 2
    %v1556 = vmax.f32 %v1554, %v1555
    %v1557 = vrot.slane %v1556, 1
    %v1558 = vmax.f32 %v1556, %v1557
    %v1559 = vsel %vm1467, %v861, -inf
    %v1560 = vrot.slane %v1559, 4
    %v1561 = vmax.f32 %v1559, %v1560
    %v1562 = vrot.slane %v1561, 2
    %v1563 = vmax.f32 %v1561, %v1562
    %v1564 = vrot.slane %v1563, 1
    %v1565 = vmax.f32 %v1563, %v1564
    %v1566 = vsel %vm1467, %v860, -inf
    %v1567 = vrot.slane %v1566, 4
    %v1568 = vmax.f32 %v1566, %v1567
    %v1569 = vrot.slane %v1568, 2
    %v1570 = vmax.f32 %v1568, %v1569
    %v1571 = vrot.slane %v1570, 1
    %v1572 = vmax.f32 %v1570, %v1571
    %v1573 = vsel %vm1467, %v862, -inf
    %v1574 = vrot.slane %v1573, 4
    %v1575 = vmax.f32 %v1573, %v1574
    %v1576 = vrot.slane %v1575, 2
    %v1577 = vmax.f32 %v1575, %v1576
    %v1578 = vrot.slane %v1577, 1
    %v1579 = vmax.f32 %v1577, %v1578
    %v1580 = vsel %vm1467, %v870, -inf
    %v1581 = vrot.slane %v1580, 4
    %v1582 = vmax.f32 %v1580, %v1581
    %v1583 = vrot.slane %v1582, 2
    %v1584 = vmax.f32 %v1582, %v1583
    %v1585 = vrot.slane %v1584, 1
    %v1586 = vmax.f32 %v1584, %v1585
    %v1587 = vsel %vm1467, %v878, -inf
    %v1588 = vrot.slane %v1587, 4
    %v1589 = vmax.f32 %v1587, %v1588
    %v1590 = vrot.slane %v1589, 2
    %v1591 = vmax.f32 %v1589, %v1590
    %v1592 = vrot.slane %v1591, 1
    %v1593 = vmax.f32 %v1591, %v1592
    %v1594 = vsel %vm1467, %v877, -inf
    %v1595 = vrot.slane %v1594, 4
    %v1596 = vmax.f32 %v1594, %v1595
    %v1597 = vrot.slane %v1596, 2
    %v1598 = vmax.f32 %v1596, %v1597
    %v1599 = vrot.slane %v1598, 1
    %v1600 = vmax.f32 %v1598, %v1599
    %v1601 = vsel %vm1467, %v879, -inf
    %v1602 = vrot.slane %v1601, 4
    %v1603 = vmax.f32 %v1601, %v1602
    %v1604 = vrot.slane %v1603, 2
    %v1605 = vmax.f32 %v1603, %v1604
    %v1606 = vrot.slane %v1605, 1
    %v1607 = vmax.f32 %v1605, %v1606
    %v1608 = vsel %vm1467, %v887, -inf
    %v1609 = vrot.slane %v1608, 4
    %v1610 = vmax.f32 %v1608, %v1609
    %v1611 = vrot.slane %v1610, 2
    %v1612 = vmax.f32 %v1610, %v1611
    %v1613 = vrot.slane %v1612, 1
    %v1614 = vmax.f32 %v1612, %v1613
    %v1615 = vsel %vm1467, %v895, -inf
    %v1616 = vrot.slane %v1615, 4
    %v1617 = vmax.f32 %v1615, %v1616
    %v1618 = vrot.slane %v1617, 2
    %v1619 = vmax.f32 %v1617, %v1618
    %v1620 = vrot.slane %v1619, 1
    %v1621 = vmax.f32 %v1619, %v1620
    %v1622 = vsel %vm1467, %v894, -inf
    %v1623 = vrot.slane %v1622, 4
    %v1624 = vmax.f32 %v1622, %v1623
    %v1625 = vrot.slane %v1624, 2
    %v1626 = vmax.f32 %v1624, %v1625
    %v1627 = vrot.slane %v1626, 1
    %v1628 = vmax.f32 %v1626, %v1627
    %v1629 = vsel %vm1467, %v896, -inf
    %v1630 = vrot.slane %v1629, 4
    %v1631 = vmax.f32 %v1629, %v1630
    %v1632 = vrot.slane %v1631, 2
    %v1633 = vmax.f32 %v1631, %v1632
    %v1634 = vrot.slane %v1633, 1
    %v1635 = vmax.f32 %v1633, %v1634
    %v1636 = vsel %vm1467, %v904, -inf
    %v1637 = vrot.slane %v1636, 4
    %v1638 = vmax.f32 %v1636, %v1637
    %v1639 = vrot.slane %v1638, 2
    %v1640 = vmax.f32 %v1638, %v1639
    %v1641 = vrot.slane %v1640, 1
    %v1642 = vmax.f32 %v1640, %v1641
    %v1643 = vsel %vm1467, %v912, -inf
    %v1644 = vrot.slane %v1643, 4
    %v1645 = vmax.f32 %v1643, %v1644
    %v1646 = vrot.slane %v1645, 2
    %v1647 = vmax.f32 %v1645, %v1646
    %v1648 = vrot.slane %v1647, 1
    %v1649 = vmax.f32 %v1647, %v1648
    %v1650 = vsel %vm1467, %v911, -inf
    %v1651 = vrot.slane %v1650, 4
    %v1652 = vmax.f32 %v1650, %v1651
    %v1653 = vrot.slane %v1652, 2
    %v1654 = vmax.f32 %v1652, %v1653
    %v1655 = vrot.slane %v1654, 1
    %v1656 = vmax.f32 %v1654, %v1655
    %v1657 = vsel %vm1467, %v913, -inf
    %v1658 = vrot.slane %v1657, 4
    %v1659 = vmax.f32 %v1657, %v1658
    %v1660 = vrot.slane %v1659, 2
    %v1661 = vmax.f32 %v1659, %v1660
    %v1662 = vrot.slane %v1661, 1
    %v1663 = vmax.f32 %v1661, %v1662
    %v1664 = vsel %vm1467, %v921, -inf
    %v1665 = vrot.slane %v1664, 4
    %v1666 = vmax.f32 %v1664, %v1665
    %v1667 = vrot.slane %v1666, 2
    %v1668 = vmax.f32 %v1666, %v1667
    %v1669 = vrot.slane %v1668, 1
    %v1670 = vmax.f32 %v1668, %v1669
    %v1671 = vsel %vm1467, %v929, -inf
    %v1672 = vrot.slane %v1671, 4
    %v1673 = vmax.f32 %v1671, %v1672
    %v1674 = vrot.slane %v1673, 2
    %v1675 = vmax.f32 %v1673, %v1674
    %v1676 = vrot.slane %v1675, 1
    %v1677 = vmax.f32 %v1675, %v1676
    %v1678 = vsel %vm1467, %v928, -inf
    %v1679 = vrot.slane %v1678, 4
    %v1680 = vmax.f32 %v1678, %v1679
    %v1681 = vrot.slane %v1680, 2
    %v1682 = vmax.f32 %v1680, %v1681
    %v1683 = vrot.slane %v1682, 1
    %v1684 = vmax.f32 %v1682, %v1683
    %v1685 = vsel %vm1467, %v930, -inf
    %v1686 = vrot.slane %v1685, 4
    %v1687 = vmax.f32 %v1685, %v1686
    %v1688 = vrot.slane %v1687, 2
    %v1689 = vmax.f32 %v1687, %v1688
    %v1690 = vrot.slane %v1689, 1
    %v1691 = vmax.f32 %v1689, %v1690
    %v1692 = vsel %vm1467, %v938, -inf
    %v1693 = vrot.slane %v1692, 4
    %v1694 = vmax.f32 %v1692, %v1693
    %v1695 = vrot.slane %v1694, 2
    %v1696 = vmax.f32 %v1694, %v1695
    %v1697 = vrot.slane %v1696, 1
    %v1698 = vmax.f32 %v1696, %v1697
    %v1699 = vsel %vm1467, %v946, -inf
    %v1700 = vrot.slane %v1699, 4
    %v1701 = vmax.f32 %v1699, %v1700
    %v1702 = vrot.slane %v1701, 2
    %v1703 = vmax.f32 %v1701, %v1702
    %v1704 = vrot.slane %v1703, 1
    %v1705 = vmax.f32 %v1703, %v1704
    %v1706 = vsel %vm1467, %v945, -inf
    %v1707 = vrot.slane %v1706, 4
    %v1708 = vmax.f32 %v1706, %v1707
    %v1709 = vrot.slane %v1708, 2
    %v1710 = vmax.f32 %v1708, %v1709
    %v1711 = vrot.slane %v1710, 1
    %v1712 = vmax.f32 %v1710, %v1711
    %v1713 = vsel %vm1467, %v947, -inf
    %v1714 = vrot.slane %v1713, 4
    %v1715 = vmax.f32 %v1713, %v1714
    %v1716 = vrot.slane %v1715, 2
    %v1717 = vmax.f32 %v1715, %v1716
    %v1718 = vrot.slane %v1717, 1
    %v1719 = vmax.f32 %v1717, %v1718
    %v1720 = vsel %vm1467, %v955, -inf
    %v1721 = vrot.slane %v1720, 4
    %v1722 = vmax.f32 %v1720, %v1721
    %v1723 = vrot.slane %v1722, 2
    %v1724 = vmax.f32 %v1722, %v1723
    %v1725 = vrot.slane %v1724, 1
    %v1726 = vmax.f32 %v1724, %v1725
    %v1727 = vsel %vm1467, %v963, -inf
    %v1728 = vrot.slane %v1727, 4
    %v1729 = vmax.f32 %v1727, %v1728
    %v1730 = vrot.slane %v1729, 2
    %v1731 = vmax.f32 %v1729, %v1730
    %v1732 = vrot.slane %v1731, 1
    %v1733 = vmax.f32 %v1731, %v1732
    %v1734 = vsel %vm1467, %v962, -inf
    %v1735 = vrot.slane %v1734, 4
    %v1736 = vmax.f32 %v1734, %v1735
    %v1737 = vrot.slane %v1736, 2
    %v1738 = vmax.f32 %v1736, %v1737
    %v1739 = vrot.slane %v1738, 1
    %v1740 = vmax.f32 %v1738, %v1739
    %v1741 = vsel %vm1467, %v964, -inf
    %v1742 = vrot.slane %v1741, 4
    %v1743 = vmax.f32 %v1741, %v1742
    %v1744 = vrot.slane %v1743, 2
    %v1745 = vmax.f32 %v1743, %v1744
    %v1746 = vrot.slane %v1745, 1
    %v1747 = vmax.f32 %v1745, %v1746
    %v1748 = vsel %vm1467, %v972, -inf
    %v1749 = vrot.slane %v1748, 4
    %v1750 = vmax.f32 %v1748, %v1749
    %v1751 = vrot.slane %v1750, 2
    %v1752 = vmax.f32 %v1750, %v1751
    %v1753 = vrot.slane %v1752, 1
    %v1754 = vmax.f32 %v1752, %v1753
    %v1755 = vsel %vm1467, %v980, -inf
    %v1756 = vrot.slane %v1755, 4
    %v1757 = vmax.f32 %v1755, %v1756
    %v1758 = vrot.slane %v1757, 2
    %v1759 = vmax.f32 %v1757, %v1758
    %v1760 = vrot.slane %v1759, 1
    %v1761 = vmax.f32 %v1759, %v1760
    %v1762 = vsel %vm1467, %v979, -inf
    %v1763 = vrot.slane %v1762, 4
    %v1764 = vmax.f32 %v1762, %v1763
    %v1765 = vrot.slane %v1764, 2
    %v1766 = vmax.f32 %v1764, %v1765
    %v1767 = vrot.slane %v1766, 1
    %v1768 = vmax.f32 %v1766, %v1767
    %v1769 = vsel %vm1467, %v981, -inf
    %v1770 = vrot.slane %v1769, 4
    %v1771 = vmax.f32 %v1769, %v1770
    %v1772 = vrot.slane %v1771, 2
    %v1773 = vmax.f32 %v1771, %v1772
    %v1774 = vrot.slane %v1773, 1
    %v1775 = vmax.f32 %v1773, %v1774
    %v1776 = vsel %vm1467, %v989, -inf
    %v1777 = vrot.slane %v1776, 4
    %v1778 = vmax.f32 %v1776, %v1777
    %v1779 = vrot.slane %v1778, 2
    %v1780 = vmax.f32 %v1778, %v1779
    %v1781 = vrot.slane %v1780, 1
    %v1782 = vmax.f32 %v1780, %v1781
    %v1783 = vsel %vm1467, %v997, -inf
    %v1784 = vrot.slane %v1783, 4
    %v1785 = vmax.f32 %v1783, %v1784
    %v1786 = vrot.slane %v1785, 2
    %v1787 = vmax.f32 %v1785, %v1786
    %v1788 = vrot.slane %v1787, 1
    %v1789 = vmax.f32 %v1787, %v1788
    %v1790 = vsel %vm1467, %v996, -inf
    %v1791 = vrot.slane %v1790, 4
    %v1792 = vmax.f32 %v1790, %v1791
    %v1793 = vrot.slane %v1792, 2
    %v1794 = vmax.f32 %v1792, %v1793
    %v1795 = vrot.slane %v1794, 1
    %v1796 = vmax.f32 %v1794, %v1795
    %v1797 = vsel %vm1467, %v998, -inf
    %v1798 = vrot.slane %v1797, 4
    %v1799 = vmax.f32 %v1797, %v1798
    %v1800 = vrot.slane %v1799, 2
    %v1801 = vmax.f32 %v1799, %v1800
    %v1802 = vrot.slane %v1801, 1
    %v1803 = vmax.f32 %v1801, %v1802
    %v1804 = vsel %vm1467, %v1006, -inf
    %v1805 = vrot.slane %v1804, 4
    %v1806 = vmax.f32 %v1804, %v1805
    %v1807 = vrot.slane %v1806, 2
    %v1808 = vmax.f32 %v1806, %v1807
    %v1809 = vrot.slane %v1808, 1
    %v1810 = vmax.f32 %v1808, %v1809
    %v1811 = vsel %vm1467, %v1014, -inf
    %v1812 = vrot.slane %v1811, 4
    %v1813 = vmax.f32 %v1811, %v1812
    %v1814 = vrot.slane %v1813, 2
    %v1815 = vmax.f32 %v1813, %v1814
    %v1816 = vrot.slane %v1815, 1
    %v1817 = vmax.f32 %v1815, %v1816
    %v1818 = vsel %vm1467, %v1013, -inf
    %v1819 = vrot.slane %v1818, 4
    %v1820 = vmax.f32 %v1818, %v1819
    %v1821 = vrot.slane %v1820, 2
    %v1822 = vmax.f32 %v1820, %v1821
    %v1823 = vrot.slane %v1822, 1
    %v1824 = vmax.f32 %v1822, %v1823
    %v1825 = vsel %vm1467, %v1015, -inf
    %v1826 = vrot.slane %v1825, 4
    %v1827 = vmax.f32 %v1825, %v1826
    %v1828 = vrot.slane %v1827, 2
    %v1829 = vmax.f32 %v1827, %v1828
    %v1830 = vrot.slane %v1829, 1
    %v1831 = vmax.f32 %v1829, %v1830
    %v1832 = vsel %vm1467, %v1023, -inf
    %v1833 = vrot.slane %v1832, 4
    %v1834 = vmax.f32 %v1832, %v1833
    %v1835 = vrot.slane %v1834, 2
    %v1836 = vmax.f32 %v1834, %v1835
    %v1837 = vrot.slane %v1836, 1
    %v1838 = vmax.f32 %v1836, %v1837
    %v1839 = vsel %vm1467, %v1031, -inf
    %v1840 = vrot.slane %v1839, 4
    %v1841 = vmax.f32 %v1839, %v1840
    %v1842 = vrot.slane %v1841, 2
    %v1843 = vmax.f32 %v1841, %v1842
    %v1844 = vrot.slane %v1843, 1
    %v1845 = vmax.f32 %v1843, %v1844
    %v1846 = vsel %vm1467, %v1030, -inf
    %v1847 = vrot.slane %v1846, 4
    %v1848 = vmax.f32 %v1846, %v1847
    %v1849 = vrot.slane %v1848, 2
    %v1850 = vmax.f32 %v1848, %v1849
    %v1851 = vrot.slane %v1850, 1
    %v1852 = vmax.f32 %v1850, %v1851
    %v1853 = vsel %vm1467, %v1032, -inf
    %v1854 = vrot.slane %v1853, 4
    %v1855 = vmax.f32 %v1853, %v1854
    %v1856 = vrot.slane %v1855, 2
    %v1857 = vmax.f32 %v1855, %v1856
    %v1858 = vrot.slane %v1857, 1
    %v1859 = vmax.f32 %v1857, %v1858
    %v1860 = vsel %vm1467, %v1040, -inf
    %v1861 = vrot.slane %v1860, 4
    %v1862 = vmax.f32 %v1860, %v1861
    %v1863 = vrot.slane %v1862, 2
    %v1864 = vmax.f32 %v1862, %v1863
    %v1865 = vrot.slane %v1864, 1
    %v1866 = vmax.f32 %v1864, %v1865
    %v1867 = vsel %vm1467, %v1048, -inf
    %v1868 = vrot.slane %v1867, 4
    %v1869 = vmax.f32 %v1867, %v1868
    %v1870 = vrot.slane %v1869, 2
    %v1871 = vmax.f32 %v1869, %v1870
    %v1872 = vrot.slane %v1871, 1
    %v1873 = vmax.f32 %v1871, %v1872
    %v1874 = vsel %vm1467, %v1047, -inf
    %v1875 = vrot.slane %v1874, 4
    %v1876 = vmax.f32 %v1874, %v1875
    %v1877 = vrot.slane %v1876, 2
    %v1878 = vmax.f32 %v1876, %v1877
    %v1879 = vrot.slane %v1878, 1
    %v1880 = vmax.f32 %v1878, %v1879
    %v1881 = vsel %vm1467, %v1049, -inf
    %v1882 = vrot.slane %v1881, 4
    %v1883 = vmax.f32 %v1881, %v1882
    %v1884 = vrot.slane %v1883, 2
    %v1885 = vmax.f32 %v1883, %v1884
    %v1886 = vrot.slane %v1885, 1
    %v1887 = vmax.f32 %v1885, %v1886
    %v1888 = vsel %vm1467, %v1057, -inf
    %v1889 = vrot.slane %v1888, 4
    %v1890 = vmax.f32 %v1888, %v1889
    %v1891 = vrot.slane %v1890, 2
    %v1892 = vmax.f32 %v1890, %v1891
    %v1893 = vrot.slane %v1892, 1
    %v1894 = vmax.f32 %v1892, %v1893
    %v1895 = vsel %vm1467, %v1065, -inf
    %v1896 = vrot.slane %v1895, 4
    %v1897 = vmax.f32 %v1895, %v1896
    %v1898 = vrot.slane %v1897, 2
    %v1899 = vmax.f32 %v1897, %v1898
    %v1900 = vrot.slane %v1899, 1
    %v1901 = vmax.f32 %v1899, %v1900
    %v1902 = vsel %vm1467, %v1064, -inf
    %v1903 = vrot.slane %v1902, 4
    %v1904 = vmax.f32 %v1902, %v1903
    %v1905 = vrot.slane %v1904, 2
    %v1906 = vmax.f32 %v1904, %v1905
    %v1907 = vrot.slane %v1906, 1
    %v1908 = vmax.f32 %v1906, %v1907
    %v1909 = vsel %vm1467, %v1066, -inf
    %v1910 = vrot.slane %v1909, 4
    %v1911 = vmax.f32 %v1909, %v1910
    %v1912 = vrot.slane %v1911, 2
    %v1913 = vmax.f32 %v1911, %v1912
    %v1914 = vrot.slane %v1913, 1
    %v1915 = vmax.f32 %v1913, %v1914
    %v1916 = vsel %vm1467, %v1074, -inf
    %v1917 = vrot.slane %v1916, 4
    %v1918 = vmax.f32 %v1916, %v1917
    %v1919 = vrot.slane %v1918, 2
    %v1920 = vmax.f32 %v1918, %v1919
    %v1921 = vrot.slane %v1920, 1
    %v1922 = vmax.f32 %v1920, %v1921
    %v1923 = vsel %vm1467, %v1082, -inf
    %v1924 = vrot.slane %v1923, 4
    %v1925 = vmax.f32 %v1923, %v1924
    %v1926 = vrot.slane %v1925, 2
    %v1927 = vmax.f32 %v1925, %v1926
    %v1928 = vrot.slane %v1927, 1
    %v1929 = vmax.f32 %v1927, %v1928
    %v1930 = vsel %vm1467, %v1081, -inf
    %v1931 = vrot.slane %v1930, 4
    %v1932 = vmax.f32 %v1930, %v1931
    %v1933 = vrot.slane %v1932, 2
    %v1934 = vmax.f32 %v1932, %v1933
    %v1935 = vrot.slane %v1934, 1
    %v1936 = vmax.f32 %v1934, %v1935
    %v1937 = vsel %vm1467, %v1083, -inf
    %v1938 = vrot.slane %v1937, 4
    %v1939 = vmax.f32 %v1937, %v1938
    %v1940 = vrot.slane %v1939, 2
    %v1941 = vmax.f32 %v1939, %v1940
    %v1942 = vrot.slane %v1941, 1
    %v1943 = vmax.f32 %v1941, %v1942
    %v1944 = vsel %vm1467, %v1091, -inf
    %v1945 = vrot.slane %v1944, 4
    %v1946 = vmax.f32 %v1944, %v1945
    %v1947 = vrot.slane %v1946, 2
    %v1948 = vmax.f32 %v1946, %v1947
    %v1949 = vrot.slane %v1948, 1
    %v1950 = vmax.f32 %v1948, %v1949
    %v1951 = vsel %vm1467, %v1099, -inf
    %v1952 = vrot.slane %v1951, 4
    %v1953 = vmax.f32 %v1951, %v1952
    %v1954 = vrot.slane %v1953, 2
    %v1955 = vmax.f32 %v1953, %v1954
    %v1956 = vrot.slane %v1955, 1
    %v1957 = vmax.f32 %v1955, %v1956
    %v1958 = vsel %vm1467, %v1098, -inf
    %v1959 = vrot.slane %v1958, 4
    %v1960 = vmax.f32 %v1958, %v1959
    %v1961 = vrot.slane %v1960, 2
    %v1962 = vmax.f32 %v1960, %v1961
    %v1963 = vrot.slane %v1962, 1
    %v1964 = vmax.f32 %v1962, %v1963
    %v1965 = vsel %vm1467, %v1100, -inf
    %v1966 = vrot.slane %v1965, 4
    %v1967 = vmax.f32 %v1965, %v1966
    %v1968 = vrot.slane %v1967, 2
    %v1969 = vmax.f32 %v1967, %v1968
    %v1970 = vrot.slane %v1969, 1
    %v1971 = vmax.f32 %v1969, %v1970
    %v1972 = vsel %vm1467, %v1108, -inf
    %v1973 = vrot.slane %v1972, 4
    %v1974 = vmax.f32 %v1972, %v1973
    %v1975 = vrot.slane %v1974, 2
    %v1976 = vmax.f32 %v1974, %v1975
    %v1977 = vrot.slane %v1976, 1
    %v1978 = vmax.f32 %v1976, %v1977
    %v1979 = vsel %vm1467, %v1116, -inf
    %v1980 = vrot.slane %v1979, 4
    %v1981 = vmax.f32 %v1979, %v1980
    %v1982 = vrot.slane %v1981, 2
    %v1983 = vmax.f32 %v1981, %v1982
    %v1984 = vrot.slane %v1983, 1
    %v1985 = vmax.f32 %v1983, %v1984
    %v1986 = vsel %vm1467, %v1115, -inf
    %v1987 = vrot.slane %v1986, 4
    %v1988 = vmax.f32 %v1986, %v1987
    %v1989 = vrot.slane %v1988, 2
    %v1990 = vmax.f32 %v1988, %v1989
    %v1991 = vrot.slane %v1990, 1
    %v1992 = vmax.f32 %v1990, %v1991
    %v1993 = vsel %vm1467, %v1117, -inf
    %v1994 = vrot.slane %v1993, 4
    %v1995 = vmax.f32 %v1993, %v1994
    %v1996 = vrot.slane %v1995, 2
    %v1997 = vmax.f32 %v1995, %v1996
    %v1998 = vrot.slane %v1997, 1
    %v1999 = vmax.f32 %v1997, %v1998
    %v2000 = vsel %vm1467, %v1125, -inf
    %v2001 = vrot.slane %v2000, 4
    %v2002 = vmax.f32 %v2000, %v2001
    %v2003 = vrot.slane %v2002, 2
    %v2004 = vmax.f32 %v2002, %v2003
    %v2005 = vrot.slane %v2004, 1
    %v2006 = vmax.f32 %v2004, %v2005
    %v2007 = vsel %vm1467, %v1133, -inf
    %v2008 = vrot.slane %v2007, 4
    %v2009 = vmax.f32 %v2007, %v2008
    %v2010 = vrot.slane %v2009, 2
    %v2011 = vmax.f32 %v2009, %v2010
    %v2012 = vrot.slane %v2011, 1
    %v2013 = vmax.f32 %v2011, %v2012
    %v2014 = vsel %vm1467, %v1132, -inf
    %v2015 = vrot.slane %v2014, 4
    %v2016 = vmax.f32 %v2014, %v2015
    %v2017 = vrot.slane %v2016, 2
    %v2018 = vmax.f32 %v2016, %v2017
    %v2019 = vrot.slane %v2018, 1
    %v2020 = vmax.f32 %v2018, %v2019
    %v2021 = vsel %vm1467, %v1134, -inf
    %v2022 = vrot.slane %v2021, 4
    %v2023 = vmax.f32 %v2021, %v2022
    %v2024 = vrot.slane %v2023, 2
    %v2025 = vmax.f32 %v2023, %v2024
    %v2026 = vrot.slane %v2025, 1
    %v2027 = vmax.f32 %v2025, %v2026
    %v2028 = vsel %vm1467, %v1142, -inf
    %v2029 = vrot.slane %v2028, 4
    %v2030 = vmax.f32 %v2028, %v2029
    %v2031 = vrot.slane %v2030, 2
    %v2032 = vmax.f32 %v2030, %v2031
    %v2033 = vrot.slane %v2032, 1
    %v2034 = vmax.f32 %v2032, %v2033
    %v2035 = vsel %vm1467, %v1150, -inf
    %v2036 = vrot.slane %v2035, 4
    %v2037 = vmax.f32 %v2035, %v2036
    %v2038 = vrot.slane %v2037, 2
    %v2039 = vmax.f32 %v2037, %v2038
    %v2040 = vrot.slane %v2039, 1
    %v2041 = vmax.f32 %v2039, %v2040
    %v2042 = vsel %vm1467, %v1149, -inf
    %v2043 = vrot.slane %v2042, 4
    %v2044 = vmax.f32 %v2042, %v2043
    %v2045 = vrot.slane %v2044, 2
    %v2046 = vmax.f32 %v2044, %v2045
    %v2047 = vrot.slane %v2046, 1
    %v2048 = vmax.f32 %v2046, %v2047
    %v2049 = vsel %vm1467, %v1151, -inf
    %v2050 = vrot.slane %v2049, 4
    %v2051 = vmax.f32 %v2049, %v2050
    %v2052 = vrot.slane %v2051, 2
    %v2053 = vmax.f32 %v2051, %v2052
    %v2054 = vrot.slane %v2053, 1
    %v2055 = vmax.f32 %v2053, %v2054
    %v2056 = vsel %vm1467, %v1159, -inf
    %v2057 = vrot.slane %v2056, 4
    %v2058 = vmax.f32 %v2056, %v2057
    %v2059 = vrot.slane %v2058, 2
    %v2060 = vmax.f32 %v2058, %v2059
    %v2061 = vrot.slane %v2060, 1
    %v2062 = vmax.f32 %v2060, %v2061
    %v2063 = vsel %vm1467, %v1167, -inf
    %v2064 = vrot.slane %v2063, 4
    %v2065 = vmax.f32 %v2063, %v2064
    %v2066 = vrot.slane %v2065, 2
    %v2067 = vmax.f32 %v2065, %v2066
    %v2068 = vrot.slane %v2067, 1
    %v2069 = vmax.f32 %v2067, %v2068
    %v2070 = vsel %vm1467, %v1166, -inf
    %v2071 = vrot.slane %v2070, 4
    %v2072 = vmax.f32 %v2070, %v2071
    %v2073 = vrot.slane %v2072, 2
    %v2074 = vmax.f32 %v2072, %v2073
    %v2075 = vrot.slane %v2074, 1
    %v2076 = vmax.f32 %v2074, %v2075
    %v2077 = vsel %vm1467, %v1168, -inf
    %v2078 = vrot.slane %v2077, 4
    %v2079 = vmax.f32 %v2077, %v2078
    %v2080 = vrot.slane %v2079, 2
    %v2081 = vmax.f32 %v2079, %v2080
    %v2082 = vrot.slane %v2081, 1
    %v2083 = vmax.f32 %v2081, %v2082
    %v2084 = vsel %vm1467, %v1176, -inf
    %v2085 = vrot.slane %v2084, 4
    %v2086 = vmax.f32 %v2084, %v2085
    %v2087 = vrot.slane %v2086, 2
    %v2088 = vmax.f32 %v2086, %v2087
    %v2089 = vrot.slane %v2088, 1
    %v2090 = vmax.f32 %v2088, %v2089
    %v2091 = vsel %vm1467, %v1184, -inf
    %v2092 = vrot.slane %v2091, 4
    %v2093 = vmax.f32 %v2091, %v2092
    %v2094 = vrot.slane %v2093, 2
    %v2095 = vmax.f32 %v2093, %v2094
    %v2096 = vrot.slane %v2095, 1
    %v2097 = vmax.f32 %v2095, %v2096
    %v2098 = vsel %vm1467, %v1183, -inf
    %v2099 = vrot.slane %v2098, 4
    %v2100 = vmax.f32 %v2098, %v2099
    %v2101 = vrot.slane %v2100, 2
    %v2102 = vmax.f32 %v2100, %v2101
    %v2103 = vrot.slane %v2102, 1
    %v2104 = vmax.f32 %v2102, %v2103
    %v2105 = vsel %vm1467, %v1185, -inf
    %v2106 = vrot.slane %v2105, 4
    %v2107 = vmax.f32 %v2105, %v2106
    %v2108 = vrot.slane %v2107, 2
    %v2109 = vmax.f32 %v2107, %v2108
    %v2110 = vrot.slane %v2109, 1
    %v2111 = vmax.f32 %v2109, %v2110
    %v2112 = vsel %vm1467, %v1193, -inf
    %v2113 = vrot.slane %v2112, 4
    %v2114 = vmax.f32 %v2112, %v2113
    %v2115 = vrot.slane %v2114, 2
    %v2116 = vmax.f32 %v2114, %v2115
    %v2117 = vrot.slane %v2116, 1
    %v2118 = vmax.f32 %v2116, %v2117
    %v2119 = vsel %vm1467, %v1201, -inf
    %v2120 = vrot.slane %v2119, 4
    %v2121 = vmax.f32 %v2119, %v2120
    %v2122 = vrot.slane %v2121, 2
    %v2123 = vmax.f32 %v2121, %v2122
    %v2124 = vrot.slane %v2123, 1
    %v2125 = vmax.f32 %v2123, %v2124
    %v2126 = vsel %vm1467, %v1200, -inf
    %v2127 = vrot.slane %v2126, 4
    %v2128 = vmax.f32 %v2126, %v2127
    %v2129 = vrot.slane %v2128, 2
    %v2130 = vmax.f32 %v2128, %v2129
    %v2131 = vrot.slane %v2130, 1
    %v2132 = vmax.f32 %v2130, %v2131
    %v2133 = vsel %vm1467, %v1202, -inf
    %v2134 = vrot.slane %v2133, 4
    %v2135 = vmax.f32 %v2133, %v2134
    %v2136 = vrot.slane %v2135, 2
    %v2137 = vmax.f32 %v2135, %v2136
    %v2138 = vrot.slane %v2137, 1
    %v2139 = vmax.f32 %v2137, %v2138
    %v2140 = vsel %vm1467, %v1210, -inf
    %v2141 = vrot.slane %v2140, 4
    %v2142 = vmax.f32 %v2140, %v2141
    %v2143 = vrot.slane %v2142, 2
    %v2144 = vmax.f32 %v2142, %v2143
    %v2145 = vrot.slane %v2144, 1
    %v2146 = vmax.f32 %v2144, %v2145
    %v2147 = vsel %vm1467, %v1218, -inf
    %v2148 = vrot.slane %v2147, 4
    %v2149 = vmax.f32 %v2147, %v2148
    %v2150 = vrot.slane %v2149, 2
    %v2151 = vmax.f32 %v2149, %v2150
    %v2152 = vrot.slane %v2151, 1
    %v2153 = vmax.f32 %v2151, %v2152
    %v2154 = vsel %vm1467, %v1217, -inf
    %v2155 = vrot.slane %v2154, 4
    %v2156 = vmax.f32 %v2154, %v2155
    %v2157 = vrot.slane %v2156, 2
    %v2158 = vmax.f32 %v2156, %v2157
    %v2159 = vrot.slane %v2158, 1
    %v2160 = vmax.f32 %v2158, %v2159
    %v2161 = vsel %vm1467, %v1219, -inf
    %v2162 = vrot.slane %v2161, 4
    %v2163 = vmax.f32 %v2161, %v2162
    %v2164 = vrot.slane %v2163, 2
    %v2165 = vmax.f32 %v2163, %v2164
    %v2166 = vrot.slane %v2165, 1
    %v2167 = vmax.f32 %v2165, %v2166
    %v2168 = vsel %vm1467, %v1227, -inf
    %v2169 = vrot.slane %v2168, 4
    %v2170 = vmax.f32 %v2168, %v2169
    %v2171 = vrot.slane %v2170, 2
    %v2172 = vmax.f32 %v2170, %v2171
    %v2173 = vrot.slane %v2172, 1
    %v2174 = vmax.f32 %v2172, %v2173
    %v2175 = vsel %vm1467, %v1235, -inf
    %v2176 = vrot.slane %v2175, 4
    %v2177 = vmax.f32 %v2175, %v2176
    %v2178 = vrot.slane %v2177, 2
    %v2179 = vmax.f32 %v2177, %v2178
    %v2180 = vrot.slane %v2179, 1
    %v2181 = vmax.f32 %v2179, %v2180
    %v2182 = vsel %vm1467, %v1234, -inf
    %v2183 = vrot.slane %v2182, 4
    %v2184 = vmax.f32 %v2182, %v2183
    %v2185 = vrot.slane %v2184, 2
    %v2186 = vmax.f32 %v2184, %v2185
    %v2187 = vrot.slane %v2186, 1
    %v2188 = vmax.f32 %v2186, %v2187
    %v2189 = vsel %vm1467, %v1236, -inf
    %v2190 = vrot.slane %v2189, 4
    %v2191 = vmax.f32 %v2189, %v2190
    %v2192 = vrot.slane %v2191, 2
    %v2193 = vmax.f32 %v2191, %v2192
    %v2194 = vrot.slane %v2193, 1
    %v2195 = vmax.f32 %v2193, %v2194
    %v2196 = vsel %vm1467, %v1244, -inf
    %v2197 = vrot.slane %v2196, 4
    %v2198 = vmax.f32 %v2196, %v2197
    %v2199 = vrot.slane %v2198, 2
    %v2200 = vmax.f32 %v2198, %v2199
    %v2201 = vrot.slane %v2200, 1
    %v2202 = vmax.f32 %v2200, %v2201
    %v2203 = vsel %vm1467, %v1252, -inf
    %v2204 = vrot.slane %v2203, 4
    %v2205 = vmax.f32 %v2203, %v2204
    %v2206 = vrot.slane %v2205, 2
    %v2207 = vmax.f32 %v2205, %v2206
    %v2208 = vrot.slane %v2207, 1
    %v2209 = vmax.f32 %v2207, %v2208
    %v2210 = vsel %vm1467, %v1251, -inf
    %v2211 = vrot.slane %v2210, 4
    %v2212 = vmax.f32 %v2210, %v2211
    %v2213 = vrot.slane %v2212, 2
    %v2214 = vmax.f32 %v2212, %v2213
    %v2215 = vrot.slane %v2214, 1
    %v2216 = vmax.f32 %v2214, %v2215
    %v2217 = vsel %vm1467, %v1253, -inf
    %v2218 = vrot.slane %v2217, 4
    %v2219 = vmax.f32 %v2217, %v2218
    %v2220 = vrot.slane %v2219, 2
    %v2221 = vmax.f32 %v2219, %v2220
    %v2222 = vrot.slane %v2221, 1
    %v2223 = vmax.f32 %v2221, %v2222
    %v2224 = vsel %vm1467, %v1261, -inf
    %v2225 = vrot.slane %v2224, 4
    %v2226 = vmax.f32 %v2224, %v2225
    %v2227 = vrot.slane %v2226, 2
    %v2228 = vmax.f32 %v2226, %v2227
    %v2229 = vrot.slane %v2228, 1
    %v2230 = vmax.f32 %v2228, %v2229
    %v2231 = vsel %vm1467, %v1269, -inf
    %v2232 = vrot.slane %v2231, 4
    %v2233 = vmax.f32 %v2231, %v2232
    %v2234 = vrot.slane %v2233, 2
    %v2235 = vmax.f32 %v2233, %v2234
    %v2236 = vrot.slane %v2235, 1
    %v2237 = vmax.f32 %v2235, %v2236
    %v2238 = vsel %vm1467, %v1268, -inf
    %v2239 = vrot.slane %v2238, 4
    %v2240 = vmax.f32 %v2238, %v2239
    %v2241 = vrot.slane %v2240, 2
    %v2242 = vmax.f32 %v2240, %v2241
    %v2243 = vrot.slane %v2242, 1
    %v2244 = vmax.f32 %v2242, %v2243
    %v2245 = vsel %vm1467, %v1270, -inf
    %v2246 = vrot.slane %v2245, 4
    %v2247 = vmax.f32 %v2245, %v2246
    %v2248 = vrot.slane %v2247, 2
    %v2249 = vmax.f32 %v2247, %v2248
    %v2250 = vrot.slane %v2249, 1
    %v2251 = vmax.f32 %v2249, %v2250
    %v2252 = vsel %vm1467, %v1278, -inf
    %v2253 = vrot.slane %v2252, 4
    %v2254 = vmax.f32 %v2252, %v2253
    %v2255 = vrot.slane %v2254, 2
    %v2256 = vmax.f32 %v2254, %v2255
    %v2257 = vrot.slane %v2256, 1
    %v2258 = vmax.f32 %v2256, %v2257
    %v2259 = vsel %vm1467, %v1286, -inf
    %v2260 = vrot.slane %v2259, 4
    %v2261 = vmax.f32 %v2259, %v2260
    %v2262 = vrot.slane %v2261, 2
    %v2263 = vmax.f32 %v2261, %v2262
    %v2264 = vrot.slane %v2263, 1
    %v2265 = vmax.f32 %v2263, %v2264
    %v2266 = vsel %vm1467, %v1285, -inf
    %v2267 = vrot.slane %v2266, 4
    %v2268 = vmax.f32 %v2266, %v2267
    %v2269 = vrot.slane %v2268, 2
    %v2270 = vmax.f32 %v2268, %v2269
    %v2271 = vrot.slane %v2270, 1
    %v2272 = vmax.f32 %v2270, %v2271
    %v2273 = vsel %vm1467, %v1287, -inf
    %v2274 = vrot.slane %v2273, 4
    %v2275 = vmax.f32 %v2273, %v2274
    %v2276 = vrot.slane %v2275, 2
    %v2277 = vmax.f32 %v2275, %v2276
    %v2278 = vrot.slane %v2277, 1
    %v2279 = vmax.f32 %v2277, %v2278
    %v2280 = vsel %vm1467, %v1295, -inf
    %v2281 = vrot.slane %v2280, 4
    %v2282 = vmax.f32 %v2280, %v2281
    %v2283 = vrot.slane %v2282, 2
    %v2284 = vmax.f32 %v2282, %v2283
    %v2285 = vrot.slane %v2284, 1
    %v2286 = vmax.f32 %v2284, %v2285
    %v2287 = vsel %vm1467, %v1303, -inf
    %v2288 = vrot.slane %v2287, 4
    %v2289 = vmax.f32 %v2287, %v2288
    %v2290 = vrot.slane %v2289, 2
    %v2291 = vmax.f32 %v2289, %v2290
    %v2292 = vrot.slane %v2291, 1
    %v2293 = vmax.f32 %v2291, %v2292
    %v2294 = vsel %vm1467, %v1302, -inf
    %v2295 = vrot.slane %v2294, 4
    %v2296 = vmax.f32 %v2294, %v2295
    %v2297 = vrot.slane %v2296, 2
    %v2298 = vmax.f32 %v2296, %v2297
    %v2299 = vrot.slane %v2298, 1
    %v2300 = vmax.f32 %v2298, %v2299
    %v2301 = vsel %vm1467, %v1304, -inf
    %v2302 = vrot.slane %v2301, 4
    %v2303 = vmax.f32 %v2301, %v2302
    %v2304 = vrot.slane %v2303, 2
    %v2305 = vmax.f32 %v2303, %v2304
    %v2306 = vrot.slane %v2305, 1
    %v2307 = vmax.f32 %v2305, %v2306
    %v2308 = vsel %vm1467, %v1312, -inf
    %v2309 = vrot.slane %v2308, 4
    %v2310 = vmax.f32 %v2308, %v2309
    %v2311 = vrot.slane %v2310, 2
    %v2312 = vmax.f32 %v2310, %v2311
    %v2313 = vrot.slane %v2312, 1
    %v2314 = vmax.f32 %v2312, %v2313
    %v2315 = vsel %vm1467, %v1320, -inf
    %v2316 = vrot.slane %v2315, 4
    %v2317 = vmax.f32 %v2315, %v2316
    %v2318 = vrot.slane %v2317, 2
    %v2319 = vmax.f32 %v2317, %v2318
    %v2320 = vrot.slane %v2319, 1
    %v2321 = vmax.f32 %v2319, %v2320
    %v2322 = vsel %vm1467, %v1319, -inf
    %v2323 = vrot.slane %v2322, 4
    %v2324 = vmax.f32 %v2322, %v2323
    %v2325 = vrot.slane %v2324, 2
    %v2326 = vmax.f32 %v2324, %v2325
    %v2327 = vrot.slane %v2326, 1
    %v2328 = vmax.f32 %v2326, %v2327
    %v2329 = vsel %vm1467, %v1321, -inf
    %v2330 = vrot.slane %v2329, 4
    %v2331 = vmax.f32 %v2329, %v2330
    %v2332 = vrot.slane %v2331, 2
    %v2333 = vmax.f32 %v2331, %v2332
    %v2334 = vrot.slane %v2333, 1
    %v2335 = vmax.f32 %v2333, %v2334
    %v2336 = vsel %vm1467, %v1329, -inf
    %v2337 = vrot.slane %v2336, 4
    %v2338 = vmax.f32 %v2336, %v2337
    %v2339 = vrot.slane %v2338, 2
    %v2340 = vmax.f32 %v2338, %v2339
    %v2341 = vrot.slane %v2340, 1
    %v2342 = vmax.f32 %v2340, %v2341
    %v2343 = vsel %vm1467, %v1337, -inf
    %v2344 = vrot.slane %v2343, 4
    %v2345 = vmax.f32 %v2343, %v2344
    %v2346 = vrot.slane %v2345, 2
    %v2347 = vmax.f32 %v2345, %v2346
    %v2348 = vrot.slane %v2347, 1
    %v2349 = vmax.f32 %v2347, %v2348
    %v2350 = vsel %vm1467, %v1336, -inf
    %v2351 = vrot.slane %v2350, 4
    %v2352 = vmax.f32 %v2350, %v2351
    %v2353 = vrot.slane %v2352, 2
    %v2354 = vmax.f32 %v2352, %v2353
    %v2355 = vrot.slane %v2354, 1
    %v2356 = vmax.f32 %v2354, %v2355
    %v2357 = vsel %vm1467, %v1338, -inf
    %v2358 = vrot.slane %v2357, 4
    %v2359 = vmax.f32 %v2357, %v2358
    %v2360 = vrot.slane %v2359, 2
    %v2361 = vmax.f32 %v2359, %v2360
    %v2362 = vrot.slane %v2361, 1
    %v2363 = vmax.f32 %v2361, %v2362
    %vm2364 = vcmask 261120
    %2365 = vst.msk [vmem:[#allocation2] sm:$0xff] %vm2364, 0.0
    %2366 = vst.msk [vmem:[#allocation2 + $0x8] sm:$0x3] %vm1467, 0.0
    %2367 = vst.msk [vmem:[#allocation2 + $0xa0] sm:$0xff] %vm2364, 0.0
    %2368 = vst.msk [vmem:[#allocation2 + $0xa8] sm:$0x3] %vm1467, 0.0
    %s2369 = scalar_lea.vmem [#allocation2], 144
    %2370 = vst.msk [vmem:[%s2369] sm:$0xff] %vm2364, 0.0
    %2371 = vst.msk [vmem:[%s2369 + $0x8] sm:$0x3] %vm1467, 0.0
    %2372 = vst.msk [vmem:[%s2369 + $0xa0] sm:$0xff] %vm2364, 0.0
    %2373 = vst.msk [vmem:[%s2369 + $0xa8] sm:$0x3] %vm1467, 0.0
    %vm2374 = vcmask 253952
    %2375 = vst.msk [vmem:[#allocation2] sm:$0x1] %vm2374, 0.0
    %2376 = vst.msk [vmem:[#allocation2 + $0x10] sm:$0x1] %vm2374, 0.0
    %2377 = vst.msk [vmem:[#allocation2 + $0x20] sm:$0x1] %vm2374, 0.0
    %2378 = vst.msk [vmem:[#allocation2 + $0x30] sm:$0x1] %vm2374, 0.0
    %2379 = vst.msk [vmem:[#allocation2 + $0x40] sm:$0x1] %vm2374, 0.0
    %2380 = vst.msk [vmem:[#allocation2 + $0x50] sm:$0x1] %vm2374, 0.0
    %2381 = vst.msk [vmem:[#allocation2 + $0x60] sm:$0x1] %vm2374, 0.0
    %2382 = vst.msk [vmem:[#allocation2 + $0x70] sm:$0x1] %vm2374, 0.0
    %2383 = vst.msk [vmem:[#allocation2 + $0x80] sm:$0x1] %vm2374, 0.0
    %2384 = vst.msk [vmem:[#allocation2 + $0x90] sm:$0x1] %vm2374, 0.0
    %2385 = vst.msk [vmem:[#allocation2 + $0xa0] sm:$0x1] %vm2374, 0.0
    %2386 = vst.msk [vmem:[#allocation2 + $0xb0] sm:$0x1] %vm2374, 0.0
    %2387 = vst.msk [vmem:[#allocation2 + $0xc0] sm:$0x1] %vm2374, 0.0
    %2388 = vst.msk [vmem:[#allocation2 + $0xd0] sm:$0x1] %vm2374, 0.0
    %2389 = vst.msk [vmem:[#allocation2 + $0xe0] sm:$0x1] %vm2374, 0.0
    %2390 = vst.msk [vmem:[#allocation2 + $0xf0] sm:$0x1] %vm2374, 0.0
    %2391 = vst.msk [vmem:[#allocation2 + $0x100] sm:$0x1] %vm2374, 0.0
    %2392 = vst.msk [vmem:[#allocation2 + $0x110] sm:$0x1] %vm2374, 0.0
    %2393 = vst.msk [vmem:[#allocation2 + $0x120] sm:$0x1] %vm2374, 0.0
    %2394 = vst.msk [vmem:[#allocation2 + $0x130] sm:$0x1] %vm2374, 0.0
    %2395 = vst.msk [vmem:[#allocation2 + $0x9] sm:$0x1] %vm2374, 0.0
    %2396 = vst.msk [vmem:[#allocation2 + $0x19] sm:$0x1] %vm2374, 0.0
    %2397 = vst.msk [vmem:[#allocation2 + $0x29] sm:$0x1] %vm2374, 0.0
    %2398 = vst.msk [vmem:[#allocation2 + $0x39] sm:$0x1] %vm2374, 0.0
    %2399 = vst.msk [vmem:[#allocation2 + $0x49] sm:$0x1] %vm2374, 0.0
    %2400 = vst.msk [vmem:[#allocation2 + $0x59] sm:$0x1] %vm2374, 0.0
    %2401 = vst.msk [vmem:[#allocation2 + $0x69] sm:$0x1] %vm2374, 0.0
    %2402 = vst.msk [vmem:[#allocation2 + $0x79] sm:$0x1] %vm2374, 0.0
    %2403 = vst.msk [vmem:[#allocation2 + $0x89] sm:$0x1] %vm2374, 0.0
    %2404 = vst.msk [vmem:[#allocation2 + $0x99] sm:$0x1] %vm2374, 0.0
    %2405 = vst.msk [vmem:[#allocation2 + $0xa9] sm:$0x1] %vm2374, 0.0
    %2406 = vst.msk [vmem:[#allocation2 + $0xb9] sm:$0x1] %vm2374, 0.0
    %2407 = vst.msk [vmem:[#allocation2 + $0xc9] sm:$0x1] %vm2374, 0.0
    %2408 = vst.msk [vmem:[#allocation2 + $0xd9] sm:$0x1] %vm2374, 0.0
    %2409 = vst.msk [vmem:[#allocation2 + $0xe9] sm:$0x1] %vm2374, 0.0
    %2410 = vst.msk [vmem:[#allocation2 + $0xf9] sm:$0x1] %vm2374, 0.0
    %2411 = vst.msk [vmem:[#allocation2 + $0x109] sm:$0x1] %vm2374, 0.0
    %2412 = vst.msk [vmem:[#allocation2 + $0x119] sm:$0x1] %vm2374, 0.0
    %2413 = vst.msk [vmem:[#allocation2 + $0x129] sm:$0x1] %vm2374, 0.0
    %2414 = vst.msk [vmem:[#allocation2 + $0x139] sm:$0x1] %vm2374, 0.0
    %vm2543 = vcmask 1041409
    %v2544 = vsel %vm2543, %v1481, %v1474
    %vm2545 = vcmask 1042434
    %v2546 = vsel %vm2545, %v1488, %v2544
    %vm2547 = vcmask 1043459
    %v2548 = vsel %vm2547, %v1495, %v2546
    %vm2549 = vcmask 1044484
    %v2550 = vsel %vm2549, %v1502, %v2548
    %vm2551 = vcmask 1045509
    %v2552 = vsel %vm2551, %v1509, %v2550
    %vm2553 = vcmask 1046534
    %v2554 = vsel %vm2553, %v1516, %v2552
    %vm2555 = vcmask 1047559
    %v2556 = vsel %vm2555, %v1523, %v2554
    %v2557 = vsel %vm2543, %v1537, %v1530
    %v2558 = vsel %vm2545, %v1544, %v2557
    %v2559 = vsel %vm2547, %v1551, %v2558
    %v2560 = vsel %vm2549, %v1558, %v2559
    %v2561 = vsel %vm2551, %v1565, %v2560
    %v2562 = vsel %vm2553, %v1572, %v2561
    %v2563 = vsel %vm2555, %v1579, %v2562
    %v2564 = vsel %vm2543, %v1593, %v1586
    %v2565 = vsel %vm2545, %v1600, %v2564
    %v2566 = vsel %vm2547, %v1607, %v2565
    %v2567 = vsel %vm2549, %v1614, %v2566
    %v2568 = vsel %vm2551, %v1621, %v2567
    %v2569 = vsel %vm2553, %v1628, %v2568
    %v2570 = vsel %vm2555, %v1635, %v2569
    %v2571 = vsel %vm2543, %v1649, %v1642
    %v2572 = vsel %vm2545, %v1656, %v2571
    %v2573 = vsel %vm2547, %v1663, %v2572
    %v2574 = vsel %vm2549, %v1670, %v2573
    %v2575 = vsel %vm2551, %v1677, %v2574
    %v2576 = vsel %vm2553, %v1684, %v2575
    %v2577 = vsel %vm2555, %v1691, %v2576
    %v2578 = vsel %vm2543, %v1705, %v1698
    %v2579 = vsel %vm2545, %v1712, %v2578
    %v2580 = vsel %vm2547, %v1719, %v2579
    %v2581 = vsel %vm2549, %v1726, %v2580
    %v2582 = vsel %vm2551, %v1733, %v2581
    %v2583 = vsel %vm2553, %v1740, %v2582
    %v2584 = vsel %vm2555, %v1747, %v2583
    %v2585 = vsel %vm2543, %v1761, %v1754
    %v2586 = vsel %vm2545, %v1768, %v2585
    %v2587 = vsel %vm2547, %v1775, %v2586
    %v2588 = vsel %vm2549, %v1782, %v2587
    %v2589 = vsel %vm2551, %v1789, %v2588
    %v2590 = vsel %vm2553, %v1796, %v2589
    %v2591 = vsel %vm2555, %v1803, %v2590
    %v2592 = vsel %vm2543, %v1817, %v1810
    %v2593 = vsel %vm2545, %v1824, %v2592
    %v2594 = vsel %vm2547, %v1831, %v2593
    %v2595 = vsel %vm2549, %v1838, %v2594
    %v2596 = vsel %vm2551, %v1845, %v2595
    %v2597 = vsel %vm2553, %v1852, %v2596
    %v2598 = vsel %vm2555, %v1859, %v2597
    %v2599 = vsel %vm2543, %v1873, %v1866
    %v2600 = vsel %vm2545, %v1880, %v2599
    %v2601 = vsel %vm2547, %v1887, %v2600
    %v2602 = vsel %vm2549, %v1894, %v2601
    %v2603 = vsel %vm2551, %v1901, %v2602
    %v2604 = vsel %vm2553, %v1908, %v2603
    %v2605 = vsel %vm2555, %v1915, %v2604
    %v2606 = vsel %vm2543, %v1929, %v1922
    %v2607 = vsel %vm2545, %v1936, %v2606
    %v2608 = vsel %vm2547, %v1943, %v2607
    %v2609 = vsel %vm2549, %v1950, %v2608
    %v2610 = vsel %vm2551, %v1957, %v2609
    %v2611 = vsel %vm2553, %v1964, %v2610
    %v2612 = vsel %vm2555, %v1971, %v2611
    %v2613 = vsel %vm2543, %v1985, %v1978
    %v2614 = vsel %vm2545, %v1992, %v2613
    %v2615 = vsel %vm2547, %v1999, %v2614
    %v2616 = vsel %vm2549, %v2006, %v2615
    %v2617 = vsel %vm2551, %v2013, %v2616
    %v2618 = vsel %vm2553, %v2020, %v2617
    %v2619 = vsel %vm2555, %v2027, %v2618
    %v2620 = vsel %vm2543, %v2041, %v2034
    %v2621 = vsel %vm2545, %v2048, %v2620
    %v2622 = vsel %vm2547, %v2055, %v2621
    %v2623 = vsel %vm2549, %v2062, %v2622
    %v2624 = vsel %vm2551, %v2069, %v2623
    %v2625 = vsel %vm2553, %v2076, %v2624
    %v2626 = vsel %vm2555, %v2083, %v2625
    %v2627 = vsel %vm2543, %v2097, %v2090
    %v2628 = vsel %vm2545, %v2104, %v2627
    %v2629 = vsel %vm2547, %v2111, %v2628
    %v2630 = vsel %vm2549, %v2118, %v2629
    %v2631 = vsel %vm2551, %v2125, %v2630
    %v2632 = vsel %vm2553, %v2132, %v2631
    %v2633 = vsel %vm2555, %v2139, %v2632
    %v2634 = vsel %vm2543, %v2153, %v2146
    %v2635 = vsel %vm2545, %v2160, %v2634
    %v2636 = vsel %vm2547, %v2167, %v2635
    %v2637 = vsel %vm2549, %v2174, %v2636
    %v2638 = vsel %vm2551, %v2181, %v2637
    %v2639 = vsel %vm2553, %v2188, %v2638
    %v2640 = vsel %vm2555, %v2195, %v2639
    %v2641 = vsel %vm2543, %v2209, %v2202
    %v2642 = vsel %vm2545, %v2216, %v2641
    %v2643 = vsel %vm2547, %v2223, %v2642
    %v2644 = vsel %vm2549, %v2230, %v2643
    %v2645 = vsel %vm2551, %v2237, %v2644
    %v2646 = vsel %vm2553, %v2244, %v2645
    %v2647 = vsel %vm2555, %v2251, %v2646
    %v2648 = vsel %vm2543, %v2265, %v2258
    %v2649 = vsel %vm2545, %v2272, %v2648
    %v2650 = vsel %vm2547, %v2279, %v2649
    %v2651 = vsel %vm2549, %v2286, %v2650
    %v2652 = vsel %vm2551, %v2293, %v2651
    %v2653 = vsel %vm2553, %v2300, %v2652
    %v2654 = vsel %vm2555, %v2307, %v2653
    %v2655 = vsel %vm2543, %v2321, %v2314
    %v2656 = vsel %vm2545, %v2328, %v2655
    %v2657 = vsel %vm2547, %v2335, %v2656
    %v2658 = vsel %vm2549, %v2342, %v2657
    %v2659 = vsel %vm2551, %v2349, %v2658
    %v2660 = vsel %vm2553, %v2356, %v2659
    %v2661 = vsel %vm2555, %v2363, %v2660
    %s2678 = scalar_lea.vmem [#allocation2], 16
    %2679 = vst.msk [vmem:[%s2678 + $0x1] sm:$0xff] %vm2364, %v2556
    %2680 = vst.msk [vmem:[%s2678 + $0x11] sm:$0xff] %vm2364, %v2563
    %2681 = vst.msk [vmem:[%s2678 + $0x21] sm:$0xff] %vm2364, %v2570
    %2682 = vst.msk [vmem:[%s2678 + $0x31] sm:$0xff] %vm2364, %v2577
    %2683 = vst.msk [vmem:[%s2678 + $0x41] sm:$0xff] %vm2364, %v2584
    %2684 = vst.msk [vmem:[%s2678 + $0x51] sm:$0xff] %vm2364, %v2591
    %2685 = vst.msk [vmem:[%s2678 + $0x61] sm:$0xff] %vm2364, %v2598
    %2686 = vst.msk [vmem:[%s2678 + $0x71] sm:$0xff] %vm2364, %v2605
    %2687 = vst.msk [vmem:[%s2678 + $0xa1] sm:$0xff] %vm2364, %v2612
    %2688 = vst.msk [vmem:[%s2678 + $0xb1] sm:$0xff] %vm2364, %v2619
    %2689 = vst.msk [vmem:[%s2678 + $0xc1] sm:$0xff] %vm2364, %v2626
    %2690 = vst.msk [vmem:[%s2678 + $0xd1] sm:$0xff] %vm2364, %v2633
    %2691 = vst.msk [vmem:[%s2678 + $0xe1] sm:$0xff] %vm2364, %v2640
    %2692 = vst.msk [vmem:[%s2678 + $0xf1] sm:$0xff] %vm2364, %v2647
    %2693 = vst.msk [vmem:[%s2678 + $0x101] sm:$0xff] %vm2364, %v2654
    %2694 = vst.msk [vmem:[%s2678 + $0x111] sm:$0xff] %vm2364, %v2661
    %v2695 = vld [vmem:[#allocation2] sm:$0xff]
    %v2696 = vld [vmem:[#allocation2 + $0x10] sm:$0xff]
    %v2697 = vld [vmem:[#allocation2 + $0x20] sm:$0xff]
    %v2698 = vld [vmem:[#allocation2 + $0x30] sm:$0xff]
    %v2699 = vld [vmem:[#allocation2 + $0x40] sm:$0xff]
    %v2700 = vld [vmem:[#allocation2 + $0x50] sm:$0xff]
    %v2701 = vld [vmem:[#allocation2 + $0x60] sm:$0xff]
    %v2702 = vld [vmem:[#allocation2 + $0x70] sm:$0xff]
    %v2703 = vld [vmem:[#allocation2 + $0xa0] sm:$0xff]
    %v2704 = vld [vmem:[#allocation2 + $0xb0] sm:$0xff]
    %v2705 = vld [vmem:[#allocation2 + $0xc0] sm:$0xff]
    %v2706 = vld [vmem:[#allocation2 + $0xd0] sm:$0xff]
    %v2707 = vld [vmem:[#allocation2 + $0xe0] sm:$0xff]
    %v2708 = vld [vmem:[#allocation2 + $0xf0] sm:$0xff]
    %v2709 = vld [vmem:[#allocation2 + $0x100] sm:$0xff]
    %v2710 = vld [vmem:[#allocation2 + $0x110] sm:$0xff]
    %v2711 = vld [vmem:[#allocation2 + $0x1] sm:$0xff]
    %v2712 = vld [vmem:[#allocation2 + $0x11] sm:$0xff]
    %v2713 = vld [vmem:[#allocation2 + $0x21] sm:$0xff]
    %v2714 = vld [vmem:[#allocation2 + $0x31] sm:$0xff]
    %v2715 = vld [vmem:[#allocation2 + $0x41] sm:$0xff]
    %v2716 = vld [vmem:[#allocation2 + $0x51] sm:$0xff]
    %v2717 = vld [vmem:[#allocation2 + $0x61] sm:$0xff]
    %v2718 = vld [vmem:[#allocation2 + $0x71] sm:$0xff]
    %v2719 = vld [vmem:[#allocation2 + $0xa1] sm:$0xff]
    %v2720 = vld [vmem:[#allocation2 + $0xb1] sm:$0xff]
    %v2721 = vld [vmem:[#allocation2 + $0xc1] sm:$0xff]
    %v2722 = vld [vmem:[#allocation2 + $0xd1] sm:$0xff]
    %v2723 = vld [vmem:[#allocation2 + $0xe1] sm:$0xff]
    %v2724 = vld [vmem:[#allocation2 + $0xf1] sm:$0xff]
    %v2725 = vld [vmem:[#allocation2 + $0x101] sm:$0xff]
    %v2726 = vld [vmem:[#allocation2 + $0x111] sm:$0xff]
    %v2727 = vld [vmem:[#allocation2 + $0x2] sm:$0xff]
    %v2728 = vld [vmem:[#allocation2 + $0x12] sm:$0xff]
    %v2729 = vld [vmem:[#allocation2 + $0x22] sm:$0xff]
    %v2730 = vld [vmem:[#allocation2 + $0x32] sm:$0xff]
    %v2731 = vld [vmem:[#allocation2 + $0x42] sm:$0xff]
    %v2732 = vld [vmem:[#allocation2 + $0x52] sm:$0xff]
    %v2733 = vld [vmem:[#allocation2 + $0x62] sm:$0xff]
    %v2734 = vld [vmem:[#allocation2 + $0x72] sm:$0xff]
    %v2735 = vld [vmem:[#allocation2 + $0xa2] sm:$0xff]
    %v2736 = vld [vmem:[#allocation2 + $0xb2] sm:$0xff]
    %v2737 = vld [vmem:[#allocation2 + $0xc2] sm:$0xff]
    %v2738 = vld [vmem:[#allocation2 + $0xd2] sm:$0xff]
    %v2739 = vld [vmem:[#allocation2 + $0xe2] sm:$0xff]
    %v2740 = vld [vmem:[#allocation2 + $0xf2] sm:$0xff]
    %v2741 = vld [vmem:[#allocation2 + $0x102] sm:$0xff]
    %v2742 = vld [vmem:[#allocation2 + $0x112] sm:$0xff]
    %v2743 = vld [vmem:[%s2678] sm:$0xff]
    %v2744 = vld [vmem:[%s2678 + $0x10] sm:$0xff]
    %v2745 = vld [vmem:[%s2678 + $0x20] sm:$0xff]
    %v2746 = vld [vmem:[%s2678 + $0x30] sm:$0xff]
    %v2747 = vld [vmem:[%s2678 + $0x40] sm:$0xff]
    %v2748 = vld [vmem:[%s2678 + $0x50] sm:$0xff]
    %v2749 = vld [vmem:[%s2678 + $0x60] sm:$0xff]
    %v2750 = vld [vmem:[%s2678 + $0x70] sm:$0xff]
    %v2751 = vld [vmem:[%s2678 + $0xa0] sm:$0xff]
    %v2752 = vld [vmem:[%s2678 + $0xb0] sm:$0xff]
    %v2753 = vld [vmem:[%s2678 + $0xc0] sm:$0xff]
    %v2754 = vld [vmem:[%s2678 + $0xd0] sm:$0xff]
    %v2755 = vld [vmem:[%s2678 + $0xe0] sm:$0xff]
    %v2756 = vld [vmem:[%s2678 + $0xf0] sm:$0xff]
    %v2757 = vld [vmem:[%s2678 + $0x100] sm:$0xff]
    %v2758 = vld [vmem:[%s2678 + $0x110] sm:$0xff]
    %v2759 = vld [vmem:[%s2678 + $0x1] sm:$0xff]
    %v2760 = vld [vmem:[%s2678 + $0x11] sm:$0xff]
    %v2761 = vld [vmem:[%s2678 + $0x21] sm:$0xff]
    %v2762 = vld [vmem:[%s2678 + $0x31] sm:$0xff]
    %v2763 = vld [vmem:[%s2678 + $0x41] sm:$0xff]
    %v2764 = vld [vmem:[%s2678 + $0x51] sm:$0xff]
    %v2765 = vld [vmem:[%s2678 + $0x61] sm:$0xff]
    %v2766 = vld [vmem:[%s2678 + $0x71] sm:$0xff]
    %v2767 = vld [vmem:[%s2678 + $0xa1] sm:$0xff]
    %v2768 = vld [vmem:[%s2678 + $0xb1] sm:$0xff]
    %v2769 = vld [vmem:[%s2678 + $0xc1] sm:$0xff]
    %v2770 = vld [vmem:[%s2678 + $0xd1] sm:$0xff]
    %v2771 = vld [vmem:[%s2678 + $0xe1] sm:$0xff]
    %v2772 = vld [vmem:[%s2678 + $0xf1] sm:$0xff]
    %v2773 = vld [vmem:[%s2678 + $0x101] sm:$0xff]
    %v2774 = vld [vmem:[%s2678 + $0x111] sm:$0xff]
    %v2775 = vld [vmem:[%s2678 + $0x2] sm:$0xff]
    %v2776 = vld [vmem:[%s2678 + $0x12] sm:$0xff]
    %v2777 = vld [vmem:[%s2678 + $0x22] sm:$0xff]
    %v2778 = vld [vmem:[%s2678 + $0x32] sm:$0xff]
    %v2779 = vld [vmem:[%s2678 + $0x42] sm:$0xff]
    %v2780 = vld [vmem:[%s2678 + $0x52] sm:$0xff]
    %v2781 = vld [vmem:[%s2678 + $0x62] sm:$0xff]
    %v2782 = vld [vmem:[%s2678 + $0x72] sm:$0xff]
    %v2783 = vld [vmem:[%s2678 + $0xa2] sm:$0xff]
    %v2784 = vld [vmem:[%s2678 + $0xb2] sm:$0xff]
    %v2785 = vld [vmem:[%s2678 + $0xc2] sm:$0xff]
    %v2786 = vld [vmem:[%s2678 + $0xd2] sm:$0xff]
    %v2787 = vld [vmem:[%s2678 + $0xe2] sm:$0xff]
    %v2788 = vld [vmem:[%s2678 + $0xf2] sm:$0xff]
    %v2789 = vld [vmem:[%s2678 + $0x102] sm:$0xff]
    %v2790 = vld [vmem:[%s2678 + $0x112] sm:$0xff]
    %s2791 = scalar_lea.vmem [#allocation2], 32
    %v2792 = vld [vmem:[%s2791] sm:$0xff]
    %v2793 = vld [vmem:[%s2791 + $0x10] sm:$0xff]
    %v2794 = vld [vmem:[%s2791 + $0x20] sm:$0xff]
    %v2795 = vld [vmem:[%s2791 + $0x30] sm:$0xff]
    %v2796 = vld [vmem:[%s2791 + $0x40] sm:$0xff]
    %v2797 = vld [vmem:[%s2791 + $0x50] sm:$0xff]
    %v2798 = vld [vmem:[%s2791 + $0x60] sm:$0xff]
    %v2799 = vld [vmem:[%s2791 + $0x70] sm:$0xff]
    %v2800 = vld [vmem:[%s2791 + $0xa0] sm:$0xff]
    %v2801 = vld [vmem:[%s2791 + $0xb0] sm:$0xff]
    %v2802 = vld [vmem:[%s2791 + $0xc0] sm:$0xff]
    %v2803 = vld [vmem:[%s2791 + $0xd0] sm:$0xff]
    %v2804 = vld [vmem:[%s2791 + $0xe0] sm:$0xff]
    %v2805 = vld [vmem:[%s2791 + $0xf0] sm:$0xff]
    %v2806 = vld [vmem:[%s2791 + $0x100] sm:$0xff]
    %v2807 = vld [vmem:[%s2791 + $0x110] sm:$0xff]
    %v2808 = vld [vmem:[%s2791 + $0x1] sm:$0xff]
    %v2809 = vld [vmem:[%s2791 + $0x11] sm:$0xff]
    %v2810 = vld [vmem:[%s2791 + $0x21] sm:$0xff]
    %v2811 = vld [vmem:[%s2791 + $0x31] sm:$0xff]
    %v2812 = vld [vmem:[%s2791 + $0x41] sm:$0xff]
    %v2813 = vld [vmem:[%s2791 + $0x51] sm:$0xff]
    %v2814 = vld [vmem:[%s2791 + $0x61] sm:$0xff]
    %v2815 = vld [vmem:[%s2791 + $0x71] sm:$0xff]
    %v2816 = vld [vmem:[%s2791 + $0xa1] sm:$0xff]
    %v2817 = vld [vmem:[%s2791 + $0xb1] sm:$0xff]
    %v2818 = vld [vmem:[%s2791 + $0xc1] sm:$0xff]
    %v2819 = vld [vmem:[%s2791 + $0xd1] sm:$0xff]
    %v2820 = vld [vmem:[%s2791 + $0xe1] sm:$0xff]
    %v2821 = vld [vmem:[%s2791 + $0xf1] sm:$0xff]
    %v2822 = vld [vmem:[%s2791 + $0x101] sm:$0xff]
    %v2823 = vld [vmem:[%s2791 + $0x111] sm:$0xff]
    %v2824 = vld [vmem:[%s2791 + $0x2] sm:$0xff]
    %v2825 = vld [vmem:[%s2791 + $0x12] sm:$0xff]
    %v2826 = vld [vmem:[%s2791 + $0x22] sm:$0xff]
    %v2827 = vld [vmem:[%s2791 + $0x32] sm:$0xff]
    %v2828 = vld [vmem:[%s2791 + $0x42] sm:$0xff]
    %v2829 = vld [vmem:[%s2791 + $0x52] sm:$0xff]
    %v2830 = vld [vmem:[%s2791 + $0x62] sm:$0xff]
    %v2831 = vld [vmem:[%s2791 + $0x72] sm:$0xff]
    %v2832 = vld [vmem:[%s2791 + $0xa2] sm:$0xff]
    %v2833 = vld [vmem:[%s2791 + $0xb2] sm:$0xff]
    %v2834 = vld [vmem:[%s2791 + $0xc2] sm:$0xff]
    %v2835 = vld [vmem:[%s2791 + $0xd2] sm:$0xff]
    %v2836 = vld [vmem:[%s2791 + $0xe2] sm:$0xff]
    %v2837 = vld [vmem:[%s2791 + $0xf2] sm:$0xff]
    %v2838 = vld [vmem:[%s2791 + $0x102] sm:$0xff]
    %v2839 = vld [vmem:[%s2791 + $0x112] sm:$0xff]
    %2856 = vrot.lane.b32.xlu0 %v2711, 32
    %v2857 = vpop.permute.xlu0 %2856
    %2858 = vrot.lane.b32.xlu0 %v2712, 32
    %v2859 = vpop.permute.xlu0 %2858
    %2860 = vrot.lane.b32.xlu0 %v2713, 32
    %v2861 = vpop.permute.xlu0 %2860
    %2862 = vrot.lane.b32.xlu0 %v2714, 32
    %v2863 = vpop.permute.xlu0 %2862
    %2864 = vrot.lane.b32.xlu0 %v2715, 32
    %v2865 = vpop.permute.xlu0 %2864
    %2866 = vrot.lane.b32.xlu0 %v2716, 32
    %v2867 = vpop.permute.xlu0 %2866
    %2868 = vrot.lane.b32.xlu0 %v2717, 32
    %v2869 = vpop.permute.xlu0 %2868
    %2870 = vrot.lane.b32.xlu0 %v2718, 32
    %v2871 = vpop.permute.xlu0 %2870
    %2872 = vrot.lane.b32.xlu0 %v2719, 32
    %v2873 = vpop.permute.xlu0 %2872
    %2874 = vrot.lane.b32.xlu0 %v2720, 32
    %v2875 = vpop.permute.xlu0 %2874
    %2876 = vrot.lane.b32.xlu0 %v2721, 32
    %v2877 = vpop.permute.xlu0 %2876
    %2878 = vrot.lane.b32.xlu0 %v2722, 32
    %v2879 = vpop.permute.xlu0 %2878
    %2880 = vrot.lane.b32.xlu0 %v2723, 32
    %v2881 = vpop.permute.xlu0 %2880
    %2882 = vrot.lane.b32.xlu0 %v2724, 32
    %v2883 = vpop.permute.xlu0 %2882
    %2884 = vrot.lane.b32.xlu0 %v2725, 32
    %v2885 = vpop.permute.xlu0 %2884
    %2886 = vrot.lane.b32.xlu0 %v2726, 32
    %v2887 = vpop.permute.xlu0 %2886
    %2920 = vrot.lane.b32.xlu0 %v2727, 64
    %v2921 = vpop.permute.xlu0 %2920
    %2922 = vrot.lane.b32.xlu0 %v2728, 64
    %v2923 = vpop.permute.xlu0 %2922
    %2924 = vrot.lane.b32.xlu0 %v2729, 64
    %v2925 = vpop.permute.xlu0 %2924
    %2926 = vrot.lane.b32.xlu0 %v2730, 64
    %v2927 = vpop.permute.xlu0 %2926
    %2928 = vrot.lane.b32.xlu0 %v2731, 64
    %v2929 = vpop.permute.xlu0 %2928
    %2930 = vrot.lane.b32.xlu0 %v2732, 64
    %v2931 = vpop.permute.xlu0 %2930
    %2932 = vrot.lane.b32.xlu0 %v2733, 64
    %v2933 = vpop.permute.xlu0 %2932
    %2934 = vrot.lane.b32.xlu0 %v2734, 64
    %v2935 = vpop.permute.xlu0 %2934
    %2936 = vrot.lane.b32.xlu0 %v2735, 64
    %v2937 = vpop.permute.xlu0 %2936
    %2938 = vrot.lane.b32.xlu0 %v2736, 64
    %v2939 = vpop.permute.xlu0 %2938
    %2940 = vrot.lane.b32.xlu0 %v2737, 64
    %v2941 = vpop.permute.xlu0 %2940
    %2942 = vrot.lane.b32.xlu0 %v2738, 64
    %v2943 = vpop.permute.xlu0 %2942
    %2944 = vrot.lane.b32.xlu0 %v2739, 64
    %v2945 = vpop.permute.xlu0 %2944
    %2946 = vrot.lane.b32.xlu0 %v2740, 64
    %v2947 = vpop.permute.xlu0 %2946
    %2948 = vrot.lane.b32.xlu0 %v2741, 64
    %v2949 = vpop.permute.xlu0 %2948
    %2950 = vrot.lane.b32.xlu0 %v2742, 64
    %v2951 = vpop.permute.xlu0 %2950
    %2984 = vrot.lane.b32.xlu0 %v2743, 96
    %v2985 = vpop.permute.xlu0 %2984
    %2986 = vrot.lane.b32.xlu0 %v2744, 96
    %v2987 = vpop.permute.xlu0 %2986
    %2988 = vrot.lane.b32.xlu0 %v2745, 96
    %v2989 = vpop.permute.xlu0 %2988
    %2990 = vrot.lane.b32.xlu0 %v2746, 96
    %v2991 = vpop.permute.xlu0 %2990
    %2992 = vrot.lane.b32.xlu0 %v2747, 96
    %v2993 = vpop.permute.xlu0 %2992
    %2994 = vrot.lane.b32.xlu0 %v2748, 96
    %v2995 = vpop.permute.xlu0 %2994
    %2996 = vrot.lane.b32.xlu0 %v2749, 96
    %v2997 = vpop.permute.xlu0 %2996
    %2998 = vrot.lane.b32.xlu0 %v2750, 96
    %v2999 = vpop.permute.xlu0 %2998
    %3000 = vrot.lane.b32.xlu0 %v2751, 96
    %v3001 = vpop.permute.xlu0 %3000
    %3002 = vrot.lane.b32.xlu0 %v2752, 96
    %v3003 = vpop.permute.xlu0 %3002
    %3004 = vrot.lane.b32.xlu0 %v2753, 96
    %v3005 = vpop.permute.xlu0 %3004
    %3006 = vrot.lane.b32.xlu0 %v2754, 96
    %v3007 = vpop.permute.xlu0 %3006
    %3008 = vrot.lane.b32.xlu0 %v2755, 96
    %v3009 = vpop.permute.xlu0 %3008
    %3010 = vrot.lane.b32.xlu0 %v2756, 96
    %v3011 = vpop.permute.xlu0 %3010
    %3012 = vrot.lane.b32.xlu0 %v2757, 96
    %v3013 = vpop.permute.xlu0 %3012
    %3014 = vrot.lane.b32.xlu0 %v2758, 96
    %v3015 = vpop.permute.xlu0 %3014
    %3048 = vrot.lane.b32.xlu0 %v2775, 32
    %v3049 = vpop.permute.xlu0 %3048
    %3050 = vrot.lane.b32.xlu0 %v2776, 32
    %v3051 = vpop.permute.xlu0 %3050
    %3052 = vrot.lane.b32.xlu0 %v2777, 32
    %v3053 = vpop.permute.xlu0 %3052
    %3054 = vrot.lane.b32.xlu0 %v2778, 32
    %v3055 = vpop.permute.xlu0 %3054
    %3056 = vrot.lane.b32.xlu0 %v2779, 32
    %v3057 = vpop.permute.xlu0 %3056
    %3058 = vrot.lane.b32.xlu0 %v2780, 32
    %v3059 = vpop.permute.xlu0 %3058
    %3060 = vrot.lane.b32.xlu0 %v2781, 32
    %v3061 = vpop.permute.xlu0 %3060
    %3062 = vrot.lane.b32.xlu0 %v2782, 32
    %v3063 = vpop.permute.xlu0 %3062
    %3064 = vrot.lane.b32.xlu0 %v2783, 32
    %v3065 = vpop.permute.xlu0 %3064
    %3066 = vrot.lane.b32.xlu0 %v2784, 32
    %v3067 = vpop.permute.xlu0 %3066
    %3068 = vrot.lane.b32.xlu0 %v2785, 32
    %v3069 = vpop.permute.xlu0 %3068
    %3070 = vrot.lane.b32.xlu0 %v2786, 32
    %v3071 = vpop.permute.xlu0 %3070
    %3072 = vrot.lane.b32.xlu0 %v2787, 32
    %v3073 = vpop.permute.xlu0 %3072
    %3074 = vrot.lane.b32.xlu0 %v2788, 32
    %v3075 = vpop.permute.xlu0 %3074
    %3076 = vrot.lane.b32.xlu0 %v2789, 32
    %v3077 = vpop.permute.xlu0 %3076
    %3078 = vrot.lane.b32.xlu0 %v2790, 32
    %v3079 = vpop.permute.xlu0 %3078
    %3112 = vrot.lane.b32.xlu0 %v2792, 64
    %v3113 = vpop.permute.xlu0 %3112
    %3114 = vrot.lane.b32.xlu0 %v2793, 64
    %v3115 = vpop.permute.xlu0 %3114
    %3116 = vrot.lane.b32.xlu0 %v2794, 64
    %v3117 = vpop.permute.xlu0 %3116
    %3118 = vrot.lane.b32.xlu0 %v2795, 64
    %v3119 = vpop.permute.xlu0 %3118
    %3120 = vrot.lane.b32.xlu0 %v2796, 64
    %v3121 = vpop.permute.xlu0 %3120
    %3122 = vrot.lane.b32.xlu0 %v2797, 64
    %v3123 = vpop.permute.xlu0 %3122
    %3124 = vrot.lane.b32.xlu0 %v2798, 64
    %v3125 = vpop.permute.xlu0 %3124
    %3126 = vrot.lane.b32.xlu0 %v2799, 64
    %v3127 = vpop.permute.xlu0 %3126
    %3128 = vrot.lane.b32.xlu0 %v2800, 64
    %v3129 = vpop.permute.xlu0 %3128
    %3130 = vrot.lane.b32.xlu0 %v2801, 64
    %v3131 = vpop.permute.xlu0 %3130
    %3132 = vrot.lane.b32.xlu0 %v2802, 64
    %v3133 = vpop.permute.xlu0 %3132
    %3134 = vrot.lane.b32.xlu0 %v2803, 64
    %v3135 = vpop.permute.xlu0 %3134
    %3136 = vrot.lane.b32.xlu0 %v2804, 64
    %v3137 = vpop.permute.xlu0 %3136
    %3138 = vrot.lane.b32.xlu0 %v2805, 64
    %v3139 = vpop.permute.xlu0 %3138
    %3140 = vrot.lane.b32.xlu0 %v2806, 64
    %v3141 = vpop.permute.xlu0 %3140
    %3142 = vrot.lane.b32.xlu0 %v2807, 64
    %v3143 = vpop.permute.xlu0 %3142
    %3176 = vrot.lane.b32.xlu0 %v2808, 96
    %v3177 = vpop.permute.xlu0 %3176
    %3178 = vrot.lane.b32.xlu0 %v2809, 96
    %v3179 = vpop.permute.xlu0 %3178
    %3180 = vrot.lane.b32.xlu0 %v2810, 96
    %v3181 = vpop.permute.xlu0 %3180
    %3182 = vrot.lane.b32.xlu0 %v2811, 96
    %v3183 = vpop.permute.xlu0 %3182
    %3184 = vrot.lane.b32.xlu0 %v2812, 96
    %v3185 = vpop.permute.xlu0 %3184
    %3186 = vrot.lane.b32.xlu0 %v2813, 96
    %v3187 = vpop.permute.xlu0 %3186
    %3188 = vrot.lane.b32.xlu0 %v2814, 96
    %v3189 = vpop.permute.xlu0 %3188
    %3190 = vrot.lane.b32.xlu0 %v2815, 96
    %v3191 = vpop.permute.xlu0 %3190
    %3192 = vrot.lane.b32.xlu0 %v2816, 96
    %v3193 = vpop.permute.xlu0 %3192
    %3194 = vrot.lane.b32.xlu0 %v2817, 96
    %v3195 = vpop.permute.xlu0 %3194
    %3196 = vrot.lane.b32.xlu0 %v2818, 96
    %v3197 = vpop.permute.xlu0 %3196
    %3198 = vrot.lane.b32.xlu0 %v2819, 96
    %v3199 = vpop.permute.xlu0 %3198
    %3200 = vrot.lane.b32.xlu0 %v2820, 96
    %v3201 = vpop.permute.xlu0 %3200
    %3202 = vrot.lane.b32.xlu0 %v2821, 96
    %v3203 = vpop.permute.xlu0 %3202
    %3204 = vrot.lane.b32.xlu0 %v2822, 96
    %v3205 = vpop.permute.xlu0 %3204
    %3206 = vrot.lane.b32.xlu0 %v2823, 96
    %v3207 = vpop.permute.xlu0 %3206
    %v3224 = vsel %vm2364, %v2695, %v2857
    %v3225 = vsel %vm2364, %v2696, %v2859
    %v3226 = vsel %vm2364, %v2697, %v2861
    %v3227 = vsel %vm2364, %v2698, %v2863
    %v3228 = vsel %vm2364, %v2699, %v2865
    %v3229 = vsel %vm2364, %v2700, %v2867
    %v3230 = vsel %vm2364, %v2701, %v2869
    %v3231 = vsel %vm2364, %v2702, %v2871
    %v3232 = vsel %vm2364, %v2703, %v2873
    %v3233 = vsel %vm2364, %v2704, %v2875
    %v3234 = vsel %vm2364, %v2705, %v2877
    %v3235 = vsel %vm2364, %v2706, %v2879
    %v3236 = vsel %vm2364, %v2707, %v2881
    %v3237 = vsel %vm2364, %v2708, %v2883
    %v3238 = vsel %vm2364, %v2709, %v2885
    %v3239 = vsel %vm2364, %v2710, %v2887
    %vm3240 = vcmask 523264
    %v3241 = vsel %vm3240, %v3224, %v2921
    %v3242 = vsel %vm3240, %v3225, %v2923
    %v3243 = vsel %vm3240, %v3226, %v2925
    %v3244 = vsel %vm3240, %v3227, %v2927
    %v3245 = vsel %vm3240, %v3228, %v2929
    %v3246 = vsel %vm3240, %v3229, %v2931
    %v3247 = vsel %vm3240, %v3230, %v2933
    %v3248 = vsel %vm3240, %v3231, %v2935
    %v3249 = vsel %vm3240, %v3232, %v2937
    %v3250 = vsel %vm3240, %v3233, %v2939
    %v3251 = vsel %vm3240, %v3234, %v2941
    %v3252 = vsel %vm3240, %v3235, %v2943
    %v3253 = vsel %vm3240, %v3236, %v2945
    %v3254 = vsel %vm3240, %v3237, %v2947
    %v3255 = vsel %vm3240, %v3238, %v2949
    %v3256 = vsel %vm3240, %v3239, %v2951
    %vm3257 = vcmask 785408
    %v3258 = vsel %vm3257, %v3241, %v2985
    %v3259 = vsel %vm3257, %v3242, %v2987
    %v3260 = vsel %vm3257, %v3243, %v2989
    %v3261 = vsel %vm3257, %v3244, %v2991
    %v3262 = vsel %vm3257, %v3245, %v2993
    %v3263 = vsel %vm3257, %v3246, %v2995
    %v3264 = vsel %vm3257, %v3247, %v2997
    %v3265 = vsel %vm3257, %v3248, %v2999
    %v3266 = vsel %vm3257, %v3249, %v3001
    %v3267 = vsel %vm3257, %v3250, %v3003
    %v3268 = vsel %vm3257, %v3251, %v3005
    %v3269 = vsel %vm3257, %v3252, %v3007
    %v3270 = vsel %vm3257, %v3253, %v3009
    %v3271 = vsel %vm3257, %v3254, %v3011
    %v3272 = vsel %vm3257, %v3255, %v3013
    %v3273 = vsel %vm3257, %v3256, %v3015
    %v3274 = vsel %vm2364, %v2759, %v3049
    %v3275 = vsel %vm2364, %v2760, %v3051
    %v3276 = vsel %vm2364, %v2761, %v3053
    %v3277 = vsel %vm2364, %v2762, %v3055
    %v3278 = vsel %vm2364, %v2763, %v3057
    %v3279 = vsel %vm2364, %v2764, %v3059
    %v3280 = vsel %vm2364, %v2765, %v3061
    %v3281 = vsel %vm2364, %v2766, %v3063
    %v3282 = vsel %vm2364, %v2767, %v3065
    %v3283 = vsel %vm2364, %v2768, %v3067
    %v3284 = vsel %vm2364, %v2769, %v3069
    %v3285 = vsel %vm2364, %v2770, %v3071
    %v3286 = vsel %vm2364, %v2771, %v3073
    %v3287 = vsel %vm2364, %v2772, %v3075
    %v3288 = vsel %vm2364, %v2773, %v3077
    %v3289 = vsel %vm2364, %v2774, %v3079
    %v3290 = vsel %vm3240, %v3274, %v3113
    %v3291 = vsel %vm3240, %v3275, %v3115
    %v3292 = vsel %vm3240, %v3276, %v3117
    %v3293 = vsel %vm3240, %v3277, %v3119
    %v3294 = vsel %vm3240, %v3278, %v3121
    %v3295 = vsel %vm3240, %v3279, %v3123
    %v3296 = vsel %vm3240, %v3280, %v3125
    %v3297 = vsel %vm3240, %v3281, %v3127
    %v3298 = vsel %vm3240, %v3282, %v3129
    %v3299 = vsel %vm3240, %v3283, %v3131
    %v3300 = vsel %vm3240, %v3284, %v3133
    %v3301 = vsel %vm3240, %v3285, %v3135
    %v3302 = vsel %vm3240, %v3286, %v3137
    %v3303 = vsel %vm3240, %v3287, %v3139
    %v3304 = vsel %vm3240, %v3288, %v3141
    %v3305 = vsel %vm3240, %v3289, %v3143
    %v3306 = vsel %vm3257, %v3290, %v3177
    %v3307 = vsel %vm3257, %v3291, %v3179
    %v3308 = vsel %vm3257, %v3292, %v3181
    %v3309 = vsel %vm3257, %v3293, %v3183
    %v3310 = vsel %vm3257, %v3294, %v3185
    %v3311 = vsel %vm3257, %v3295, %v3187
    %v3312 = vsel %vm3257, %v3296, %v3189
    %v3313 = vsel %vm3257, %v3297, %v3191
    %v3314 = vsel %vm3257, %v3298, %v3193
    %v3315 = vsel %vm3257, %v3299, %v3195
    %v3316 = vsel %vm3257, %v3300, %v3197
    %v3317 = vsel %vm3257, %v3301, %v3199
    %v3318 = vsel %vm3257, %v3302, %v3201
    %v3319 = vsel %vm3257, %v3303, %v3203
    %v3320 = vsel %vm3257, %v3304, %v3205
    %v3321 = vsel %vm3257, %v3305, %v3207
    %v3322 = vpack.c.bf16 %v3259, %v3258
    %v3323 = vpack.c.bf16 %v3307, %v3306
    %v3324 = vpack.c.bf16 %v2825, %v2824
    %v3325 = vpack.c.bf16 %v3261, %v3260
    %v3326 = vpack.c.bf16 %v3309, %v3308
    %v3327 = vpack.c.bf16 %v2827, %v2826
    %v3328 = vpack.c.bf16 %v3263, %v3262
    %v3329 = vpack.c.bf16 %v3311, %v3310
    %v3330 = vpack.c.bf16 %v2829, %v2828
    %v3331 = vpack.c.bf16 %v3265, %v3264
    %v3332 = vpack.c.bf16 %v3313, %v3312
    %v3333 = vpack.c.bf16 %v2831, %v2830
    %v3334 = vpack.c.bf16 %v3267, %v3266
    %v3335 = vpack.c.bf16 %v3315, %v3314
    %v3336 = vpack.c.bf16 %v2833, %v2832
    %v3337 = vpack.c.bf16 %v3269, %v3268
    %v3338 = vpack.c.bf16 %v3317, %v3316
    %v3339 = vpack.c.bf16 %v2835, %v2834
    %v3340 = vpack.c.bf16 %v3271, %v3270
    %v3341 = vpack.c.bf16 %v3319, %v3318
    %v3342 = vpack.c.bf16 %v2837, %v2836
    %v3343 = vpack.c.bf16 %v3273, %v3272
    %v3344 = vpack.c.bf16 %v3321, %v3320
    %v3345 = vpack.c.bf16 %v2839, %v2838
    %v3346 = vld [vmem:[%s3] sm:$0xf]
    %v3347 = vld [vmem:[%s3 + $0x4] sm:$0xf]
    %v3348 = vld [vmem:[%s3 + $0x8] sm:$0xf]
    %v3349 = vld [vmem:[%s3 + $0xc] sm:$0xf]
    %v3350 = vld [vmem:[%s3 + $0x10] sm:$0xf]
    %v3351 = vld [vmem:[%s3 + $0x14] sm:$0xf]
    %v3352 = vld [vmem:[%s3 + $0x18] sm:$0xf]
    %v3353 = vld [vmem:[%s3 + $0x1c] sm:$0xf]
    %v3354 = vld [vmem:[%s3 + $0x20] sm:$0xf]
    %v3355 = vld [vmem:[%s3 + $0x24] sm:$0xf]
    %v3356 = vld [vmem:[%s3 + $0x28] sm:$0xf]
    %v3357 = vld [vmem:[%s3 + $0x2c] sm:$0xf]
    %v3358 = vld [vmem:[%s3 + $0x30] sm:$0xf]
    %v3359 = vld [vmem:[%s3 + $0x34] sm:$0xf]
    %v3360 = vld [vmem:[%s3 + $0x38] sm:$0xf]
    %v3361 = vld [vmem:[%s3 + $0x3c] sm:$0xf]
    %v3362 = vld [vmem:[%s3 + $0x40] sm:$0xf]
    %v3363 = vld [vmem:[%s3 + $0x44] sm:$0xf]
    %v3364 = vld [vmem:[%s3 + $0x48] sm:$0xf]
    %v3365 = vld [vmem:[%s3 + $0x4c] sm:$0xf]
    %v3366 = vld [vmem:[%s3 + $0x50] sm:$0xf]
    %v3367 = vld [vmem:[%s3 + $0x54] sm:$0xf]
    %v3368 = vld [vmem:[%s3 + $0x58] sm:$0xf]
    %v3369 = vld [vmem:[%s3 + $0x5c] sm:$0xf]
    %v3370 = vld [vmem:[%s3 + $0x60] sm:$0xf]
    %v3371 = vld [vmem:[%s3 + $0x64] sm:$0xf]
    %v3372 = vld [vmem:[%s3 + $0x68] sm:$0xf]
    %v3373 = vld [vmem:[%s3 + $0x6c] sm:$0xf]
    %v3374 = vld [vmem:[%s3 + $0x70] sm:$0xf]
    %v3375 = vld [vmem:[%s3 + $0x74] sm:$0xf]
    %v3376 = vld [vmem:[%s3 + $0x78] sm:$0xf]
    %v3377 = vld [vmem:[%s3 + $0x7c] sm:$0xf]
    %v3378 = vld [vmem:[%s3 + $0x80] sm:$0xf]
    %v3379 = vld [vmem:[%s3 + $0x84] sm:$0xf]
    %v3380 = vld [vmem:[%s3 + $0x88] sm:$0xf]
    %v3381 = vld [vmem:[%s3 + $0x8c] sm:$0xf]
    %v3382 = vld [vmem:[%s4] sm:$0x1]
    %v3384 = vlaneseq
    %v3385 = vshrl.u32 %v3384, 7
    %v3386 = vsub.s32 0, %v3385
    %v3387 = vrot.slane %v3382, %v3386
    %v3425 = vunpack.c.l.b16 %v3346
    %v3426 = vunpack.c.l.b16 %v3347
    %v3427 = vunpack.c.l.b16 %v3348
    %v3428 = vunpack.c.l.b16 %v3349
    %v3429 = vunpack.c.l.b16 %v3350
    %v3430 = vunpack.c.l.b16 %v3351
    %v3431 = vunpack.c.l.b16 %v3352
    %v3432 = vunpack.c.l.b16 %v3353
    %v3433 = vunpack.c.l.b16 %v3354
    %v3434 = vunpack.c.l.b16 %v3355
    %v3435 = vunpack.c.l.b16 %v3356
    %v3436 = vunpack.c.l.b16 %v3357
    %v3437 = vunpack.c.l.b16 %v3358
    %v3438 = vunpack.c.l.b16 %v3359
    %v3439 = vunpack.c.l.b16 %v3360
    %v3440 = vunpack.c.l.b16 %v3361
    %v3441 = vunpack.c.l.b16 %v3362
    %v3442 = vunpack.c.l.b16 %v3363
    %v3443 = vunpack.c.l.b16 %v3364
    %v3444 = vunpack.c.l.b16 %v3365
    %v3445 = vunpack.c.l.b16 %v3366
    %v3446 = vunpack.c.l.b16 %v3367
    %v3447 = vunpack.c.l.b16 %v3368
    %v3448 = vunpack.c.l.b16 %v3369
    %v3449 = vunpack.c.l.b16 %v3370
    %v3450 = vunpack.c.l.b16 %v3371
    %v3451 = vunpack.c.l.b16 %v3372
    %v3452 = vunpack.c.l.b16 %v3373
    %v3453 = vunpack.c.l.b16 %v3374
    %v3454 = vunpack.c.l.b16 %v3375
    %v3455 = vunpack.c.l.b16 %v3376
    %v3456 = vunpack.c.l.b16 %v3377
    %v3457 = vunpack.c.l.b16 %v3378
    %v3458 = vunpack.c.l.b16 %v3379
    %v3459 = vunpack.c.l.b16 %v3380
    %v3460 = vunpack.c.l.b16 %v3381
    %v3461 = vpack.c.b16 %v3426, %v3425
    %v3462 = vpack.c.b16 %v3428, %v3427
    %v3463 = vpack.c.b16 %v3430, %v3429
    %v3464 = vpack.c.b16 %v3432, %v3431
    %v3465 = vpack.c.b16 %v3434, %v3433
    %v3466 = vpack.c.b16 %v3436, %v3435
    %v3467 = vpack.c.b16 %v3438, %v3437
    %v3468 = vpack.c.b16 %v3440, %v3439
    %v3469 = vpack.c.b16 %v3442, %v3441
    %v3470 = vpack.c.b16 %v3444, %v3443
    %v3471 = vpack.c.b16 %v3446, %v3445
    %v3472 = vpack.c.b16 %v3448, %v3447
    %v3473 = vpack.c.b16 %v3450, %v3449
    %v3474 = vpack.c.b16 %v3452, %v3451
    %v3475 = vpack.c.b16 %v3454, %v3453
    %v3476 = vpack.c.b16 %v3456, %v3455
    %v3477 = vpack.c.b16 %v3458, %v3457
    %v3478 = vpack.c.b16 %v3460, %v3459
    %v3498 = vsel %vm2364, %v3324, 0
    %v3501 = vsel %vm2364, %v3327, 0
    %v3504 = vsel %vm2364, %v3330, 0
    %v3507 = vsel %vm2364, %v3333, 0
    %v3510 = vsel %vm2364, %v3336, 0
    %v3513 = vsel %vm2364, %v3339, 0
    %v3516 = vsel %vm2364, %v3342, 0
    %v3519 = vsel %vm2364, %v3345, 0
    %3521 = vmatprep.subr.bf16.mxu0 0
    %3522 = vmatpush1.bf16.msra.mxu0 %v3461
    %3523 = vmatprep.subr.bf16.mxu0 0
    %3524 = vmatpush1.bf16.msra.mxu0 %v3462
    %3525 = vmatprep.subr.bf16.mxu0 0
    %3526 = vmatpush1.bf16.msra.mxu0 %v3463
    %3527 = vmatprep.subr.bf16.mxu0 0
    %3528 = vmatpush1.bf16.msra.mxu0 %v3464
    %3529 = vmatprep.subr.bf16.mxu0 0
    %3530 = vmatpush1.bf16.msra.mxu0 %v3465
    %3531 = vmatprep.subr.bf16.mxu0 0
    %3532 = vmatpush1.bf16.msra.mxu0 %v3466
    %3533 = vmatprep.subr.bf16.mxu0 0
    %3534 = vmatpush1.bf16.msra.mxu0 %v3467
    %3535 = vmatprep.subr.bf16.mxu0 0
    %3536 = vmatpush1.bf16.msra.mxu0 %v3468
    %3537 = vmatprep.subr.bf16.mxu0 0
    %3538 = vmatpush1.bf16.msra.mxu0 %v3469
    %3539 = vmatprep.subr.bf16.mxu0 0
    %3540 = vmatpush1.bf16.msra.mxu0 %v3470
    %3541 = vmatprep.subr.bf16.mxu0 0
    %3542 = vmatpush1.bf16.msra.mxu0 %v3471
    %3543 = vmatprep.subr.bf16.mxu0 0
    %3544 = vmatpush1.bf16.msra.mxu0 %v3472
    %3545 = vmatprep.subr.bf16.mxu0 0
    %3546 = vmatpush1.bf16.msra.mxu0 %v3473
    %3547 = vmatprep.subr.bf16.mxu0 0
    %3548 = vmatpush1.bf16.msra.mxu0 %v3474
    %3549 = vmatprep.subr.bf16.mxu0 0
    %3550 = vmatpush1.bf16.msra.mxu0 %v3475
    %3551 = vmatprep.subr.bf16.mxu0 0
    %3552 = vmatpush1.bf16.msra.mxu0 %v3476
    %3553 = vmatprep.mubr.bf16.mxu0 %v3323
    %3554 = vmatmul.mubr.bf16.gmra.mrb[0].mxu0 %v3322
    %v3555 = vpop.f32.mrb[0].mxu0
    %v3556 = vadd.f32 %v3387, %v3555
    %v3557 = vpop.f32.mrb[0].mxu0
    %v3558 = vpop.f32.mrb[0].mxu0
    %v3559 = vadd.f32 %v3387, %v3558
    %v3560 = vpop.f32.mrb[0].mxu0
    %3561 = vmatprep.mubr.bf16.mxu0 %v3326
    %3562 = vmatmul.mubr.bf16.gmra.mrb[0].mxu0 %v3325
    %v3563 = vpop.f32.mrb[0].mxu0
    %v3564 = vadd.f32 %v3387, %v3563
    %v3565 = vpop.f32.mrb[0].mxu0
    %v3566 = vpop.f32.mrb[0].mxu0
    %v3567 = vadd.f32 %v3387, %v3566
    %v3568 = vpop.f32.mrb[0].mxu0
    %3569 = vmatprep.mubr.bf16.mxu0 %v3329
    %3570 = vmatmul.mubr.bf16.gmra.mrb[0].mxu0 %v3328
    %v3571 = vpop.f32.mrb[0].mxu0
    %v3572 = vadd.f32 %v3387, %v3571
    %v3573 = vpop.f32.mrb[0].mxu0
    %v3574 = vpop.f32.mrb[0].mxu0
    %v3575 = vadd.f32 %v3387, %v3574
    %v3576 = vpop.f32.mrb[0].mxu0
    %3577 = vmatprep.mubr.bf16.mxu0 %v3332
    %3578 = vmatmul.mubr.bf16.gmra.mrb[0].mxu0 %v3331
    %v3579 = vpop.f32.mrb[0].mxu0
    %v3580 = vadd.f32 %v3387, %v3579
    %v3581 = vpop.f32.mrb[0].mxu0
    %v3582 = vpop.f32.mrb[0].mxu0
    %v3583 = vadd.f32 %v3387, %v3582
    %v3584 = vpop.f32.mrb[0].mxu0
    %3585 = vmatprep.mubr.bf16.mxu0 %v3335
    %3586 = vmatmul.mubr.bf16.gmra.mrb[0].mxu0 %v3334
    %v3587 = vpop.f32.mrb[0].mxu0
    %v3588 = vadd.f32 %v3387, %v3587
    %v3589 = vpop.f32.mrb[0].mxu0
    %v3590 = vpop.f32.mrb[0].mxu0
    %v3591 = vadd.f32 %v3387, %v3590
    %v3592 = vpop.f32.mrb[0].mxu0
    %3593 = vmatprep.mubr.bf16.mxu0 %v3338
    %3594 = vmatmul.mubr.bf16.gmra.mrb[0].mxu0 %v3337
    %v3595 = vpop.f32.mrb[0].mxu0
    %v3596 = vadd.f32 %v3387, %v3595
    %v3597 = vpop.f32.mrb[0].mxu0
    %v3598 = vpop.f32.mrb[0].mxu0
    %v3599 = vadd.f32 %v3387, %v3598
    %v3600 = vpop.f32.mrb[0].mxu0
    %3601 = vmatprep.mubr.bf16.mxu0 %v3341
    %3602 = vmatmul.mubr.bf16.gmra.mrb[0].mxu0 %v3340
    %v3603 = vpop.f32.mrb[0].mxu0
    %v3604 = vadd.f32 %v3387, %v3603
    %v3605 = vpop.f32.mrb[0].mxu0
    %v3606 = vpop.f32.mrb[0].mxu0
    %v3607 = vadd.f32 %v3387, %v3606
    %v3608 = vpop.f32.mrb[0].mxu0
    %3609 = vmatprep.mubr.bf16.mxu0 %v3344
    %3610 = vmatmul.mubr.bf16.gmra.mrb[0].mxu0 %v3343
    %v3611 = vpop.f32.mrb[0].mxu0
    %v3612 = vadd.f32 %v3387, %v3611
    %v3613 = vpop.f32.mrb[0].mxu0
    %v3614 = vpop.f32.mrb[0].mxu0
    %v3615 = vadd.f32 %v3387, %v3614
    %v3616 = vpop.f32.mrb[0].mxu0
    %3617 = vdwg.mxu0
    %3618 = vmatprep.subr.bf16.mxu0 0
    %3619 = vmatpush1.bf16.msra.mxu0 %v3477
    %3620 = vmatprep.subr.bf16.mxu0 0
    %3621 = vmatpush1.bf16.msra.mxu0 %v3478
    %3622 = vmatprep.subr.bf16.mxu0 0
    %3623 = vmatpush1.bf16.msra.mxu0 0
    %3624 = vmatprep.subr.bf16.mxu0 0
    %3625 = vmatpush1.bf16.msra.mxu0 0
    %3626 = vmatprep.subr.bf16.mxu0 0
    %3627 = vmatpush1.bf16.msra.mxu0 0
    %3628 = vmatprep.subr.bf16.mxu0 0
    %3629 = vmatpush1.bf16.msra.mxu0 0
    %3630 = vmatprep.subr.bf16.mxu0 0
    %3631 = vmatpush1.bf16.msra.mxu0 0
    %3632 = vmatprep.subr.bf16.mxu0 0
    %3633 = vmatpush1.bf16.msra.mxu0 0
    %3634 = vmatprep.subr.bf16.mxu0 0
    %3635 = vmatpush1.bf16.msra.mxu0 0
    %3636 = vmatprep.subr.bf16.mxu0 0
    %3637 = vmatpush1.bf16.msra.mxu0 0
    %3638 = vmatprep.subr.bf16.mxu0 0
    %3639 = vmatpush1.bf16.msra.mxu0 0
    %3640 = vmatprep.subr.bf16.mxu0 0
    %3641 = vmatpush1.bf16.msra.mxu0 0
    %3642 = vmatprep.subr.bf16.mxu0 0
    %3643 = vmatpush1.bf16.msra.mxu0 0
    %3644 = vmatprep.subr.bf16.mxu0 0
    %3645 = vmatpush1.bf16.msra.mxu0 0
    %3646 = vmatprep.subr.bf16.mxu0 0
    %3647 = vmatpush1.bf16.msra.mxu0 0
    %3648 = vmatprep.subr.bf16.mxu0 0
    %3649 = vmatpush1.bf16.msra.mxu0 0
    %3650 = vmatprep.mubr.bf16.mxu0 0
    %3651 = vmatmul.mubr.bf16.gmra.mrb[0].mxu0 %v3498
    %v3652 = vpop.f32.mrb[0].mxu0
    %v3653 = vadd.f32 %v3556, %v3652
    %v3654 = vpop.f32.mrb[0].mxu0
    %v3655 = vpop.f32.mrb[0].mxu0
    %v3656 = vadd.f32 %v3559, %v3655
    %v3657 = vpop.f32.mrb[0].mxu0
    %3658 = vmatprep.mubr.bf16.mxu0 0
    %3659 = vmatmul.mubr.bf16.gmra.mrb[0].mxu0 %v3501
    %v3660 = vpop.f32.mrb[0].mxu0
    %v3661 = vadd.f32 %v3564, %v3660
    %v3662 = vpop.f32.mrb[0].mxu0
    %v3663 = vpop.f32.mrb[0].mxu0
    %v3664 = vadd.f32 %v3567, %v3663
    %v3665 = vpop.f32.mrb[0].mxu0
    %3666 = vmatprep.mubr.bf16.mxu0 0
    %3667 = vmatmul.mubr.bf16.gmra.mrb[0].mxu0 %v3504
    %v3668 = vpop.f32.mrb[0].mxu0
    %v3669 = vadd.f32 %v3572, %v3668
    %v3670 = vpop.f32.mrb[0].mxu0
    %v3671 = vpop.f32.mrb[0].mxu0
    %v3672 = vadd.f32 %v3575, %v3671
    %v3673 = vpop.f32.mrb[0].mxu0
    %3674 = vmatprep.mubr.bf16.mxu0 0
    %3675 = vmatmul.mubr.bf16.gmra.mrb[0].mxu0 %v3507
    %v3676 = vpop.f32.mrb[0].mxu0
    %v3677 = vadd.f32 %v3580, %v3676
    %v3678 = vpop.f32.mrb[0].mxu0
    %v3679 = vpop.f32.mrb[0].mxu0
    %v3680 = vadd.f32 %v3583, %v3679
    %v3681 = vpop.f32.mrb[0].mxu0
    %3682 = vmatprep.mubr.bf16.mxu0 0
    %3683 = vmatmul.mubr.bf16.gmra.mrb[0].mxu0 %v3510
    %v3684 = vpop.f32.mrb[0].mxu0
    %v3685 = vadd.f32 %v3588, %v3684
    %v3686 = vpop.f32.mrb[0].mxu0
    %v3687 = vpop.f32.mrb[0].mxu0
    %v3688 = vadd.f32 %v3591, %v3687
    %v3689 = vpop.f32.mrb[0].mxu0
    %3690 = vmatprep.mubr.bf16.mxu0 0
    %3691 = vmatmul.mubr.bf16.gmra.mrb[0].mxu0 %v3513
    %v3692 = vpop.f32.mrb[0].mxu0
    %v3693 = vadd.f32 %v3596, %v3692
    %v3694 = vpop.f32.mrb[0].mxu0
    %v3695 = vpop.f32.mrb[0].mxu0
    %v3696 = vadd.f32 %v3599, %v3695
    %v3697 = vpop.f32.mrb[0].mxu0
    %3698 = vmatprep.mubr.bf16.mxu0 0
    %3699 = vmatmul.mubr.bf16.gmra.mrb[0].mxu0 %v3516
    %v3700 = vpop.f32.mrb[0].mxu0
    %v3701 = vadd.f32 %v3604, %v3700
    %v3702 = vpop.f32.mrb[0].mxu0
    %v3703 = vpop.f32.mrb[0].mxu0
    %v3704 = vadd.f32 %v3607, %v3703
    %v3705 = vpop.f32.mrb[0].mxu0
    %3706 = vmatprep.mubr.bf16.mxu0 0
    %3707 = vmatmul.mubr.bf16.gmra.mrb[0].mxu0 %v3519
    %v3708 = vpop.f32.mrb[0].mxu0
    %v3709 = vadd.f32 %v3612, %v3708
    %v3710 = vpop.f32.mrb[0].mxu0
    %v3711 = vpop.f32.mrb[0].mxu0
    %v3712 = vadd.f32 %v3615, %v3711
    %v3713 = vpop.f32.mrb[0].mxu0
    %3714 = vdwg.mxu0
    %v3715 = vmax.f32 %v3653, 0.0
    %v3716 = vmax.f32 %v3656, 0.0
    %v3717 = vmax.f32 %v3661, 0.0
    %v3718 = vmax.f32 %v3664, 0.0
    %v3719 = vmax.f32 %v3669, 0.0
    %v3720 = vmax.f32 %v3672, 0.0
    %v3721 = vmax.f32 %v3677, 0.0
    %v3722 = vmax.f32 %v3680, 0.0
    %v3723 = vmax.f32 %v3685, 0.0
    %v3724 = vmax.f32 %v3688, 0.0
    %v3725 = vmax.f32 %v3693, 0.0
    %v3726 = vmax.f32 %v3696, 0.0
    %v3727 = vmax.f32 %v3701, 0.0
    %v3728 = vmax.f32 %v3704, 0.0
    %v3729 = vmax.f32 %v3709, 0.0
    %v3730 = vmax.f32 %v3712, 0.0
    %v3731 = vmax.f32 %v3715, %v3716
    %v3732 = vmax.f32 %v3717, %v3718
    %v3733 = vmax.f32 %v3719, %v3720
    %v3734 = vmax.f32 %v3721, %v3722
    %v3735 = vmax.f32 %v3723, %v3724
    %v3736 = vmax.f32 %v3725, %v3726
    %v3737 = vmax.f32 %v3727, %v3728
    %v3738 = vmax.f32 %v3729, %v3730
    %v3747 = vcombine.high %v3731, %v3731
    %v3749 = vunpack.c.l.s4 1983009808
    %v3750 = vunpack.c.0.s8 %v3749
    %v3751 = vlaneseq
    %v3752 = vshrl.u32 %v3751, 7
    %v3753 = vsub.s32 %v3750, %v3752
    %v3754 = vrot.slane %v3731, %v3753
    %v3756 = vunpack.c.l.s4 1983009808
    %v3757 = vunpack.c.0.s8 %v3756
    %v3758 = vlaneseq
    %v3759 = vshrl.u32 %v3758, 7
    %v3760 = vsub.s32 %v3757, %v3759
    %v3761 = vrot.slane %v3747, %v3760
    %v3762 = vcombine.high %v3754, %v3754
    %v3763 = vcombine.high %v3761, %v3761
    %v3764 = vcombine.high %v3732, %v3732
    %v3766 = vunpack.c.l.s4 1983009808
    %v3767 = vunpack.c.0.s8 %v3766
    %v3768 = vlaneseq
    %v3769 = vshrl.u32 %v3768, 7
    %v3770 = vsub.s32 %v3767, %v3769
    %v3771 = vrot.slane %v3732, %v3770
    %v3773 = vunpack.c.l.s4 1983009808
    %v3774 = vunpack.c.0.s8 %v3773
    %v3775 = vlaneseq
    %v3776 = vshrl.u32 %v3775, 7
    %v3777 = vsub.s32 %v3774, %v3776
    %v3778 = vrot.slane %v3764, %v3777
    %v3779 = vcombine.high %v3771, %v3771
    %v3780 = vcombine.high %v3778, %v3778
    %v3781 = vcombine.high %v3733, %v3733
    %v3783 = vunpack.c.l.s4 1983009808
    %v3784 = vunpack.c.0.s8 %v3783
    %v3785 = vlaneseq
    %v3786 = vshrl.u32 %v3785, 7
    %v3787 = vsub.s32 %v3784, %v3786
    %v3788 = vrot.slane %v3733, %v3787
    %v3790 = vunpack.c.l.s4 1983009808
    %v3791 = vunpack.c.0.s8 %v3790
    %v3792 = vlaneseq
    %v3793 = vshrl.u32 %v3792, 7
    %v3794 = vsub.s32 %v3791, %v3793
    %v3795 = vrot.slane %v3781, %v3794
    %v3796 = vcombine.high %v3788, %v3788
    %v3797 = vcombine.high %v3795, %v3795
    %v3798 = vcombine.high %v3734, %v3734
    %v3800 = vunpack.c.l.s4 1983009808
    %v3801 = vunpack.c.0.s8 %v3800
    %v3802 = vlaneseq
    %v3803 = vshrl.u32 %v3802, 7
    %v3804 = vsub.s32 %v3801, %v3803
    %v3805 = vrot.slane %v3734, %v3804
    %v3807 = vunpack.c.l.s4 1983009808
    %v3808 = vunpack.c.0.s8 %v3807
    %v3809 = vlaneseq
    %v3810 = vshrl.u32 %v3809, 7
    %v3811 = vsub.s32 %v3808, %v3810
    %v3812 = vrot.slane %v3798, %v3811
    %v3813 = vcombine.high %v3805, %v3805
    %v3814 = vcombine.high %v3812, %v3812
    %v3815 = vcombine.high %v3735, %v3735
    %v3817 = vunpack.c.l.s4 1983009808
    %v3818 = vunpack.c.0.s8 %v3817
    %v3819 = vlaneseq
    %v3820 = vshrl.u32 %v3819, 7
    %v3821 = vsub.s32 %v3818, %v3820
    %v3822 = vrot.slane %v3735, %v3821
    %v3824 = vunpack.c.l.s4 1983009808
    %v3825 = vunpack.c.0.s8 %v3824
    %v3826 = vlaneseq
    %v3827 = vshrl.u32 %v3826, 7
    %v3828 = vsub.s32 %v3825, %v3827
    %v3829 = vrot.slane %v3815, %v3828
    %v3830 = vcombine.high %v3822, %v3822
    %v3831 = vcombine.high %v3829, %v3829
    %v3832 = vcombine.high %v3736, %v3736
    %v3834 = vunpack.c.l.s4 1983009808
    %v3835 = vunpack.c.0.s8 %v3834
    %v3836 = vlaneseq
    %v3837 = vshrl.u32 %v3836, 7
    %v3838 = vsub.s32 %v3835, %v3837
    %v3839 = vrot.slane %v3736, %v3838
    %v3841 = vunpack.c.l.s4 1983009808
    %v3842 = vunpack.c.0.s8 %v3841
    %v3843 = vlaneseq
    %v3844 = vshrl.u32 %v3843, 7
    %v3845 = vsub.s32 %v3842, %v3844
    %v3846 = vrot.slane %v3832, %v3845
    %v3847 = vcombine.high %v3839, %v3839
    %v3848 = vcombine.high %v3846, %v3846
    %v3849 = vcombine.high %v3737, %v3737
    %v3851 = vunpack.c.l.s4 1983009808
    %v3852 = vunpack.c.0.s8 %v3851
    %v3853 = vlaneseq
    %v3854 = vshrl.u32 %v3853, 7
    %v3855 = vsub.s32 %v3852, %v3854
    %v3856 = vrot.slane %v3737, %v3855
    %v3858 = vunpack.c.l.s4 1983009808
    %v3859 = vunpack.c.0.s8 %v3858
    %v3860 = vlaneseq
    %v3861 = vshrl.u32 %v3860, 7
    %v3862 = vsub.s32 %v3859, %v3861
    %v3863 = vrot.slane %v3849, %v3862
    %v3864 = vcombine.high %v3856, %v3856
    %v3865 = vcombine.high %v3863, %v3863
    %v3866 = vcombine.high %v3738, %v3738
    %v3868 = vunpack.c.l.s4 1983009808
    %v3869 = vunpack.c.0.s8 %v3868
    %v3870 = vlaneseq
    %v3871 = vshrl.u32 %v3870, 7
    %v3872 = vsub.s32 %v3869, %v3871
    %v3873 = vrot.slane %v3738, %v3872
    %v3875 = vunpack.c.l.s4 1983009808
    %v3876 = vunpack.c.0.s8 %v3875
    %v3877 = vlaneseq
    %v3878 = vshrl.u32 %v3877, 7
    %v3879 = vsub.s32 %v3876, %v3878
    %v3880 = vrot.slane %v3866, %v3879
    %v3881 = vcombine.high %v3873, %v3873
    %v3882 = vcombine.high %v3880, %v3880
    %vm3915 = vcmask 517120
    %v3916 = vsel %vm3915, %v3754, -inf
    %v3917 = vrot.slane %v3916, 4
    %v3918 = vmax.f32 %v3916, %v3917
    %v3919 = vrot.slane %v3918, 2
    %v3920 = vmax.f32 %v3918, %v3919
    %v3921 = vrot.slane %v3920, 1
    %v3922 = vmax.f32 %v3920, %v3921
    %v3923 = vsel %vm3915, %v3762, -inf
    %v3924 = vrot.slane %v3923, 4
    %v3925 = vmax.f32 %v3923, %v3924
    %v3926 = vrot.slane %v3925, 2
    %v3927 = vmax.f32 %v3925, %v3926
    %v3928 = vrot.slane %v3927, 1
    %v3929 = vmax.f32 %v3927, %v3928
    %v3930 = vsel %vm3915, %v3761, -inf
    %v3931 = vrot.slane %v3930, 4
    %v3932 = vmax.f32 %v3930, %v3931
    %v3933 = vrot.slane %v3932, 2
    %v3934 = vmax.f32 %v3932, %v3933
    %v3935 = vrot.slane %v3934, 1
    %v3936 = vmax.f32 %v3934, %v3935
    %v3937 = vsel %vm3915, %v3763, -inf
    %v3938 = vrot.slane %v3937, 4
    %v3939 = vmax.f32 %v3937, %v3938
    %v3940 = vrot.slane %v3939, 2
    %v3941 = vmax.f32 %v3939, %v3940
    %v3942 = vrot.slane %v3941, 1
    %v3943 = vmax.f32 %v3941, %v3942
    %v3944 = vsel %vm3915, %v3771, -inf
    %v3945 = vrot.slane %v3944, 4
    %v3946 = vmax.f32 %v3944, %v3945
    %v3947 = vrot.slane %v3946, 2
    %v3948 = vmax.f32 %v3946, %v3947
    %v3949 = vrot.slane %v3948, 1
    %v3950 = vmax.f32 %v3948, %v3949
    %v3951 = vsel %vm3915, %v3779, -inf
    %v3952 = vrot.slane %v3951, 4
    %v3953 = vmax.f32 %v3951, %v3952
    %v3954 = vrot.slane %v3953, 2
    %v3955 = vmax.f32 %v3953, %v3954
    %v3956 = vrot.slane %v3955, 1
    %v3957 = vmax.f32 %v3955, %v3956
    %v3958 = vsel %vm3915, %v3778, -inf
    %v3959 = vrot.slane %v3958, 4
    %v3960 = vmax.f32 %v3958, %v3959
    %v3961 = vrot.slane %v3960, 2
    %v3962 = vmax.f32 %v3960, %v3961
    %v3963 = vrot.slane %v3962, 1
    %v3964 = vmax.f32 %v3962, %v3963
    %v3965 = vsel %vm3915, %v3780, -inf
    %v3966 = vrot.slane %v3965, 4
    %v3967 = vmax.f32 %v3965, %v3966
    %v3968 = vrot.slane %v3967, 2
    %v3969 = vmax.f32 %v3967, %v3968
    %v3970 = vrot.slane %v3969, 1
    %v3971 = vmax.f32 %v3969, %v3970
    %v3972 = vsel %vm3915, %v3788, -inf
    %v3973 = vrot.slane %v3972, 4
    %v3974 = vmax.f32 %v3972, %v3973
    %v3975 = vrot.slane %v3974, 2
    %v3976 = vmax.f32 %v3974, %v3975
    %v3977 = vrot.slane %v3976, 1
    %v3978 = vmax.f32 %v3976, %v3977
    %v3979 = vsel %vm3915, %v3796, -inf
    %v3980 = vrot.slane %v3979, 4
    %v3981 = vmax.f32 %v3979, %v3980
    %v3982 = vrot.slane %v3981, 2
    %v3983 = vmax.f32 %v3981, %v3982
    %v3984 = vrot.slane %v3983, 1
    %v3985 = vmax.f32 %v3983, %v3984
    %v3986 = vsel %vm3915, %v3795, -inf
    %v3987 = vrot.slane %v3986, 4
    %v3988 = vmax.f32 %v3986, %v3987
    %v3989 = vrot.slane %v3988, 2
    %v3990 = vmax.f32 %v3988, %v3989
    %v3991 = vrot.slane %v3990, 1
    %v3992 = vmax.f32 %v3990, %v3991
    %v3993 = vsel %vm3915, %v3797, -inf
    %v3994 = vrot.slane %v3993, 4
    %v3995 = vmax.f32 %v3993, %v3994
    %v3996 = vrot.slane %v3995, 2
    %v3997 = vmax.f32 %v3995, %v3996
    %v3998 = vrot.slane %v3997, 1
    %v3999 = vmax.f32 %v3997, %v3998
    %v4000 = vsel %vm3915, %v3805, -inf
    %v4001 = vrot.slane %v4000, 4
    %v4002 = vmax.f32 %v4000, %v4001
    %v4003 = vrot.slane %v4002, 2
    %v4004 = vmax.f32 %v4002, %v4003
    %v4005 = vrot.slane %v4004, 1
    %v4006 = vmax.f32 %v4004, %v4005
    %v4007 = vsel %vm3915, %v3813, -inf
    %v4008 = vrot.slane %v4007, 4
    %v4009 = vmax.f32 %v4007, %v4008
    %v4010 = vrot.slane %v4009, 2
    %v4011 = vmax.f32 %v4009, %v4010
    %v4012 = vrot.slane %v4011, 1
    %v4013 = vmax.f32 %v4011, %v4012
    %v4014 = vsel %vm3915, %v3812, -inf
    %v4015 = vrot.slane %v4014, 4
    %v4016 = vmax.f32 %v4014, %v4015
    %v4017 = vrot.slane %v4016, 2
    %v4018 = vmax.f32 %v4016, %v4017
    %v4019 = vrot.slane %v4018, 1
    %v4020 = vmax.f32 %v4018, %v4019
    %v4021 = vsel %vm3915, %v3814, -inf
    %v4022 = vrot.slane %v4021, 4
    %v4023 = vmax.f32 %v4021, %v4022
    %v4024 = vrot.slane %v4023, 2
    %v4025 = vmax.f32 %v4023, %v4024
    %v4026 = vrot.slane %v4025, 1
    %v4027 = vmax.f32 %v4025, %v4026
    %v4028 = vsel %vm3915, %v3822, -inf
    %v4029 = vrot.slane %v4028, 4
    %v4030 = vmax.f32 %v4028, %v4029
    %v4031 = vrot.slane %v4030, 2
    %v4032 = vmax.f32 %v4030, %v4031
    %v4033 = vrot.slane %v4032, 1
    %v4034 = vmax.f32 %v4032, %v4033
    %v4035 = vsel %vm3915, %v3830, -inf
    %v4036 = vrot.slane %v4035, 4
    %v4037 = vmax.f32 %v4035, %v4036
    %v4038 = vrot.slane %v4037, 2
    %v4039 = vmax.f32 %v4037, %v4038
    %v4040 = vrot.slane %v4039, 1
    %v4041 = vmax.f32 %v4039, %v4040
    %v4042 = vsel %vm3915, %v3829, -inf
    %v4043 = vrot.slane %v4042, 4
    %v4044 = vmax.f32 %v4042, %v4043
    %v4045 = vrot.slane %v4044, 2
    %v4046 = vmax.f32 %v4044, %v4045
    %v4047 = vrot.slane %v4046, 1
    %v4048 = vmax.f32 %v4046, %v4047
    %v4049 = vsel %vm3915, %v3831, -inf
    %v4050 = vrot.slane %v4049, 4
    %v4051 = vmax.f32 %v4049, %v4050
    %v4052 = vrot.slane %v4051, 2
    %v4053 = vmax.f32 %v4051, %v4052
    %v4054 = vrot.slane %v4053, 1
    %v4055 = vmax.f32 %v4053, %v4054
    %v4056 = vsel %vm3915, %v3839, -inf
    %v4057 = vrot.slane %v4056, 4
    %v4058 = vmax.f32 %v4056, %v4057
    %v4059 = vrot.slane %v4058, 2
    %v4060 = vmax.f32 %v4058, %v4059
    %v4061 = vrot.slane %v4060, 1
    %v4062 = vmax.f32 %v4060, %v4061
    %v4063 = vsel %vm3915, %v3847, -inf
    %v4064 = vrot.slane %v4063, 4
    %v4065 = vmax.f32 %v4063, %v4064
    %v4066 = vrot.slane %v4065, 2
    %v4067 = vmax.f32 %v4065, %v4066
    %v4068 = vrot.slane %v4067, 1
    %v4069 = vmax.f32 %v4067, %v4068
    %v4070 = vsel %vm3915, %v3846, -inf
    %v4071 = vrot.slane %v4070, 4
    %v4072 = vmax.f32 %v4070, %v4071
    %v4073 = vrot.slane %v4072, 2
    %v4074 = vmax.f32 %v4072, %v4073
    %v4075 = vrot.slane %v4074, 1
    %v4076 = vmax.f32 %v4074, %v4075
    %v4077 = vsel %vm3915, %v3848, -inf
    %v4078 = vrot.slane %v4077, 4
    %v4079 = vmax.f32 %v4077, %v4078
    %v4080 = vrot.slane %v4079, 2
    %v4081 = vmax.f32 %v4079, %v4080
    %v4082 = vrot.slane %v4081, 1
    %v4083 = vmax.f32 %v4081, %v4082
    %v4084 = vsel %vm3915, %v3856, -inf
    %v4085 = vrot.slane %v4084, 4
    %v4086 = vmax.f32 %v4084, %v4085
    %v4087 = vrot.slane %v4086, 2
    %v4088 = vmax.f32 %v4086, %v4087
    %v4089 = vrot.slane %v4088, 1
    %v4090 = vmax.f32 %v4088, %v4089
    %v4091 = vsel %vm3915, %v3864, -inf
    %v4092 = vrot.slane %v4091, 4
    %v4093 = vmax.f32 %v4091, %v4092
    %v4094 = vrot.slane %v4093, 2
    %v4095 = vmax.f32 %v4093, %v4094
    %v4096 = vrot.slane %v4095, 1
    %v4097 = vmax.f32 %v4095, %v4096
    %v4098 = vsel %vm3915, %v3863, -inf
    %v4099 = vrot.slane %v4098, 4
    %v4100 = vmax.f32 %v4098, %v4099
    %v4101 = vrot.slane %v4100, 2
    %v4102 = vmax.f32 %v4100, %v4101
    %v4103 = vrot.slane %v4102, 1
    %v4104 = vmax.f32 %v4102, %v4103
    %v4105 = vsel %vm3915, %v3865, -inf
    %v4106 = vrot.slane %v4105, 4
    %v4107 = vmax.f32 %v4105, %v4106
    %v4108 = vrot.slane %v4107, 2
    %v4109 = vmax.f32 %v4107, %v4108
    %v4110 = vrot.slane %v4109, 1
    %v4111 = vmax.f32 %v4109, %v4110
    %v4112 = vsel %vm3915, %v3873, -inf
    %v4113 = vrot.slane %v4112, 4
    %v4114 = vmax.f32 %v4112, %v4113
    %v4115 = vrot.slane %v4114, 2
    %v4116 = vmax.f32 %v4114, %v4115
    %v4117 = vrot.slane %v4116, 1
    %v4118 = vmax.f32 %v4116, %v4117
    %v4119 = vsel %vm3915, %v3881, -inf
    %v4120 = vrot.slane %v4119, 4
    %v4121 = vmax.f32 %v4119, %v4120
    %v4122 = vrot.slane %v4121, 2
    %v4123 = vmax.f32 %v4121, %v4122
    %v4124 = vrot.slane %v4123, 1
    %v4125 = vmax.f32 %v4123, %v4124
    %v4126 = vsel %vm3915, %v3880, -inf
    %v4127 = vrot.slane %v4126, 4
    %v4128 = vmax.f32 %v4126, %v4127
    %v4129 = vrot.slane %v4128, 2
    %v4130 = vmax.f32 %v4128, %v4129
    %v4131 = vrot.slane %v4130, 1
    %v4132 = vmax.f32 %v4130, %v4131
    %v4133 = vsel %vm3915, %v3882, -inf
    %v4134 = vrot.slane %v4133, 4
    %v4135 = vmax.f32 %v4133, %v4134
    %v4136 = vrot.slane %v4135, 2
    %v4137 = vmax.f32 %v4135, %v4136
    %v4138 = vrot.slane %v4137, 1
    %v4139 = vmax.f32 %v4137, %v4138
    %vm4140 = vcmask 521216
    %4141 = vst.msk [vmem:[#allocation3] sm:$0x3f] %vm4140, 0.0
    %4142 = vst.msk [vmem:[#allocation3 + $0x30] sm:$0x3f] %vm4140, 0.0
    %s4143 = scalar_lea.vmem [#allocation3], 40
    %4144 = vst.msk [vmem:[%s4143] sm:$0x3f] %vm4140, 0.0
    %4145 = vst.msk [vmem:[%s4143 + $0x30] sm:$0x3f] %vm4140, 0.0
    %vm4146 = vcmask 516096
    %4147 = vst.msk [vmem:[#allocation3] sm:$0x1] %vm4146, 0.0
    %4148 = vst.msk [vmem:[#allocation3 + $0x8] sm:$0x1] %vm4146, 0.0
    %4149 = vst.msk [vmem:[#allocation3 + $0x10] sm:$0x1] %vm4146, 0.0
    %4150 = vst.msk [vmem:[#allocation3 + $0x18] sm:$0x1] %vm4146, 0.0
    %4151 = vst.msk [vmem:[#allocation3 + $0x20] sm:$0x1] %vm4146, 0.0
    %4152 = vst.msk [vmem:[#allocation3 + $0x28] sm:$0x1] %vm4146, 0.0
    %4153 = vst.msk [vmem:[#allocation3 + $0x30] sm:$0x1] %vm4146, 0.0
    %4154 = vst.msk [vmem:[#allocation3 + $0x38] sm:$0x1] %vm4146, 0.0
    %4155 = vst.msk [vmem:[#allocation3 + $0x40] sm:$0x1] %vm4146, 0.0
    %4156 = vst.msk [vmem:[#allocation3 + $0x48] sm:$0x1] %vm4146, 0.0
    %4157 = vst.msk [vmem:[#allocation3 + $0x50] sm:$0x1] %vm4146, 0.0
    %4158 = vst.msk [vmem:[#allocation3 + $0x58] sm:$0x1] %vm4146, 0.0
    %4159 = vst.msk [vmem:[#allocation3 + $0x5] sm:$0x1] %vm4146, 0.0
    %4160 = vst.msk [vmem:[#allocation3 + $0xd] sm:$0x1] %vm4146, 0.0
    %4161 = vst.msk [vmem:[#allocation3 + $0x15] sm:$0x1] %vm4146, 0.0
    %4162 = vst.msk [vmem:[#allocation3 + $0x1d] sm:$0x1] %vm4146, 0.0
    %4163 = vst.msk [vmem:[#allocation3 + $0x25] sm:$0x1] %vm4146, 0.0
    %4164 = vst.msk [vmem:[#allocation3 + $0x2d] sm:$0x1] %vm4146, 0.0
    %4165 = vst.msk [vmem:[#allocation3 + $0x35] sm:$0x1] %vm4146, 0.0
    %4166 = vst.msk [vmem:[#allocation3 + $0x3d] sm:$0x1] %vm4146, 0.0
    %4167 = vst.msk [vmem:[#allocation3 + $0x45] sm:$0x1] %vm4146, 0.0
    %4168 = vst.msk [vmem:[#allocation3 + $0x4d] sm:$0x1] %vm4146, 0.0
    %4169 = vst.msk [vmem:[#allocation3 + $0x55] sm:$0x1] %vm4146, 0.0
    %4170 = vst.msk [vmem:[#allocation3 + $0x5d] sm:$0x1] %vm4146, 0.0
    %v4203 = vsel %vm2543, %v3929, %v3922
    %v4204 = vsel %vm2545, %v3936, %v4203
    %v4205 = vsel %vm2547, %v3943, %v4204
    %v4206 = vsel %vm2543, %v3957, %v3950
    %v4207 = vsel %vm2545, %v3964, %v4206
    %v4208 = vsel %vm2547, %v3971, %v4207
    %v4209 = vsel %vm2543, %v3985, %v3978
    %v4210 = vsel %vm2545, %v3992, %v4209
    %v4211 = vsel %vm2547, %v3999, %v4210
    %v4212 = vsel %vm2543, %v4013, %v4006
    %v4213 = vsel %vm2545, %v4020, %v4212
    %v4214 = vsel %vm2547, %v4027, %v4213
    %v4215 = vsel %vm2543, %v4041, %v4034
    %v4216 = vsel %vm2545, %v4048, %v4215
    %v4217 = vsel %vm2547, %v4055, %v4216
    %v4218 = vsel %vm2543, %v4069, %v4062
    %v4219 = vsel %vm2545, %v4076, %v4218
    %v4220 = vsel %vm2547, %v4083, %v4219
    %v4221 = vsel %vm2543, %v4097, %v4090
    %v4222 = vsel %vm2545, %v4104, %v4221
    %v4223 = vsel %vm2547, %v4111, %v4222
    %v4224 = vsel %vm2543, %v4125, %v4118
    %v4225 = vsel %vm2545, %v4132, %v4224
    %v4226 = vsel %vm2547, %v4139, %v4225
    %s4235 = scalar_lea.vmem [#allocation3], 8
    %vm4236 = vcmask 519168
    %4237 = vst.msk [vmem:[%s4235 + $0x1] sm:$0xf] %vm4236, %v4205
    %4238 = vst.msk [vmem:[%s4235 + $0x9] sm:$0xf] %vm4236, %v4208
    %4239 = vst.msk [vmem:[%s4235 + $0x11] sm:$0xf] %vm4236, %v4211
    %4240 = vst.msk [vmem:[%s4235 + $0x19] sm:$0xf] %vm4236, %v4214
    %4241 = vst.msk [vmem:[%s4235 + $0x31] sm:$0xf] %vm4236, %v4217
    %4242 = vst.msk [vmem:[%s4235 + $0x39] sm:$0xf] %vm4236, %v4220
    %4243 = vst.msk [vmem:[%s4235 + $0x41] sm:$0xf] %vm4236, %v4223
    %4244 = vst.msk [vmem:[%s4235 + $0x49] sm:$0xf] %vm4236, %v4226
    %v4245 = vld [vmem:[#allocation3] sm:$0xf]
    %v4246 = vld [vmem:[#allocation3 + $0x8] sm:$0xf]
    %v4247 = vld [vmem:[#allocation3 + $0x10] sm:$0xf]
    %v4248 = vld [vmem:[#allocation3 + $0x18] sm:$0xf]
    %v4249 = vld [vmem:[#allocation3 + $0x30] sm:$0xf]
    %v4250 = vld [vmem:[#allocation3 + $0x38] sm:$0xf]
    %v4251 = vld [vmem:[#allocation3 + $0x40] sm:$0xf]
    %v4252 = vld [vmem:[#allocation3 + $0x48] sm:$0xf]
    %v4253 = vld [vmem:[#allocation3 + $0x1] sm:$0xf]
    %v4254 = vld [vmem:[#allocation3 + $0x9] sm:$0xf]
    %v4255 = vld [vmem:[#allocation3 + $0x11] sm:$0xf]
    %v4256 = vld [vmem:[#allocation3 + $0x19] sm:$0xf]
    %v4257 = vld [vmem:[#allocation3 + $0x31] sm:$0xf]
    %v4258 = vld [vmem:[#allocation3 + $0x39] sm:$0xf]
    %v4259 = vld [vmem:[#allocation3 + $0x41] sm:$0xf]
    %v4260 = vld [vmem:[#allocation3 + $0x49] sm:$0xf]
    %v4261 = vld [vmem:[#allocation3 + $0x2] sm:$0xf]
    %v4262 = vld [vmem:[#allocation3 + $0xa] sm:$0xf]
    %v4263 = vld [vmem:[#allocation3 + $0x12] sm:$0xf]
    %v4264 = vld [vmem:[#allocation3 + $0x1a] sm:$0xf]
    %v4265 = vld [vmem:[#allocation3 + $0x32] sm:$0xf]
    %v4266 = vld [vmem:[#allocation3 + $0x3a] sm:$0xf]
    %v4267 = vld [vmem:[#allocation3 + $0x42] sm:$0xf]
    %v4268 = vld [vmem:[#allocation3 + $0x4a] sm:$0xf]
    %v4269 = vld [vmem:[%s4235] sm:$0xf]
    %v4270 = vld [vmem:[%s4235 + $0x8] sm:$0xf]
    %v4271 = vld [vmem:[%s4235 + $0x10] sm:$0xf]
    %v4272 = vld [vmem:[%s4235 + $0x18] sm:$0xf]
    %v4273 = vld [vmem:[%s4235 + $0x30] sm:$0xf]
    %v4274 = vld [vmem:[%s4235 + $0x38] sm:$0xf]
    %v4275 = vld [vmem:[%s4235 + $0x40] sm:$0xf]
    %v4276 = vld [vmem:[%s4235 + $0x48] sm:$0xf]
    %v4277 = vld [vmem:[%s4235 + $0x1] sm:$0xf]
    %v4278 = vld [vmem:[%s4235 + $0x9] sm:$0xf]
    %v4279 = vld [vmem:[%s4235 + $0x11] sm:$0xf]
    %v4280 = vld [vmem:[%s4235 + $0x19] sm:$0xf]
    %v4281 = vld [vmem:[%s4235 + $0x31] sm:$0xf]
    %v4282 = vld [vmem:[%s4235 + $0x39] sm:$0xf]
    %v4283 = vld [vmem:[%s4235 + $0x41] sm:$0xf]
    %v4284 = vld [vmem:[%s4235 + $0x49] sm:$0xf]
    %v4285 = vld [vmem:[%s4235 + $0x2] sm:$0xf]
    %v4286 = vld [vmem:[%s4235 + $0xa] sm:$0xf]
    %v4287 = vld [vmem:[%s4235 + $0x12] sm:$0xf]
    %v4288 = vld [vmem:[%s4235 + $0x1a] sm:$0xf]
    %v4289 = vld [vmem:[%s4235 + $0x32] sm:$0xf]
    %v4290 = vld [vmem:[%s4235 + $0x3a] sm:$0xf]
    %v4291 = vld [vmem:[%s4235 + $0x42] sm:$0xf]
    %v4292 = vld [vmem:[%s4235 + $0x4a] sm:$0xf]
    %s4293 = scalar_lea.vmem [#allocation3], 16
    %v4294 = vld [vmem:[%s4293] sm:$0xf]
    %v4295 = vld [vmem:[%s4293 + $0x8] sm:$0xf]
    %v4296 = vld [vmem:[%s4293 + $0x10] sm:$0xf]
    %v4297 = vld [vmem:[%s4293 + $0x18] sm:$0xf]
    %v4298 = vld [vmem:[%s4293 + $0x30] sm:$0xf]
    %v4299 = vld [vmem:[%s4293 + $0x38] sm:$0xf]
    %v4300 = vld [vmem:[%s4293 + $0x40] sm:$0xf]
    %v4301 = vld [vmem:[%s4293 + $0x48] sm:$0xf]
    %v4302 = vld [vmem:[%s4293 + $0x1] sm:$0xf]
    %v4303 = vld [vmem:[%s4293 + $0x9] sm:$0xf]
    %v4304 = vld [vmem:[%s4293 + $0x11] sm:$0xf]
    %v4305 = vld [vmem:[%s4293 + $0x19] sm:$0xf]
    %v4306 = vld [vmem:[%s4293 + $0x31] sm:$0xf]
    %v4307 = vld [vmem:[%s4293 + $0x39] sm:$0xf]
    %v4308 = vld [vmem:[%s4293 + $0x41] sm:$0xf]
    %v4309 = vld [vmem:[%s4293 + $0x49] sm:$0xf]
    %v4310 = vld [vmem:[%s4293 + $0x2] sm:$0xf]
    %v4311 = vld [vmem:[%s4293 + $0xa] sm:$0xf]
    %v4312 = vld [vmem:[%s4293 + $0x12] sm:$0xf]
    %v4313 = vld [vmem:[%s4293 + $0x1a] sm:$0xf]
    %v4314 = vld [vmem:[%s4293 + $0x32] sm:$0xf]
    %v4315 = vld [vmem:[%s4293 + $0x3a] sm:$0xf]
    %v4316 = vld [vmem:[%s4293 + $0x42] sm:$0xf]
    %v4317 = vld [vmem:[%s4293 + $0x4a] sm:$0xf]
    %v4326 = vcombine.low %v4245, %v4246
    %v4327 = vcombine.low %v4247, %v4248
    %v4328 = vcombine.low %v4249, %v4250
    %v4329 = vcombine.low %v4251, %v4252
    %v4342 = vcombine.low %v4253, %v4254
    %v4343 = vcombine.low %v4255, %v4256
    %v4344 = vcombine.low %v4257, %v4258
    %v4345 = vcombine.low %v4259, %v4260
    %4346 = vrot.lane.b32.xlu0 %v4342, 64
    %v4347 = vpop.permute.xlu0 %4346
    %4348 = vrot.lane.b32.xlu0 %v4343, 64
    %v4349 = vpop.permute.xlu0 %4348
    %4350 = vrot.lane.b32.xlu0 %v4344, 64
    %v4351 = vpop.permute.xlu0 %4350
    %4352 = vrot.lane.b32.xlu0 %v4345, 64
    %v4353 = vpop.permute.xlu0 %4352
    %v4366 = vcombine.low %v4261, %v4262
    %v4367 = vcombine.low %v4263, %v4264
    %v4368 = vcombine.low %v4265, %v4266
    %v4369 = vcombine.low %v4267, %v4268
    %v4382 = vcombine.low %v4269, %v4270
    %v4383 = vcombine.low %v4271, %v4272
    %v4384 = vcombine.low %v4273, %v4274
    %v4385 = vcombine.low %v4275, %v4276
    %4386 = vrot.lane.b32.xlu0 %v4382, 64
    %v4387 = vpop.permute.xlu0 %4386
    %4388 = vrot.lane.b32.xlu0 %v4383, 64
    %v4389 = vpop.permute.xlu0 %4388
    %4390 = vrot.lane.b32.xlu0 %v4384, 64
    %v4391 = vpop.permute.xlu0 %4390
    %4392 = vrot.lane.b32.xlu0 %v4385, 64
    %v4393 = vpop.permute.xlu0 %4392
    %v4406 = vcombine.low %v4277, %v4278
    %v4407 = vcombine.low %v4279, %v4280
    %v4408 = vcombine.low %v4281, %v4282
    %v4409 = vcombine.low %v4283, %v4284
    %v4422 = vcombine.low %v4285, %v4286
    %v4423 = vcombine.low %v4287, %v4288
    %v4424 = vcombine.low %v4289, %v4290
    %v4425 = vcombine.low %v4291, %v4292
    %4426 = vrot.lane.b32.xlu0 %v4422, 64
    %v4427 = vpop.permute.xlu0 %4426
    %4428 = vrot.lane.b32.xlu0 %v4423, 64
    %v4429 = vpop.permute.xlu0 %4428
    %4430 = vrot.lane.b32.xlu0 %v4424, 64
    %v4431 = vpop.permute.xlu0 %4430
    %4432 = vrot.lane.b32.xlu0 %v4425, 64
    %v4433 = vpop.permute.xlu0 %4432
    %v4446 = vcombine.low %v4294, %v4295
    %v4447 = vcombine.low %v4296, %v4297
    %v4448 = vcombine.low %v4298, %v4299
    %v4449 = vcombine.low %v4300, %v4301
    %v4462 = vcombine.low %v4302, %v4303
    %v4463 = vcombine.low %v4304, %v4305
    %v4464 = vcombine.low %v4306, %v4307
    %v4465 = vcombine.low %v4308, %v4309
    %4466 = vrot.lane.b32.xlu0 %v4462, 64
    %v4467 = vpop.permute.xlu0 %4466
    %4468 = vrot.lane.b32.xlu0 %v4463, 64
    %v4469 = vpop.permute.xlu0 %4468
    %4470 = vrot.lane.b32.xlu0 %v4464, 64
    %v4471 = vpop.permute.xlu0 %4470
    %4472 = vrot.lane.b32.xlu0 %v4465, 64
    %v4473 = vpop.permute.xlu0 %4472
    %v4486 = vcombine.low %v4310, %v4311
    %v4487 = vcombine.low %v4312, %v4313
    %v4488 = vcombine.low %v4314, %v4315
    %v4489 = vcombine.low %v4316, %v4317
    %v4494 = vsel %vm3240, %v4326, %v4347
    %v4495 = vsel %vm3240, %v4327, %v4349
    %v4496 = vsel %vm3240, %v4328, %v4351
    %v4497 = vsel %vm3240, %v4329, %v4353
    %v4498 = vsel %vm3240, %v4366, %v4387
    %v4499 = vsel %vm3240, %v4367, %v4389
    %v4500 = vsel %vm3240, %v4368, %v4391
    %v4501 = vsel %vm3240, %v4369, %v4393
    %v4502 = vsel %vm3240, %v4406, %v4427
    %v4503 = vsel %vm3240, %v4407, %v4429
    %v4504 = vsel %vm3240, %v4408, %v4431
    %v4505 = vsel %vm3240, %v4409, %v4433
    %v4506 = vsel %vm3240, %v4446, %v4467
    %v4507 = vsel %vm3240, %v4447, %v4469
    %v4508 = vsel %vm3240, %v4448, %v4471
    %v4509 = vsel %vm3240, %v4449, %v4473
    %v4510 = vpack.c.bf16 %v4495, %v4494
    %v4511 = vpack.c.bf16 %v4499, %v4498
    %v4512 = vpack.c.bf16 %v4503, %v4502
    %v4513 = vpack.c.bf16 %v4507, %v4506
    %v4514 = vpack.c.bf16 %v4487, %v4486
    %v4515 = vpack.c.bf16 %v4497, %v4496
    %v4516 = vpack.c.bf16 %v4501, %v4500
    %v4517 = vpack.c.bf16 %v4505, %v4504
    %v4518 = vpack.c.bf16 %v4509, %v4508
    %v4519 = vpack.c.bf16 %v4489, %v4488
    %v4520 = vld [vmem:[%s5] sm:$0xf]
    %v4521 = vld [vmem:[%s5 + $0x4] sm:$0xf]
    %v4522 = vld [vmem:[%s5 + $0x8] sm:$0xf]
    %v4523 = vld [vmem:[%s5 + $0xc] sm:$0xf]
    %v4524 = vld [vmem:[%s5 + $0x10] sm:$0xf]
    %v4525 = vld [vmem:[%s5 + $0x14] sm:$0xf]
    %v4526 = vld [vmem:[%s5 + $0x18] sm:$0xf]
    %v4527 = vld [vmem:[%s5 + $0x1c] sm:$0xf]
    %v4528 = vld [vmem:[%s5 + $0x20] sm:$0xf]
    %v4529 = vld [vmem:[%s5 + $0x24] sm:$0xf]
    %v4530 = vld [vmem:[%s5 + $0x28] sm:$0xf]
    %v4531 = vld [vmem:[%s5 + $0x2c] sm:$0xf]
    %v4532 = vld [vmem:[%s5 + $0x30] sm:$0xf]
    %v4533 = vld [vmem:[%s5 + $0x34] sm:$0xf]
    %v4534 = vld [vmem:[%s5 + $0x38] sm:$0xf]
    %v4535 = vld [vmem:[%s5 + $0x3c] sm:$0xf]
    %v4536 = vld [vmem:[%s5 + $0x40] sm:$0xf]
    %v4537 = vld [vmem:[%s5 + $0x44] sm:$0xf]
    %v4538 = vld [vmem:[%s5 + $0x48] sm:$0xf]
    %v4539 = vld [vmem:[%s5 + $0x4c] sm:$0xf]
    %v4540 = vld [vmem:[%s5 + $0x50] sm:$0xf]
    %v4541 = vld [vmem:[%s5 + $0x54] sm:$0xf]
    %v4542 = vld [vmem:[%s5 + $0x58] sm:$0xf]
    %v4543 = vld [vmem:[%s5 + $0x5c] sm:$0xf]
    %v4544 = vld [vmem:[%s5 + $0x60] sm:$0xf]
    %v4545 = vld [vmem:[%s5 + $0x64] sm:$0xf]
    %v4546 = vld [vmem:[%s5 + $0x68] sm:$0xf]
    %v4547 = vld [vmem:[%s5 + $0x6c] sm:$0xf]
    %v4548 = vld [vmem:[%s5 + $0x70] sm:$0xf]
    %v4549 = vld [vmem:[%s5 + $0x74] sm:$0xf]
    %v4550 = vld [vmem:[%s5 + $0x78] sm:$0xf]
    %v4551 = vld [vmem:[%s5 + $0x7c] sm:$0xf]
    %v4552 = vld [vmem:[%s5 + $0x80] sm:$0xf]
    %v4553 = vld [vmem:[%s5 + $0x84] sm:$0xf]
    %v4554 = vld [vmem:[%s5 + $0x88] sm:$0xf]
    %v4555 = vld [vmem:[%s5 + $0x8c] sm:$0xf]
    %v4556 = vld [vmem:[%s5 + $0x90] sm:$0xf]
    %v4557 = vld [vmem:[%s5 + $0x94] sm:$0xf]
    %v4558 = vld [vmem:[%s5 + $0x98] sm:$0xf]
    %v4559 = vld [vmem:[%s5 + $0x9c] sm:$0xf]
    %v4560 = vld [vmem:[%s5 + $0xa0] sm:$0xf]
    %v4561 = vld [vmem:[%s5 + $0xa4] sm:$0xf]
    %v4562 = vld [vmem:[%s5 + $0xa8] sm:$0xf]
    %v4563 = vld [vmem:[%s5 + $0xac] sm:$0xf]
    %v4564 = vld [vmem:[%s5 + $0xb0] sm:$0xf]
    %v4565 = vld [vmem:[%s5 + $0xb4] sm:$0xf]
    %v4566 = vld [vmem:[%s5 + $0xb8] sm:$0xf]
    %v4567 = vld [vmem:[%s5 + $0xbc] sm:$0xf]
    %v4568 = vld [vmem:[%s5 + $0xc0] sm:$0xf]
    %v4569 = vld [vmem:[%s5 + $0xc4] sm:$0xf]
    %v4570 = vld [vmem:[%s5 + $0xc8] sm:$0xf]
    %v4571 = vld [vmem:[%s5 + $0xcc] sm:$0xf]
    %v4572 = vld [vmem:[%s5 + $0xd0] sm:$0xf]
    %v4573 = vld [vmem:[%s5 + $0xd4] sm:$0xf]
    %v4574 = vld [vmem:[%s5 + $0xd8] sm:$0xf]
    %v4575 = vld [vmem:[%s5 + $0xdc] sm:$0xf]
    %v4576 = vld [vmem:[%s5 + $0xe0] sm:$0xf]
    %v4577 = vld [vmem:[%s5 + $0xe4] sm:$0xf]
    %v4578 = vld [vmem:[%s5 + $0xe8] sm:$0xf]
    %v4579 = vld [vmem:[%s5 + $0xec] sm:$0xf]
    %v4580 = vld [vmem:[%s5 + $0xf0] sm:$0xf]
    %v4581 = vld [vmem:[%s5 + $0xf4] sm:$0xf]
    %v4582 = vld [vmem:[%s5 + $0xf8] sm:$0xf]
    %v4583 = vld [vmem:[%s5 + $0xfc] sm:$0xf]
    %v4584 = vld [vmem:[%s5 + $0x100] sm:$0xf]
    %v4585 = vld [vmem:[%s5 + $0x104] sm:$0xf]
    %v4586 = vld [vmem:[%s5 + $0x108] sm:$0xf]
    %v4587 = vld [vmem:[%s5 + $0x10c] sm:$0xf]
    %v4588 = vld [vmem:[%s5 + $0x110] sm:$0xf]
    %v4589 = vld [vmem:[%s5 + $0x114] sm:$0xf]
    %v4590 = vld [vmem:[%s5 + $0x118] sm:$0xf]
    %v4591 = vld [vmem:[%s5 + $0x11c] sm:$0xf]
    %v4592 = vld [vmem:[%s6] sm:$0x1]
    %v4594 = vlaneseq
    %v4595 = vshrl.u32 %v4594, 7
    %v4596 = vsub.s32 0, %v4595
    %v4597 = vrot.slane %v4592, %v4596
    %v4671 = vunpack.c.l.b16 %v4520
    %v4672 = vunpack.c.l.b16 %v4521
    %v4673 = vunpack.c.l.b16 %v4522
    %v4674 = vunpack.c.l.b16 %v4523
    %v4675 = vunpack.c.l.b16 %v4524
    %v4676 = vunpack.c.l.b16 %v4525
    %v4677 = vunpack.c.l.b16 %v4526
    %v4678 = vunpack.c.l.b16 %v4527
    %v4679 = vunpack.c.l.b16 %v4528
    %v4680 = vunpack.c.l.b16 %v4529
    %v4681 = vunpack.c.l.b16 %v4530
    %v4682 = vunpack.c.l.b16 %v4531
    %v4683 = vunpack.c.l.b16 %v4532
    %v4684 = vunpack.c.l.b16 %v4533
    %v4685 = vunpack.c.l.b16 %v4534
    %v4686 = vunpack.c.l.b16 %v4535
    %v4687 = vunpack.c.l.b16 %v4536
    %v4688 = vunpack.c.l.b16 %v4537
    %v4689 = vunpack.c.l.b16 %v4538
    %v4690 = vunpack.c.l.b16 %v4539
    %v4691 = vunpack.c.l.b16 %v4540
    %v4692 = vunpack.c.l.b16 %v4541
    %v4693 = vunpack.c.l.b16 %v4542
    %v4694 = vunpack.c.l.b16 %v4543
    %v4695 = vunpack.c.l.b16 %v4544
    %v4696 = vunpack.c.l.b16 %v4545
    %v4697 = vunpack.c.l.b16 %v4546
    %v4698 = vunpack.c.l.b16 %v4547
    %v4699 = vunpack.c.l.b16 %v4548
    %v4700 = vunpack.c.l.b16 %v4549
    %v4701 = vunpack.c.l.b16 %v4550
    %v4702 = vunpack.c.l.b16 %v4551
    %v4703 = vunpack.c.l.b16 %v4552
    %v4704 = vunpack.c.l.b16 %v4553
    %v4705 = vunpack.c.l.b16 %v4554
    %v4706 = vunpack.c.l.b16 %v4555
    %v4707 = vunpack.c.l.b16 %v4556
    %v4708 = vunpack.c.l.b16 %v4557
    %v4709 = vunpack.c.l.b16 %v4558
    %v4710 = vunpack.c.l.b16 %v4559
    %v4711 = vunpack.c.l.b16 %v4560
    %v4712 = vunpack.c.l.b16 %v4561
    %v4713 = vunpack.c.l.b16 %v4562
    %v4714 = vunpack.c.l.b16 %v4563
    %v4715 = vunpack.c.l.b16 %v4564
    %v4716 = vunpack.c.l.b16 %v4565
    %v4717 = vunpack.c.l.b16 %v4566
    %v4718 = vunpack.c.l.b16 %v4567
    %v4719 = vunpack.c.l.b16 %v4568
    %v4720 = vunpack.c.l.b16 %v4569
    %v4721 = vunpack.c.l.b16 %v4570
    %v4722 = vunpack.c.l.b16 %v4571
    %v4723 = vunpack.c.l.b16 %v4572
    %v4724 = vunpack.c.l.b16 %v4573
    %v4725 = vunpack.c.l.b16 %v4574
    %v4726 = vunpack.c.l.b16 %v4575
    %v4727 = vunpack.c.l.b16 %v4576
    %v4728 = vunpack.c.l.b16 %v4577
    %v4729 = vunpack.c.l.b16 %v4578
    %v4730 = vunpack.c.l.b16 %v4579
    %v4731 = vunpack.c.l.b16 %v4580
    %v4732 = vunpack.c.l.b16 %v4581
    %v4733 = vunpack.c.l.b16 %v4582
    %v4734 = vunpack.c.l.b16 %v4583
    %v4735 = vunpack.c.l.b16 %v4584
    %v4736 = vunpack.c.l.b16 %v4585
    %v4737 = vunpack.c.l.b16 %v4586
    %v4738 = vunpack.c.l.b16 %v4587
    %v4739 = vunpack.c.l.b16 %v4588
    %v4740 = vunpack.c.l.b16 %v4589
    %v4741 = vunpack.c.l.b16 %v4590
    %v4742 = vunpack.c.l.b16 %v4591
    %v4743 = vpack.c.b16 %v4672, %v4671
    %v4744 = vpack.c.b16 %v4674, %v4673
    %v4745 = vpack.c.b16 %v4676, %v4675
    %v4746 = vpack.c.b16 %v4678, %v4677
    %v4747 = vpack.c.b16 %v4680, %v4679
    %v4748 = vpack.c.b16 %v4682, %v4681
    %v4749 = vpack.c.b16 %v4684, %v4683
    %v4750 = vpack.c.b16 %v4686, %v4685
    %v4751 = vpack.c.b16 %v4688, %v4687
    %v4752 = vpack.c.b16 %v4690, %v4689
    %v4753 = vpack.c.b16 %v4692, %v4691
    %v4754 = vpack.c.b16 %v4694, %v4693
    %v4755 = vpack.c.b16 %v4696, %v4695
    %v4756 = vpack.c.b16 %v4698, %v4697
    %v4757 = vpack.c.b16 %v4700, %v4699
    %v4758 = vpack.c.b16 %v4702, %v4701
    %v4759 = vpack.c.b16 %v4704, %v4703
    %v4760 = vpack.c.b16 %v4706, %v4705
    %v4761 = vpack.c.b16 %v4708, %v4707
    %v4762 = vpack.c.b16 %v4710, %v4709
    %v4763 = vpack.c.b16 %v4712, %v4711
    %v4764 = vpack.c.b16 %v4714, %v4713
    %v4765 = vpack.c.b16 %v4716, %v4715
    %v4766 = vpack.c.b16 %v4718, %v4717
    %v4767 = vpack.c.b16 %v4720, %v4719
    %v4768 = vpack.c.b16 %v4722, %v4721
    %v4769 = vpack.c.b16 %v4724, %v4723
    %v4770 = vpack.c.b16 %v4726, %v4725
    %v4771 = vpack.c.b16 %v4728, %v4727
    %v4772 = vpack.c.b16 %v4730, %v4729
    %v4773 = vpack.c.b16 %v4732, %v4731
    %v4774 = vpack.c.b16 %v4734, %v4733
    %v4775 = vpack.c.b16 %v4736, %v4735
    %v4776 = vpack.c.b16 %v4738, %v4737
    %v4777 = vpack.c.b16 %v4740, %v4739
    %v4778 = vpack.c.b16 %v4742, %v4741
    %v4816 = vsel %vm3240, %v4514, 0
    %v4819 = vsel %vm3240, %v4519, 0
    %4821 = vmatprep.subr.bf16.mxu0 0
    %4822 = vmatpush1.bf16.msra.mxu0 %v4743
    %4823 = vmatprep.subr.bf16.mxu0 0
    %4824 = vmatpush1.bf16.msra.mxu0 %v4744
    %4825 = vmatprep.subr.bf16.mxu0 0
    %4826 = vmatpush1.bf16.msra.mxu0 %v4745
    %4827 = vmatprep.subr.bf16.mxu0 0
    %4828 = vmatpush1.bf16.msra.mxu0 %v4746
    %4829 = vmatprep.subr.bf16.mxu0 0
    %4830 = vmatpush1.bf16.msra.mxu0 %v4747
    %4831 = vmatprep.subr.bf16.mxu0 0
    %4832 = vmatpush1.bf16.msra.mxu0 %v4748
    %4833 = vmatprep.subr.bf16.mxu0 0
    %4834 = vmatpush1.bf16.msra.mxu0 %v4749
    %4835 = vmatprep.subr.bf16.mxu0 0
    %4836 = vmatpush1.bf16.msra.mxu0 %v4750
    %4837 = vmatprep.subr.bf16.mxu0 0
    %4838 = vmatpush1.bf16.msra.mxu0 %v4751
    %4839 = vmatprep.subr.bf16.mxu0 0
    %4840 = vmatpush1.bf16.msra.mxu0 %v4752
    %4841 = vmatprep.subr.bf16.mxu0 0
    %4842 = vmatpush1.bf16.msra.mxu0 %v4753
    %4843 = vmatprep.subr.bf16.mxu0 0
    %4844 = vmatpush1.bf16.msra.mxu0 %v4754
    %4845 = vmatprep.subr.bf16.mxu0 0
    %4846 = vmatpush1.bf16.msra.mxu0 %v4755
    %4847 = vmatprep.subr.bf16.mxu0 0
    %4848 = vmatpush1.bf16.msra.mxu0 %v4756
    %4849 = vmatprep.subr.bf16.mxu0 0
    %4850 = vmatpush1.bf16.msra.mxu0 %v4757
    %4851 = vmatprep.subr.bf16.mxu0 0
    %4852 = vmatpush1.bf16.msra.mxu0 %v4758
    %4853 = vmatprep.mubr.bf16.mxu0 %v4511
    %4854 = vmatmul.mubr.bf16.gmra.mrb[0].mxu0 %v4510
    %v4855 = vpop.f32.mrb[0].mxu0
    %v4856 = vadd.f32 %v4597, %v4855
    %v4857 = vpop.f32.mrb[0].mxu0
    %v4858 = vpop.f32.mrb[0].mxu0
    %v4859 = vadd.f32 %v4597, %v4858
    %v4860 = vpop.f32.mrb[0].mxu0
    %4861 = vmatprep.mubr.bf16.mxu0 %v4516
    %4862 = vmatmul.mubr.bf16.gmra.mrb[0].mxu0 %v4515
    %v4863 = vpop.f32.mrb[0].mxu0
    %v4864 = vadd.f32 %v4597, %v4863
    %v4865 = vpop.f32.mrb[0].mxu0
    %v4866 = vpop.f32.mrb[0].mxu0
    %v4867 = vadd.f32 %v4597, %v4866
    %v4868 = vpop.f32.mrb[0].mxu0
    %4869 = vdwg.mxu0
    %4870 = vmatprep.subr.bf16.mxu0 0
    %4871 = vmatpush1.bf16.msra.mxu0 %v4759
    %4872 = vmatprep.subr.bf16.mxu0 0
    %4873 = vmatpush1.bf16.msra.mxu0 %v4760
    %4874 = vmatprep.subr.bf16.mxu0 0
    %4875 = vmatpush1.bf16.msra.mxu0 %v4761
    %4876 = vmatprep.subr.bf16.mxu0 0
    %4877 = vmatpush1.bf16.msra.mxu0 %v4762
    %4878 = vmatprep.subr.bf16.mxu0 0
    %4879 = vmatpush1.bf16.msra.mxu0 %v4763
    %4880 = vmatprep.subr.bf16.mxu0 0
    %4881 = vmatpush1.bf16.msra.mxu0 %v4764
    %4882 = vmatprep.subr.bf16.mxu0 0
    %4883 = vmatpush1.bf16.msra.mxu0 %v4765
    %4884 = vmatprep.subr.bf16.mxu0 0
    %4885 = vmatpush1.bf16.msra.mxu0 %v4766
    %4886 = vmatprep.subr.bf16.mxu0 0
    %4887 = vmatpush1.bf16.msra.mxu0 %v4767
    %4888 = vmatprep.subr.bf16.mxu0 0
    %4889 = vmatpush1.bf16.msra.mxu0 %v4768
    %4890 = vmatprep.subr.bf16.mxu0 0
    %4891 = vmatpush1.bf16.msra.mxu0 %v4769
    %4892 = vmatprep.subr.bf16.mxu0 0
    %4893 = vmatpush1.bf16.msra.mxu0 %v4770
    %4894 = vmatprep.subr.bf16.mxu0 0
    %4895 = vmatpush1.bf16.msra.mxu0 %v4771
    %4896 = vmatprep.subr.bf16.mxu0 0
    %4897 = vmatpush1.bf16.msra.mxu0 %v4772
    %4898 = vmatprep.subr.bf16.mxu0 0
    %4899 = vmatpush1.bf16.msra.mxu0 %v4773
    %4900 = vmatprep.subr.bf16.mxu0 0
    %4901 = vmatpush1.bf16.msra.mxu0 %v4774
    %4902 = vmatprep.mubr.bf16.mxu0 %v4513
    %4903 = vmatmul.mubr.bf16.gmra.mrb[0].mxu0 %v4512
    %v4904 = vpop.f32.mrb[0].mxu0
    %v4905 = vadd.f32 %v4856, %v4904
    %v4906 = vpop.f32.mrb[0].mxu0
    %v4907 = vpop.f32.mrb[0].mxu0
    %v4908 = vadd.f32 %v4859, %v4907
    %v4909 = vpop.f32.mrb[0].mxu0
    %4910 = vmatprep.mubr.bf16.mxu0 %v4518
    %4911 = vmatmul.mubr.bf16.gmra.mrb[0].mxu0 %v4517
    %v4912 = vpop.f32.mrb[0].mxu0
    %v4913 = vadd.f32 %v4864, %v4912
    %v4914 = vpop.f32.mrb[0].mxu0
    %v4915 = vpop.f32.mrb[0].mxu0
    %v4916 = vadd.f32 %v4867, %v4915
    %v4917 = vpop.f32.mrb[0].mxu0
    %4918 = vdwg.mxu0
    %4919 = vmatprep.subr.bf16.mxu0 0
    %4920 = vmatpush1.bf16.msra.mxu0 %v4775
    %4921 = vmatprep.subr.bf16.mxu0 0
    %4922 = vmatpush1.bf16.msra.mxu0 %v4776
    %4923 = vmatprep.subr.bf16.mxu0 0
    %4924 = vmatpush1.bf16.msra.mxu0 %v4777
    %4925 = vmatprep.subr.bf16.mxu0 0
    %4926 = vmatpush1.bf16.msra.mxu0 %v4778
    %4927 = vmatprep.subr.bf16.mxu0 0
    %4928 = vmatpush1.bf16.msra.mxu0 0
    %4929 = vmatprep.subr.bf16.mxu0 0
    %4930 = vmatpush1.bf16.msra.mxu0 0
    %4931 = vmatprep.subr.bf16.mxu0 0
    %4932 = vmatpush1.bf16.msra.mxu0 0
    %4933 = vmatprep.subr.bf16.mxu0 0
    %4934 = vmatpush1.bf16.msra.mxu0 0
    %4935 = vmatprep.subr.bf16.mxu0 0
    %4936 = vmatpush1.bf16.msra.mxu0 0
    %4937 = vmatprep.subr.bf16.mxu0 0
    %4938 = vmatpush1.bf16.msra.mxu0 0
    %4939 = vmatprep.subr.bf16.mxu0 0
    %4940 = vmatpush1.bf16.msra.mxu0 0
    %4941 = vmatprep.subr.bf16.mxu0 0
    %4942 = vmatpush1.bf16.msra.mxu0 0
    %4943 = vmatprep.subr.bf16.mxu0 0
    %4944 = vmatpush1.bf16.msra.mxu0 0
    %4945 = vmatprep.subr.bf16.mxu0 0
    %4946 = vmatpush1.bf16.msra.mxu0 0
    %4947 = vmatprep.subr.bf16.mxu0 0
    %4948 = vmatpush1.bf16.msra.mxu0 0
    %4949 = vmatprep.subr.bf16.mxu0 0
    %4950 = vmatpush1.bf16.msra.mxu0 0
    %4951 = vmatprep.mubr.bf16.mxu0 0
    %4952 = vmatmul.mubr.bf16.gmra.mrb[0].mxu0 %v4816
    %v4953 = vpop.f32.mrb[0].mxu0
    %v4954 = vadd.f32 %v4905, %v4953
    %v4955 = vpop.f32.mrb[0].mxu0
    %v4956 = vpop.f32.mrb[0].mxu0
    %v4957 = vadd.f32 %v4908, %v4956
    %v4958 = vpop.f32.mrb[0].mxu0
    %4959 = vmatprep.mubr.bf16.mxu0 0
    %4960 = vmatmul.mubr.bf16.gmra.mrb[0].mxu0 %v4819
    %v4961 = vpop.f32.mrb[0].mxu0
    %v4962 = vadd.f32 %v4913, %v4961
    %v4963 = vpop.f32.mrb[0].mxu0
    %v4964 = vpop.f32.mrb[0].mxu0
    %v4965 = vadd.f32 %v4916, %v4964
    %v4966 = vpop.f32.mrb[0].mxu0
    %4967 = vdwg.mxu0
    %v4968 = vmax.f32 %v4954, 0.0
    %v4969 = vmax.f32 %v4957, 0.0
    %v4970 = vmax.f32 %v4962, 0.0
    %v4971 = vmax.f32 %v4965, 0.0
    %v4976 = vcombine.high %v4968, %v4968
    %v4977 = vcombine.high %v4969, %v4969
    %v4978 = vcombine.high %v4970, %v4970
    %v4979 = vcombine.high %v4971, %v4971
    %v4984 = vmax.f32 %v4968, %v4976
    %v4985 = vmax.f32 %v4969, %v4977
    %v4986 = vmax.f32 %v4970, %v4978
    %v4987 = vmax.f32 %v4971, %v4979
    %v4993 = vunpack.c.l.s4 1983009808
    %v4994 = vunpack.c.0.s8 %v4993
    %v4995 = vlaneseq
    %v4996 = vshrl.u32 %v4995, 7
    %v4997 = vsub.s32 %v4994, %v4996
    %v4998 = vrot.slane %v4984, %v4997
    %v4999 = vcombine.high %v4998, %v4998
    %v5001 = vunpack.c.l.s4 1983009808
    %v5002 = vunpack.c.0.s8 %v5001
    %v5003 = vlaneseq
    %v5004 = vshrl.u32 %v5003, 7
    %v5005 = vsub.s32 %v5002, %v5004
    %v5006 = vrot.slane %v4985, %v5005
    %v5007 = vcombine.high %v5006, %v5006
    %v5009 = vunpack.c.l.s4 1983009808
    %v5010 = vunpack.c.0.s8 %v5009
    %v5011 = vlaneseq
    %v5012 = vshrl.u32 %v5011, 7
    %v5013 = vsub.s32 %v5010, %v5012
    %v5014 = vrot.slane %v4986, %v5013
    %v5015 = vcombine.high %v5014, %v5014
    %v5017 = vunpack.c.l.s4 1983009808
    %v5018 = vunpack.c.0.s8 %v5017
    %v5019 = vlaneseq
    %v5020 = vshrl.u32 %v5019, 7
    %v5021 = vsub.s32 %v5018, %v5020
    %v5022 = vrot.slane %v4987, %v5021
    %v5023 = vcombine.high %v5022, %v5022
    %vm5032 = vcmask 1041408
    %v5033 = vsel %vm5032, %v4998, -inf
    %v5034 = vrot.slane %v5033, 4
    %v5035 = vmax.f32 %v5033, %v5034
    %v5036 = vrot.slane %v5035, 2
    %v5037 = vmax.f32 %v5035, %v5036
    %v5038 = vrot.slane %v5037, 1
    %v5039 = vmax.f32 %v5037, %v5038
    %v5040 = vsel %vm5032, %v4999, -inf
    %v5041 = vrot.slane %v5040, 4
    %v5042 = vmax.f32 %v5040, %v5041
    %v5043 = vrot.slane %v5042, 2
    %v5044 = vmax.f32 %v5042, %v5043
    %v5045 = vrot.slane %v5044, 1
    %v5046 = vmax.f32 %v5044, %v5045
    %v5047 = vsel %vm5032, %v5006, -inf
    %v5048 = vrot.slane %v5047, 4
    %v5049 = vmax.f32 %v5047, %v5048
    %v5050 = vrot.slane %v5049, 2
    %v5051 = vmax.f32 %v5049, %v5050
    %v5052 = vrot.slane %v5051, 1
    %v5053 = vmax.f32 %v5051, %v5052
    %v5054 = vsel %vm5032, %v5007, -inf
    %v5055 = vrot.slane %v5054, 4
    %v5056 = vmax.f32 %v5054, %v5055
    %v5057 = vrot.slane %v5056, 2
    %v5058 = vmax.f32 %v5056, %v5057
    %v5059 = vrot.slane %v5058, 1
    %v5060 = vmax.f32 %v5058, %v5059
    %v5061 = vsel %vm5032, %v5014, -inf
    %v5062 = vrot.slane %v5061, 4
    %v5063 = vmax.f32 %v5061, %v5062
    %v5064 = vrot.slane %v5063, 2
    %v5065 = vmax.f32 %v5063, %v5064
    %v5066 = vrot.slane %v5065, 1
    %v5067 = vmax.f32 %v5065, %v5066
    %v5068 = vsel %vm5032, %v5015, -inf
    %v5069 = vrot.slane %v5068, 4
    %v5070 = vmax.f32 %v5068, %v5069
    %v5071 = vrot.slane %v5070, 2
    %v5072 = vmax.f32 %v5070, %v5071
    %v5073 = vrot.slane %v5072, 1
    %v5074 = vmax.f32 %v5072, %v5073
    %v5075 = vsel %vm5032, %v5022, -inf
    %v5076 = vrot.slane %v5075, 4
    %v5077 = vmax.f32 %v5075, %v5076
    %v5078 = vrot.slane %v5077, 2
    %v5079 = vmax.f32 %v5077, %v5078
    %v5080 = vrot.slane %v5079, 1
    %v5081 = vmax.f32 %v5079, %v5080
    %v5082 = vsel %vm5032, %v5023, -inf
    %v5083 = vrot.slane %v5082, 4
    %v5084 = vmax.f32 %v5082, %v5083
    %v5085 = vrot.slane %v5084, 2
    %v5086 = vmax.f32 %v5084, %v5085
    %v5087 = vrot.slane %v5086, 1
    %v5088 = vmax.f32 %v5086, %v5087
    %v5097 = vsel %vm2543, %v5046, %v5039
    %v5098 = vsel %vm2543, %v5060, %v5053
    %v5099 = vsel %vm2543, %v5074, %v5067
    %v5100 = vsel %vm2543, %v5088, %v5081
    %5105 = vst [vmem:[#allocation4] sm:$0x3] %v5097
    %5106 = vst [vmem:[#allocation4 + $0x2] sm:$0x3] %v5098
    %5107 = vst [vmem:[#allocation4 + $0x4] sm:$0x3] %v5099
    %5108 = vst [vmem:[#allocation4 + $0x6] sm:$0x3] %v5100
    // Predicated region
    $region30: #{convolution1_forward.1} parent=1 // pred_check
      _
    $region31: #{convolution1_forward.1} parent=1 // pred_check_branch
      %5110 = sbr.rel (0) target = $region33
    $region32: #{convolution1_forward.1} parent=1 // pred_region
      %s5112 = ssub.s32 128, 128
      %5113 = vsyncadd [#allocation5], %s5112
      %s5114 = sshll.u32 [#allocation4], 4
      %s5115 = int_to_ptr.vmem [resolvable:$true] %s5114
      %5120 = dma.vmem_to_hbm [thread:$0]  %s5115, 128, %s7, [#allocation5], 32, 32, 2
    $region33: #{convolution1_forward.1} parent=1 // pred_fallthru
      _
    // Predicated region
    $region34: #{convolution1_forward.1} parent=1 // pred_check
      _
    $region35: #{convolution1_forward.1} parent=1 // pred_check_branch
      %5122 = sbr.rel (0) target = $region37
    $region36: #{convolution1_forward.1} parent=1 // pred_region
      %5123 = dma.done [#allocation5], 128
    $region37: #{convolution1_forward.1} parent=1 // pred_fallthru
      _
    %5124 = vsyncpa [#allocation5], 1

</llo_original>
